<compile_context>
chip_gen: v7x
topology: tpu7x:2x2x1
jax: 0.10.0
libtpu: 0.0.40
codegen_flags: <defaults>
</compile_context>

<pallas_src>
import math

import jax
import jax.numpy as jnp
from jax.experimental import pallas as pl
from jax.experimental.pallas import tpu as pltpu

LAYER_NORM_EPS = 1e-5


def ffn_kernel(x_ref, res_ref, w1_ref, b1_ref, w2_ref, b2_ref, scale_ref,
               o_ref, acc_ref):
    # x_ref:    [tm, H]   bf16 token block
    # res_ref:  [tm, O]   residual (input_tensor) block
    # w1_ref:   [H, tI]   bf16 dense1 weight slab, b1_ref: [1, tI] f32
    # w2_ref:   [tI, O]   bf16 dense2 weight slab, b2_ref: [1, O]  f32
    # scale_ref:[1, O]    f32 RMSNorm scale
    # o_ref:    [tm, O]
    # acc_ref:  [tm, O]   f32 dense2 partial-sum accumulator (VMEM scratch)
    k = pl.program_id(1)

    @pl.when(k == 0)
    def _():
        acc_ref[...] = jnp.zeros_like(acc_ref)

    # dense1 slab: bf16 x bf16 on the MXU, f32 accumulate
    h = jnp.dot(x_ref[...], w1_ref[...], preferred_element_type=jnp.float32)
    h = h + b1_ref[...].astype(jnp.float32)

    # exact (erf-based) GELU in f32, matching torch.nn.GELU() default
    h = 0.5 * h * (1.0 + jax.lax.erf(h * (1.0 / math.sqrt(2.0))))

    # dense2 partial sum for this I-slab
    acc_ref[...] += jnp.dot(h.astype(w2_ref.dtype), w2_ref[...],
                            preferred_element_type=jnp.float32)

    @pl.when(k == pl.num_programs(1) - 1)
    def _():
        # dropout: eval mode -> identity
        y = acc_ref[...] + b2_ref[...].astype(jnp.float32)
        y = y + res_ref[...].astype(jnp.float32)
        # RMSNorm over last dim
        ms = jnp.mean(y * y, axis=-1, keepdims=True)
        y = y * jax.lax.rsqrt(ms + LAYER_NORM_EPS)
        y = scale_ref[...].astype(jnp.float32) * y
        o_ref[...] = y.astype(o_ref.dtype)


def _vmem_footprint(tm, ti, H, O, csize, res_itemsize, out_itemsize):
    """Estimated per-step VMEM bytes (double-buffered streamed blocks +
    resident scratch + compiler intermediates)."""
    streamed = 2 * (tm * H * csize          # x tile
                    + tm * O * res_itemsize  # residual tile
                    + H * ti * csize         # w1 slab
                    + ti * 4                 # b1 slab
                    + ti * O * csize         # w2 slab
                    + 2 * O * 4              # b2 + scale
                    + tm * O * out_itemsize)  # out tile
    resident = tm * O * 4                    # acc scratch
    temps = tm * ti * (4 + csize)            # GELU / cast intermediates
    return streamed + resident + temps


def _pick_inner_tile(I, H, O, tm, csize, res_itemsize, out_itemsize,
                     budget=48 << 20):
    """Largest I-tile (== I, or a multiple of 128 dividing I) whose VMEM
    footprint fits the budget.  ti == I means weights are fetched once total."""
    if _vmem_footprint(tm, I, H, O, csize, res_itemsize, out_itemsize) <= budget:
        return I
    cands = [c for c in range(I - I % 128, 0, -128) if I % c == 0]
    for c in cands:
        if _vmem_footprint(tm, c, H, O, csize, res_itemsize, out_itemsize) <= budget:
            return c
    return cands[-1] if cands else I


def ffn_forward(hidden_states, input_tensor, params, *, tm=256, ti=None,
                compute_dtype=jnp.bfloat16):
    """hidden_states: [B, S, H], input_tensor: [B, S, O] -> [B, S, O]."""
    B, S, H = hidden_states.shape
    O = input_tensor.shape[-1]
    I = params["w1"].shape[1]

    assert tm % 16 == 0, "tm must be a multiple of 16 for bf16 token blocks"

    out_dtype = input_tensor.dtype
    csize = jnp.dtype(compute_dtype).itemsize
    res_itemsize = jnp.dtype(input_tensor.dtype).itemsize
    out_itemsize = jnp.dtype(out_dtype).itemsize

    if ti is None:
        ti = _pick_inner_tile(I, H, O, tm, csize, res_itemsize, out_itemsize)
    assert I % ti == 0, "intermediate tile must divide intermediate_size"

    N = B * S
    grid_m = pl.cdiv(N, tm)
    grid_k = I // ti
    Np = grid_m * tm

    x2d = hidden_states.reshape(N, H).astype(compute_dtype)
    r2d = input_tensor.reshape(N, O)
    if Np != N:
        pad = Np - N
        x2d = jnp.pad(x2d, ((0, pad), (0, 0)))
        r2d = jnp.pad(r2d, ((0, pad), (0, 0)))

    w1 = params["w1"].astype(compute_dtype)          # [H, I]
    w2 = params["w2"].astype(compute_dtype)          # [I, O]
    b1 = params["b1"].reshape(1, I).astype(jnp.float32)
    b2 = params["b2"].reshape(1, O).astype(jnp.float32)
    scale = params["scale"].reshape(1, O).astype(jnp.float32)

    cost = pl.CostEstimate(
        flops=2 * Np * (H * I + I * O),
        transcendentals=Np * I,
        bytes_accessed=(Np * H * csize + Np * O * res_itemsize
                        + (H * I + I * O) * csize * (1 if grid_k == 1 else grid_m)
                        + Np * O * out_itemsize),
    )

    vmem_limit = _vmem_footprint(tm, ti, H, O, csize, res_itemsize, out_itemsize)
    vmem_limit = max(32 << 20, min(int(1.25 * vmem_limit), 64 << 20))

    out = pl.pallas_call(
        ffn_kernel,
        out_shape=jax.ShapeDtypeStruct((Np, O), out_dtype),
        grid_spec=pltpu.PrefetchScalarGridSpec(
            num_scalar_prefetch=0,
            grid=(grid_m, grid_k),
            in_specs=[
                pl.BlockSpec((tm, H), lambda i, k: (i, 0)),   # x
                pl.BlockSpec((tm, O), lambda i, k: (i, 0)),   # residual
                pl.BlockSpec((H, ti), lambda i, k: (0, k)),   # w1 slab
                pl.BlockSpec((1, ti), lambda i, k: (0, k)),   # b1 slab
                pl.BlockSpec((ti, O), lambda i, k: (k, 0)),   # w2 slab
                pl.BlockSpec((1, O), lambda i, k: (0, 0)),    # b2
                pl.BlockSpec((1, O), lambda i, k: (0, 0)),    # rmsnorm scale
            ],
            out_specs=pl.BlockSpec((tm, O), lambda i, k: (i, 0)),
            scratch_shapes=[pltpu.VMEM((tm, O), jnp.float32)],
        ),
        compiler_params=pltpu.CompilerParams(
            dimension_semantics=("parallel", "arbitrary"),
            vmem_limit_bytes=vmem_limit,
        ),
        cost_estimate=cost,
    )(x2d, r2d, w1, b1, w2, b2, scale)

    return out[:N].reshape(B, S, O)


def init_params(key, hidden_size, intermediate_size, output_hidden_size):
    k1, k2, k3, k4 = jax.random.split(key, 4)
    # deterministic synthetic init (Linear-like scale); weights stored [in, out]
    w1 = jax.random.normal(k1, (hidden_size, intermediate_size), jnp.float32)
    w1 = w1 / math.sqrt(hidden_size)
    b1 = jax.random.normal(k2, (intermediate_size,), jnp.float32) * 0.02
    w2 = jax.random.normal(k3, (intermediate_size, output_hidden_size), jnp.float32)
    w2 = w2 / math.sqrt(intermediate_size)
    b2 = jax.random.normal(k4, (output_hidden_size,), jnp.float32) * 0.02
    scale = jnp.ones((output_hidden_size,), jnp.float32)  # RMSNorm scale init
    return {"w1": w1, "b1": b1, "w2": w2, "b2": b2, "scale": scale}


def ffn_reference(hidden_states, input_tensor, params,
                  compute_dtype=jnp.bfloat16):
    """Pure-JAX reference of the PyTorch FFN forward (eval mode), with the same
    bf16-weights / f32-accumulate numerics as the kernel."""
    x = hidden_states.astype(compute_dtype)
    w1 = params["w1"].astype(compute_dtype)
    w2 = params["w2"].astype(compute_dtype)
    h = jnp.dot(x, w1, preferred_element_type=jnp.float32)
    h = h + params["b1"].astype(jnp.float32)
    h = 0.5 * h * (1.0 + jax.lax.erf(h / math.sqrt(2.0)))
    y = jnp.dot(h.astype(compute_dtype), w2, preferred_element_type=jnp.float32)
    y = y + params["b2"].astype(jnp.float32)
    y = y + input_tensor.astype(jnp.float32)
    ms = jnp.mean(y * y, axis=-1, keepdims=True)
    y = y * jax.lax.rsqrt(ms + LAYER_NORM_EPS)
    y = params["scale"].astype(jnp.float32) * y
    return y.astype(input_tensor.dtype)


if __name__ == "__main__":
    # lane-dense feature dims (multiples of 128); token count NOT a multiple of
    # the tile to exercise the padding path.
    B, S, H, I, O = 2, 200, 256, 512, 256

    key = jax.random.PRNGKey(0)
    kx, kr, kp = jax.random.split(key, 3)
    hidden_states = jax.random.normal(kx, (B, S, H), jnp.float32)
    input_tensor = jax.random.normal(kr, (B, S, O), jnp.float32)
    params = init_params(kp, H, I, O)

    ref = ffn_reference(hidden_states, input_tensor, params)

    # 1) auto inner tile (weights fully resident, grid_k == 1)
    out_auto = jax.block_until_ready(
        ffn_forward(hidden_states, input_tensor, params, tm=256))
    # 2) forced reduction tiling (exercises the accumulator / pl.when path)
    out_tiled = jax.block_until_ready(
        ffn_forward(hidden_states, input_tensor, params, tm=256, ti=256))

    for out in (out_auto, out_tiled):
        assert out.shape == (B, S, O)
        max_err = float(jnp.max(jnp.abs(out - ref)))
        assert jnp.allclose(out, ref, atol=2e-2, rtol=2e-2), (
            f"mismatch vs reference, max abs err = {max_err}")

    print("KERNEL_OK")
</pallas_src>

<mosaic_0001>
module attributes {stable_mosaic.version = 11 : i64} {
  func.func @ffn_kernel(%arg0: i32, %arg1: i32, %arg2: memref<256x256xbf16, #tpu.memory_space<vmem>>, %arg3: memref<256x256xf32, #tpu.memory_space<vmem>>, %arg4: memref<256x512xbf16, #tpu.memory_space<vmem>>, %arg5: memref<1x512xf32, #tpu.memory_space<vmem>>, %arg6: memref<512x256xbf16, #tpu.memory_space<vmem>>, %arg7: memref<1x256xf32, #tpu.memory_space<vmem>>, %arg8: memref<1x256xf32, #tpu.memory_space<vmem>>, %arg9: memref<256x256xf32, #tpu.memory_space<vmem>>, %arg10: memref<256x256xf32, #tpu.memory_space<vmem>>) attributes {dimension_semantics = [#tpu.dimension_semantics<parallel>, #tpu.dimension_semantics<arbitrary>], iteration_bounds = array<i64: 2, 1>, scalar_prefetch = 0 : i64, scratch_operands = 1 : i64, tpu.core_type = #tpu.core_type<tc>, window_params = [{transform_indices = @transform_0, window_bounds = array<i64: 256, 256>}, {transform_indices = @transform_1, window_bounds = array<i64: 256, 256>}, {transform_indices = @transform_2, window_bounds = array<i64: 256, 512>}, {transform_indices = @transform_3, window_bounds = array<i64: 1, 512>}, {transform_indices = @transform_4, window_bounds = array<i64: 512, 256>}, {pipeline_mode = #tpu.pipeline_mode<synchronous>, transform_indices = @transform_5, window_bounds = array<i64: 1, 256>}, {pipeline_mode = #tpu.pipeline_mode<synchronous>, transform_indices = @transform_6, window_bounds = array<i64: 1, 256>}, {transform_indices = @transform_7, window_bounds = array<i64: 256, 256>}]} {
    %c0_i32 = arith.constant 0 : i32
    %0 = arith.cmpi eq, %arg1, %c0_i32 : i32
    %1 = arith.extui %0 : i1 to i32
    %c0_i32_0 = arith.constant 0 : i32
    %2 = arith.cmpi ne, %1, %c0_i32_0 : i32
    scf.if %2 {
      %cst_18 = arith.constant 0.000000e+00 : f32
      %26 = vector.broadcast %cst_18 : f32 to vector<256x256xf32>
      %c0_19 = arith.constant 0 : index
      %c0_20 = arith.constant 0 : index
      %27 = vector.load %arg10[%c0_19, %c0_20] : memref<256x256xf32, #tpu.memory_space<vmem>>, vector<256x256xf32>
      tpu.vector_store %arg10[%c0_19, %c0_20], %26 {strides = array<i32>} : memref<256x256xf32, #tpu.memory_space<vmem>>, vector<256x256xf32>,
    } else {
    }
    %c0 = arith.constant 0 : index
    %c0_1 = arith.constant 0 : index
    %3 = vector.load %arg2[%c0, %c0_1] : memref<256x256xbf16, #tpu.memory_space<vmem>>, vector<256x256xbf16>
    %c0_2 = arith.constant 0 : index
    %c0_3 = arith.constant 0 : index
    %4 = vector.load %arg4[%c0_2, %c0_3] : memref<256x512xbf16, #tpu.memory_space<vmem>>, vector<256x512xbf16>
    %cst = arith.constant dense<0.000000e+00> : vector<256x512xf32>
    %5 = tpu.matmul %3, %4, %cst {dimension_numbers = #tpu.dot_dimension_numbers<[1], [0], [0], [1], [0, 0, 1, 1], [], []>} : vector<256x256xbf16>, vector<256x512xbf16>, vector<256x512xf32> -> vector<256x512xf32>
    %c0_4 = arith.constant 0 : index
    %c0_5 = arith.constant 0 : index
    %6 = vector.load %arg5[%c0_4, %c0_5] : memref<1x512xf32, #tpu.memory_space<vmem>>, vector<1x512xf32>
    %7 = vector.broadcast %6 : vector<1x512xf32> to vector<256x512xf32>
    %8 = arith.addf %5, %7 : vector<256x512xf32>
    %cst_6 = arith.constant 5.000000e-01 : f32
    %9 = vector.broadcast %cst_6 : f32 to vector<256x512xf32>
    %10 = arith.mulf %9, %8 : vector<256x512xf32>
    %cst_7 = arith.constant 0.707106769 : f32
    %11 = vector.broadcast %cst_7 : f32 to vector<256x512xf32>
    %12 = arith.mulf %8, %11 : vector<256x512xf32>
    %13 = math.erf %12 : vector<256x512xf32>
    %cst_8 = arith.constant 1.000000e+00 : f32
    %14 = vector.broadcast %cst_8 : f32 to vector<256x512xf32>
    %15 = arith.addf %14, %13 : vector<256x512xf32>
    %16 = arith.mulf %10, %15 : vector<256x512xf32>
    %c0_9 = arith.constant 0 : index
    %c0_10 = arith.constant 0 : index
    %17 = vector.load %arg10[%c0_9, %c0_10] : memref<256x256xf32, #tpu.memory_space<vmem>>, vector<256x256xf32>
    %18 = arith.truncf %16 : vector<256x512xf32> to vector<256x512xbf16>
    %c0_11 = arith.constant 0 : index
    %c0_12 = arith.constant 0 : index
    %19 = vector.load %arg6[%c0_11, %c0_12] : memref<512x256xbf16, #tpu.memory_space<vmem>>, vector<512x256xbf16>
    %cst_13 = arith.constant dense<0.000000e+00> : vector<256x256xf32>
    %20 = tpu.matmul %18, %19, %cst_13 {dimension_numbers = #tpu.dot_dimension_numbers<[1], [0], [0], [1], [0, 0, 1, 1], [], []>} : vector<256x512xbf16>, vector<512x256xbf16>, vector<256x256xf32> -> vector<256x256xf32>
    %21 = arith.addf %17, %20 : vector<256x256xf32>
    %c0_14 = arith.constant 0 : index
    %c0_15 = arith.constant 0 : index
    %22 = vector.load %arg10[%c0_14, %c0_15] : memref<256x256xf32, #tpu.memory_space<vmem>>, vector<256x256xf32>
    tpu.vector_store %arg10[%c0_14, %c0_15], %21 {strides = array<i32>} : memref<256x256xf32, #tpu.memory_space<vmem>>, vector<256x256xf32>,
    %c0_i32_16 = arith.constant 0 : i32
    %23 = arith.cmpi eq, %arg1, %c0_i32_16 : i32
    %24 = arith.extui %23 : i1 to i32
    %c0_i32_17 = arith.constant 0 : i32
    %25 = arith.cmpi ne, %24, %c0_i32_17 : i32
    scf.if %25 {
      %c0_18 = arith.constant 0 : index
      %c0_19 = arith.constant 0 : index
      %26 = vector.load %arg10[%c0_18, %c0_19] : memref<256x256xf32, #tpu.memory_space<vmem>>, vector<256x256xf32>
      %c0_20 = arith.constant 0 : index
      %c0_21 = arith.constant 0 : index
      %27 = vector.load %arg7[%c0_20, %c0_21] : memref<1x256xf32, #tpu.memory_space<vmem>>, vector<1x256xf32>
      %28 = vector.broadcast %27 : vector<1x256xf32> to vector<256x256xf32>
      %29 = arith.addf %26, %28 : vector<256x256xf32>
      %c0_22 = arith.constant 0 : index
      %c0_23 = arith.constant 0 : index
      %30 = vector.load %arg3[%c0_22, %c0_23] : memref<256x256xf32, #tpu.memory_space<vmem>>, vector<256x256xf32>
      %31 = arith.addf %29, %30 : vector<256x256xf32>
      %32 = arith.mulf %31, %31 : vector<256x256xf32>
      %cst_24 = arith.constant dense<0.000000e+00> : vector<256xf32>
      %33 = vector.multi_reduction <add>, %32, %cst_24 [1] : vector<256x256xf32> to vector<256xf32>
      %34 = vector.shape_cast %33 : vector<256xf32> to vector<256x1xf32>
      %cst_25 = arith.constant 2.560000e+02 : f32
      %35 = vector.broadcast %cst_25 : f32 to vector<256x1xf32>
      %36 = arith.divf %34, %35 : vector<256x1xf32>
      %cst_26 = arith.constant 9.99999974E-6 : f32
      %37 = vector.broadcast %cst_26 : f32 to vector<256x1xf32>
      %38 = arith.addf %36, %37 : vector<256x1xf32>
      %39 = math.rsqrt %38 : vector<256x1xf32>
      %40 = vector.broadcast %39 : vector<256x1xf32> to vector<256x256xf32>
      %41 = arith.mulf %31, %40 : vector<256x256xf32>
      %c0_27 = arith.constant 0 : index
      %c0_28 = arith.constant 0 : index
      %42 = vector.load %arg8[%c0_27, %c0_28] : memref<1x256xf32, #tpu.memory_space<vmem>>, vector<1x256xf32>
      %43 = vector.broadcast %42 : vector<1x256xf32> to vector<256x256xf32>
      %44 = arith.mulf %43, %41 : vector<256x256xf32>
      %c0_29 = arith.constant 0 : index
      %c0_30 = arith.constant 0 : index
      %45 = vector.load %arg9[%c0_29, %c0_30] : memref<256x256xf32, #tpu.memory_space<vmem>>, vector<256x256xf32>
      tpu.vector_store %arg9[%c0_29, %c0_30], %44 {strides = array<i32>} : memref<256x256xf32, #tpu.memory_space<vmem>>, vector<256x256xf32>,
    } else {
    }
    return
  }
  func.func @transform_0(%arg0: i32, %arg1: i32) -> (i32, i32) {
    %c0_i32 = arith.constant 0 : i32
    %c0_i32_0 = arith.constant 0 : i32
    return %arg0, %c0_i32 : i32, i32
  }
  func.func @transform_1(%arg0: i32, %arg1: i32) -> (i32, i32) {
    %c0_i32 = arith.constant 0 : i32
    %c0_i32_0 = arith.constant 0 : i32
    return %arg0, %c0_i32 : i32, i32
  }
  func.func @transform_2(%arg0: i32, %arg1: i32) -> (i32, i32) {
    %c0_i32 = arith.constant 0 : i32
    %c0_i32_0 = arith.constant 0 : i32
    return %c0_i32, %arg1 : i32, i32
  }
  func.func @transform_3(%arg0: i32, %arg1: i32) -> (i32, i32) {
    %c0_i32 = arith.constant 0 : i32
    %c0_i32_0 = arith.constant 0 : i32
    return %c0_i32, %arg1 : i32, i32
  }
  func.func @transform_4(%arg0: i32, %arg1: i32) -> (i32, i32) {
    %c0_i32 = arith.constant 0 : i32
    %c0_i32_0 = arith.constant 0 : i32
    return %arg1, %c0_i32 : i32, i32
  }
  func.func @transform_5(%arg0: i32, %arg1: i32) -> (i32, i32) {
    %c0_i32 = arith.constant 0 : i32
    %c0_i32_0 = arith.constant 0 : i32
    %c0_i32_1 = arith.constant 0 : i32
    return %c0_i32, %c0_i32_0 : i32, i32
  }
  func.func @transform_6(%arg0: i32, %arg1: i32) -> (i32, i32) {
    %c0_i32 = arith.constant 0 : i32
    %c0_i32_0 = arith.constant 0 : i32
    %c0_i32_1 = arith.constant 0 : i32
    return %c0_i32, %c0_i32_0 : i32, i32
  }
  func.func @transform_7(%arg0: i32, %arg1: i32) -> (i32, i32) {
    %c0_i32 = arith.constant 0 : i32
    %c0_i32_0 = arith.constant 0 : i32
    return %arg0, %c0_i32 : i32, i32
  }
}

</mosaic_0001>

<llo_original>
// kernel: tpu_custom_call.1
$region0: #{tpu_custom_call.1}
  #allocation0 [shape = 'u32[]', space=smem, size = 0x4, offset = 0x4, fixed_abs, tag = 'smem constant byte address 0x4 - core index']
  #allocation1 [shape = 'u32[144,128]{1,0:T(1,128)}', space=vmem, size = 0x12000, scoped, tag = 'internal scratch']
  #allocation2 [shape = 'f32[256,256]{1,0:T(8,128)}', space=vmem, size = 0x40000, scoped, tag = 'scratch operand']
  %s0 = inlined_call_operand.hbm [shape: bf16[512,256], index: 0, kind: input, shape index: {}]
  %s1 = inlined_call_operand.hbm [shape: f32[512,256], index: 1, kind: input, shape index: {}]
  %s2 = inlined_call_operand.hbm [shape: bf16[256,512], index: 2, kind: input, shape index: {}]
  %s3 = inlined_call_operand.vmem [shape: f32[1,512], index: 3, kind: input, shape index: {}]
  %s4 = inlined_call_operand.hbm [shape: bf16[512,256], index: 4, kind: input, shape index: {}]
  %s5 = inlined_call_operand.vmem [shape: f32[1,256], index: 5, kind: input, shape index: {}]
  %s6 = inlined_call_operand.vmem [shape: f32[1,256], index: 6, kind: input, shape index: {}]
  %s7 = inlined_call_operand.hbm [shape: f32[512,256], index: 7, kind: output, shape index: {}]
  %s8 = sld [smem:[#allocation0]]
  $region85: #{tpu_custom_call.1} parent=0
    _
  %s10 = ssub.s32 1, %s8
  %s11 = scalar_select 0, %s10, %s8
  $region1: #{tpu_custom_call.1} parent=0
    #allocation3 [shape = 'u8[262144]{0}', space=vmem, size = 0x40000, scoped, tag = 'input window, operand 0']
    #allocation4 [shape = 's32[2]{0}', space=sflag, size = 0x8, scoped, tag = 'scoped memory for tpu_custom_call.1']
    #allocation5 [shape = 's32[2]{0}', space=sflag, size = 0x8, scoped, tag = 'scoped memory for tpu_custom_call.1']
    #allocation6 [shape = 'u8[524288]{0}', space=vmem, size = 0x80000, scoped, tag = 'input window, operand 1']
    #allocation7 [shape = 's32[2]{0}', space=sflag, size = 0x8, scoped, tag = 'scoped memory for tpu_custom_call.1']
    #allocation8 [shape = 'u8[262144]{0}', space=vmem, size = 0x40000, scoped, tag = 'input window, operand 2, single buffered']
    #allocation9 [shape = 'u8[262144]{0}', space=vmem, size = 0x40000, scoped, tag = 'input window, operand 4, single buffered']
    #allocation10 [shape = 's32[1]{0}', space=sflag, size = 0x4, scoped, tag = 'scoped memory for tpu_custom_call.1']
    #allocation11 [shape = 'u8[524288]{0}', space=vmem, size = 0x80000, scoped, tag = 'output window, operand 0']
    %12 = vsyncpa [#allocation4], 0
    %s13 = scalar_lea.sflag [#allocation4], 1
    %14 = vsyncpa %s13, 0
    %15 = vsyncpa [#allocation7], 0
    %s16 = scalar_lea.sflag [#allocation7], 1
    %17 = vsyncpa %s16, 0
    %18 = vsyncpa [#allocation10], 0
    %19 = vsyncpa [#allocation5], 0
    %s20 = scalar_lea.sflag [#allocation5], 1
    %21 = vsyncpa %s20, 0
    loop: start=0, step=1, limit=4
    $region2: #{tpu_custom_call.1} parent=1 // loop_pre_header
      _
    $region3: #{tpu_custom_call.1} parent=1 // loop_header
      %s23 = sphi 0, %s27
      %p24 = scmp.ge.s32.totalorder %s23, 4
      %s30 = sphi 0, %s42
      %s31 = sphi 0, %s38
      %s32 = sphi 0, %s30
      %s33 = sphi 0, %s31
      %s34 = sphi 0, %s32
      %s35 = sphi 0, %s33
      %s45 = sphi 0, %s47
      %s48 = sphi 0, %s45
      %s49 = sphi 0, %s48
      %s65 = sphi 0, %s49
      %s71 = sphi 0, %s73
      %s74 = sphi 0, %s71
      %s75 = sphi 0, %s74
      %s91 = sphi 0, %s75
      %s97 = sphi 0, %s99
      %s100 = sphi 0, %s97
      %s101 = sphi 0, %s100
      %s117 = sphi 0, %s101
      %s123 = sphi 0, %s125
      %s126 = sphi 0, %s123
      %s127 = sphi 0, %s126
      %s143 = sphi 0, %s127
      %s149 = sphi 0, %s151
      %s152 = sphi 0, %s149
      %s153 = sphi 0, %s152
      %s169 = sphi 0, %s153
      %s173 = sphi 0, %s173
      %s175 = sphi 0, %s173
      %s176 = sphi 0, %s175
      %s190 = sphi 0, %s176
      %s194 = sphi 0, %s194
      %s196 = sphi 0, %s194
      %s197 = sphi 0, %s196
      %s211 = sphi 0, %s197
      %s217 = sphi 0, %s219
      %s220 = sphi 0, %s217
      %s221 = sphi 0, %s220
      %s237 = sphi 0, %s221
    $region4: #{tpu_custom_call.1} parent=1 // loop_header_branch
      %26 = sbr.rel (%p24) target = $region8
    $region5: #{tpu_custom_call.1} parent=1 // loop_body
      %s28 = ssub.s32 %s23, 1
      %s29 = ssub.s32 %s23, 2
      %s36 = sadd.s32 1, %s31
      %p37 = scmp.ge.s32.totalorder %s36, 1
      %s38 = scalar_select %p37, 0, %s36
      %s39 = sadd.s32 1, %s30
      %s40 = scalar_select %p37, %s39, %s30
      %p41 = scmp.ge.s32.totalorder %s40, 2
      %s42 = scalar_select %p41, 0, %s40
      %s43 = ssub.s32 %s30, %s42
      %p44 = scmp.eq.s32.totalorder %s43, 0
      %s46 = sadd.s32 %s45, 1
      %s47 = scalar_select %p44, %s45, %s46
      %p50 = pneg %p44
      %p51 = scmp.eq.s32.totalorder %s23, 1
      %p52 = por %p50, %p51
      %p53 = scmp.ne.s32.totalorder %s45, %s48
      %p54 = scmp.eq.s32.totalorder %s23, 0
      %p55 = por %p53, %p54
      %p56 = scmp.ne.s32.totalorder %s45, %s48
      %p57 = scmp.eq.s32.totalorder %s28, 1
      %p58 = por %p56, %p57
      %p59 = scmp.ne.s32.totalorder %s48, %s49
      %p60 = scmp.eq.s32.totalorder %s28, 0
      %p61 = por %p59, %p60
      %p62 = scmp.ne.s32.totalorder %s48, %s49
      %p63 = scmp.eq.s32.totalorder %s29, 1
      %p64 = por %p62, %p63
      %p66 = scmp.ne.s32.totalorder %s49, %s65
      %p67 = scmp.eq.s32.totalorder %s29, 0
      %p68 = por %p66, %p67
      %s69 = ssub.s32 %s30, %s42
      %p70 = scmp.eq.s32.totalorder %s69, 0
      %s72 = sadd.s32 %s71, 1
      %s73 = scalar_select %p70, %s71, %s72
      %p76 = pneg %p70
      %p77 = scmp.eq.s32.totalorder %s23, 1
      %p78 = por %p76, %p77
      %p79 = scmp.ne.s32.totalorder %s71, %s74
      %p80 = scmp.eq.s32.totalorder %s23, 0
      %p81 = por %p79, %p80
      %p82 = scmp.ne.s32.totalorder %s71, %s74
      %p83 = scmp.eq.s32.totalorder %s28, 1
      %p84 = por %p82, %p83
      %p85 = scmp.ne.s32.totalorder %s74, %s75
      %p86 = scmp.eq.s32.totalorder %s28, 0
      %p87 = por %p85, %p86
      %p88 = scmp.ne.s32.totalorder %s74, %s75
      %p89 = scmp.eq.s32.totalorder %s29, 1
      %p90 = por %p88, %p89
      %p92 = scmp.ne.s32.totalorder %s75, %s91
      %p93 = scmp.eq.s32.totalorder %s29, 0
      %p94 = por %p92, %p93
      %s95 = ssub.s32 %s31, %s38
      %p96 = scmp.eq.s32.totalorder %s95, 0
      %s98 = sadd.s32 %s97, 1
      %s99 = scalar_select %p96, %s97, %s98
      %p102 = pneg %p96
      %p103 = scmp.eq.s32.totalorder %s23, 1
      %p104 = por %p102, %p103
      %p105 = scmp.ne.s32.totalorder %s97, %s100
      %p106 = scmp.eq.s32.totalorder %s23, 0
      %p107 = por %p105, %p106
      %p108 = scmp.ne.s32.totalorder %s97, %s100
      %p109 = scmp.eq.s32.totalorder %s28, 1
      %p110 = por %p108, %p109
      %p111 = scmp.ne.s32.totalorder %s100, %s101
      %p112 = scmp.eq.s32.totalorder %s28, 0
      %p113 = por %p111, %p112
      %p114 = scmp.ne.s32.totalorder %s100, %s101
      %p115 = scmp.eq.s32.totalorder %s29, 1
      %p116 = por %p114, %p115
      %p118 = scmp.ne.s32.totalorder %s101, %s117
      %p119 = scmp.eq.s32.totalorder %s29, 0
      %p120 = por %p118, %p119
      %s121 = ssub.s32 %s31, %s38
      %p122 = scmp.eq.s32.totalorder %s121, 0
      %s124 = sadd.s32 %s123, 1
      %s125 = scalar_select %p122, %s123, %s124
      %p128 = pneg %p122
      %p129 = scmp.eq.s32.totalorder %s23, 1
      %p130 = por %p128, %p129
      %p131 = scmp.ne.s32.totalorder %s123, %s126
      %p132 = scmp.eq.s32.totalorder %s23, 0
      %p133 = por %p131, %p132
      %p134 = scmp.ne.s32.totalorder %s123, %s126
      %p135 = scmp.eq.s32.totalorder %s28, 1
      %p136 = por %p134, %p135
      %p137 = scmp.ne.s32.totalorder %s126, %s127
      %p138 = scmp.eq.s32.totalorder %s28, 0
      %p139 = por %p137, %p138
      %p140 = scmp.ne.s32.totalorder %s126, %s127
      %p141 = scmp.eq.s32.totalorder %s29, 1
      %p142 = por %p140, %p141
      %p144 = scmp.ne.s32.totalorder %s127, %s143
      %p145 = scmp.eq.s32.totalorder %s29, 0
      %p146 = por %p144, %p145
      %s147 = ssub.s32 %s31, %s38
      %p148 = scmp.eq.s32.totalorder %s147, 0
      %s150 = sadd.s32 %s149, 1
      %s151 = scalar_select %p148, %s149, %s150
      %p154 = pneg %p148
      %p155 = scmp.eq.s32.totalorder %s23, 1
      %p156 = por %p154, %p155
      %p157 = scmp.ne.s32.totalorder %s149, %s152
      %p158 = scmp.eq.s32.totalorder %s23, 0
      %p159 = por %p157, %p158
      %p160 = scmp.ne.s32.totalorder %s149, %s152
      %p161 = scmp.eq.s32.totalorder %s28, 1
      %p162 = por %p160, %p161
      %p163 = scmp.ne.s32.totalorder %s152, %s153
      %p164 = scmp.eq.s32.totalorder %s28, 0
      %p165 = por %p163, %p164
      %p166 = scmp.ne.s32.totalorder %s152, %s153
      %p167 = scmp.eq.s32.totalorder %s29, 1
      %p168 = por %p166, %p167
      %p170 = scmp.ne.s32.totalorder %s153, %s169
      %p171 = scmp.eq.s32.totalorder %s29, 0
      %p172 = por %p170, %p171
      %s174 = sadd.s32 %s173, 1
      %p177 = scmp.eq.s32.totalorder %s23, 1
      %p178 = scmp.ne.s32.totalorder %s173, %s175
      %p179 = scmp.eq.s32.totalorder %s23, 0
      %p180 = por %p178, %p179
      %p181 = scmp.ne.s32.totalorder %s173, %s175
      %p182 = scmp.eq.s32.totalorder %s28, 1
      %p183 = por %p181, %p182
      %p184 = scmp.ne.s32.totalorder %s175, %s176
      %p185 = scmp.eq.s32.totalorder %s28, 0
      %p186 = por %p184, %p185
      %p187 = scmp.ne.s32.totalorder %s175, %s176
      %p188 = scmp.eq.s32.totalorder %s29, 1
      %p189 = por %p187, %p188
      %p191 = scmp.ne.s32.totalorder %s176, %s190
      %p192 = scmp.eq.s32.totalorder %s29, 0
      %p193 = por %p191, %p192
      %s195 = sadd.s32 %s194, 1
      %p198 = scmp.eq.s32.totalorder %s23, 1
      %p199 = scmp.ne.s32.totalorder %s194, %s196
      %p200 = scmp.eq.s32.totalorder %s23, 0
      %p201 = por %p199, %p200
      %p202 = scmp.ne.s32.totalorder %s194, %s196
      %p203 = scmp.eq.s32.totalorder %s28, 1
      %p204 = por %p202, %p203
      %p205 = scmp.ne.s32.totalorder %s196, %s197
      %p206 = scmp.eq.s32.totalorder %s28, 0
      %p207 = por %p205, %p206
      %p208 = scmp.ne.s32.totalorder %s196, %s197
      %p209 = scmp.eq.s32.totalorder %s29, 1
      %p210 = por %p208, %p209
      %p212 = scmp.ne.s32.totalorder %s197, %s211
      %p213 = scmp.eq.s32.totalorder %s29, 0
      %p214 = por %p212, %p213
      %s215 = ssub.s32 %s30, %s42
      %p216 = scmp.eq.s32.totalorder %s215, 0
      %s218 = sadd.s32 %s217, 1
      %s219 = scalar_select %p216, %s217, %s218
      %p222 = pneg %p216
      %p223 = scmp.eq.s32.totalorder %s23, 1
      %p224 = por %p222, %p223
      %p225 = scmp.ne.s32.totalorder %s217, %s220
      %p226 = scmp.eq.s32.totalorder %s23, 0
      %p227 = por %p225, %p226
      %p228 = scmp.ne.s32.totalorder %s217, %s220
      %p229 = scmp.eq.s32.totalorder %s28, 1
      %p230 = por %p228, %p229
      %p231 = scmp.ne.s32.totalorder %s220, %s221
      %p232 = scmp.eq.s32.totalorder %s28, 0
      %p233 = por %p231, %p232
      %p234 = scmp.ne.s32.totalorder %s220, %s221
      %p235 = scmp.eq.s32.totalorder %s29, 1
      %p236 = por %p234, %p235
      %p238 = scmp.ne.s32.totalorder %s221, %s237
      %p239 = scmp.eq.s32.totalorder %s29, 0
      %p240 = por %p238, %p239
      %p241 = scmp.le.s32.totalorder 1, %s23
      %p242 = scmp.lt.s32.totalorder %s23, 3
      %p243 = pnand %p241, %p242
      %p244 = pneg %p243
      // Predicated region
      $region9: #{tpu_custom_call.1} parent=5 // pred_check
        _
      $region10: #{tpu_custom_call.1} parent=5 // pred_check_branch
        %246 = sbr.rel (%p243) target = $region12
      $region11: #{tpu_custom_call.1} parent=5 // pred_region
        %s247 = ssub.s32 %s23, 1
        // Predicated region
        $region13: #{tpu_custom_call.1} parent=11 // pred_check
          %p248 = pneg %p113
        $region14: #{tpu_custom_call.1} parent=11 // pred_check_branch
          %250 = sbr.rel (%p248) target = $region16
        $region15: #{tpu_custom_call.1} parent=11 // pred_region
          %s251 = smul.u32 4, %s33
          %s253 = ssub.s32 8192, 8192
          %254 = vsyncadd [#allocation7], %s253
          %s255 = smul.addr %s251, 64
          %s256 = scalar_lea.hbm %s2, %s255
          %s257 = sshll.u32 [#allocation8], 4
          %s258 = int_to_ptr.vmem [resolvable:$true] %s257
          %263 = dma.hbm_to_vmem [thread:$0]  %s256, 8192, %s258, [#allocation7], 256, 256, 16
        $region16: #{tpu_custom_call.1} parent=11 // pred_fallthru
          _
        // Predicated region
        $region17: #{tpu_custom_call.1} parent=11 // pred_check
          %p264 = pneg %p139
        $region18: #{tpu_custom_call.1} parent=11 // pred_check_branch
          %266 = sbr.rel (%p264) target = $region20
        $region19: #{tpu_custom_call.1} parent=11 // pred_region
          %s267 = smul.u32 4, %s33
          %p268 = scmp.lt.s32.totalorder %s267, 3
          %s269 = scalar_select %p268, %s267, 3
          %s270 = scalar_lea.vmem %s3, %s269
          %s271 = smul.u32 4, %s33
        $region20: #{tpu_custom_call.1} parent=11 // pred_fallthru
          _
        // Predicated region
        $region21: #{tpu_custom_call.1} parent=11 // pred_check
          %p272 = pneg %p165
        $region22: #{tpu_custom_call.1} parent=11 // pred_check_branch
          %274 = sbr.rel (%p272) target = $region24
        $region23: #{tpu_custom_call.1} parent=11 // pred_region
          %s275 = smul.u32 64, %s33
          %s277 = ssub.s32 8192, 8192
          %278 = vsyncadd [#allocation10], %s277
          %s279 = smul.addr %s275, 2
          %s280 = smul.addr %s279, 64
          %s281 = scalar_lea.hbm %s4, %s280
          %s282 = sshll.u32 [#allocation9], 4
          %s283 = int_to_ptr.vmem [resolvable:$true] %s282
          %288 = dma.hbm_to_vmem [thread:$0]  %s281, 8192, %s283, [#allocation10], 128, 128, 8
        $region24: #{tpu_custom_call.1} parent=11 // pred_fallthru
          _
        // Predicated region
        $region25: #{tpu_custom_call.1} parent=11 // pred_check
          %p289 = pneg %p186
        $region26: #{tpu_custom_call.1} parent=11 // pred_check_branch
          %291 = sbr.rel (%p289) target = $region28
        $region27: #{tpu_custom_call.1} parent=11 // pred_region
          _
        $region28: #{tpu_custom_call.1} parent=11 // pred_fallthru
          _
        // Predicated region
        $region29: #{tpu_custom_call.1} parent=11 // pred_check
          %p292 = pneg %p207
        $region30: #{tpu_custom_call.1} parent=11 // pred_check_branch
          %294 = sbr.rel (%p292) target = $region32
        $region31: #{tpu_custom_call.1} parent=11 // pred_region
          _
        $region32: #{tpu_custom_call.1} parent=11 // pred_fallthru
          _
      $region12: #{tpu_custom_call.1} parent=5 // pred_fallthru
        _
      %p295 = scmp.lt.s32.totalorder %s23, 2
      // Predicated region
      $region33: #{tpu_custom_call.1} parent=5 // pred_check
        %p296 = pneg %p295
      $region34: #{tpu_custom_call.1} parent=5 // pred_check_branch
        %298 = sbr.rel (%p296) target = $region36
      $region35: #{tpu_custom_call.1} parent=5 // pred_region
        // Predicated region
        $region37: #{tpu_custom_call.1} parent=35 // pred_check
          %p299 = pneg %p55
        $region38: #{tpu_custom_call.1} parent=35 // pred_check_branch
          %301 = sbr.rel (%p299) target = $region40
        $region39: #{tpu_custom_call.1} parent=35 // pred_region
          %s302 = sand.u32 %s45, 1
          %s303 = scalar_lea.sflag [#allocation4], %s302
          %s304 = sand.u32 %s45, 1
          %s305 = smul.addr %s304, 256
          %s306 = scalar_lea.vmem [#allocation3], %s305
          %s307 = smul.u32 32, %s30
          %s309 = ssub.s32 4096, 4096
          %310 = vsyncadd %s303, %s309
          %s311 = smul.addr %s307, 2
          %s312 = smul.addr %s311, 64
          %s313 = scalar_lea.hbm %s0, %s312
          %s314 = sshll.u32 %s306, 4
          %s315 = int_to_ptr.vmem [resolvable:$true] %s314
          %320 = dma.hbm_to_vmem [thread:$0]  %s313, 4096, %s315, %s303, 128, 128, 8
        $region40: #{tpu_custom_call.1} parent=35 // pred_fallthru
          _
        // Predicated region
        $region41: #{tpu_custom_call.1} parent=35 // pred_check
          %p321 = pneg %p81
        $region42: #{tpu_custom_call.1} parent=35 // pred_check_branch
          %323 = sbr.rel (%p321) target = $region44
        $region43: #{tpu_custom_call.1} parent=35 // pred_region
          %s324 = sand.u32 %s23, 1
          %s325 = scalar_lea.sflag [#allocation7], %s324
          %s326 = sand.u32 %s71, 1
          %s327 = smul.addr %s326, 512
          %s328 = scalar_lea.vmem [#allocation6], %s327
          %s329 = smul.u32 32, %s30
          %s331 = ssub.s32 8192, 8192
          %332 = vsyncadd %s325, %s331
          %s333 = smul.addr %s329, 2
          %s334 = smul.addr %s333, 128
          %s335 = scalar_lea.hbm %s1, %s334
          %s336 = sshll.u32 %s328, 4
          %s337 = int_to_ptr.vmem [resolvable:$true] %s336
          %342 = dma.hbm_to_vmem [thread:$0]  %s335, 8192, %s337, %s325, 256, 256, 16
        $region44: #{tpu_custom_call.1} parent=35 // pred_fallthru
          _
      $region36: #{tpu_custom_call.1} parent=5 // pred_fallthru
        _
      %p343 = scmp.le.s32.totalorder 1, %s23
      %p344 = scmp.lt.s32.totalorder %s23, 3
      %p345 = pnand %p343, %p344
      %p346 = pneg %p345
      // Predicated region
      $region45: #{tpu_custom_call.1} parent=5 // pred_check
        _
      $region46: #{tpu_custom_call.1} parent=5 // pred_check_branch
        %348 = sbr.rel (%p345) target = $region48
      $region47: #{tpu_custom_call.1} parent=5 // pred_region
        %s349 = ssub.s32 %s23, 1
        %s350 = sand.u32 %s48, 1
        %s351 = scalar_lea.sflag [#allocation4], %s350
        %s352 = sand.u32 %s48, 1
        %s353 = smul.addr %s352, 256
        %s354 = scalar_lea.vmem [#allocation3], %s353
        // Predicated region
        $region49: #{tpu_custom_call.1} parent=47 // pred_check
          %p355 = pneg %p61
        $region50: #{tpu_custom_call.1} parent=47 // pred_check_branch
          %357 = sbr.rel (%p355) target = $region52
        $region51: #{tpu_custom_call.1} parent=47 // pred_region
          %358 = dma.done %s351, 4096
        $region52: #{tpu_custom_call.1} parent=47 // pred_fallthru
          _
        %s359 = sand.u32 %s28, 1
        %s360 = scalar_lea.sflag [#allocation7], %s359
        %s361 = sand.u32 %s74, 1
        %s362 = smul.addr %s361, 512
        %s363 = scalar_lea.vmem [#allocation6], %s362
        // Predicated region
        $region53: #{tpu_custom_call.1} parent=47 // pred_check
          %p364 = pneg %p87
        $region54: #{tpu_custom_call.1} parent=47 // pred_check_branch
          %366 = sbr.rel (%p364) target = $region56
        $region55: #{tpu_custom_call.1} parent=47 // pred_region
          %367 = dma.done %s360, 8192
        $region56: #{tpu_custom_call.1} parent=47 // pred_fallthru
          _
        // Predicated region
        $region57: #{tpu_custom_call.1} parent=47 // pred_check
          %p368 = pneg %p113
        $region58: #{tpu_custom_call.1} parent=47 // pred_check_branch
          %370 = sbr.rel (%p368) target = $region60
        $region59: #{tpu_custom_call.1} parent=47 // pred_region
          %371 = dma.done [#allocation7], 8192
        $region60: #{tpu_custom_call.1} parent=47 // pred_fallthru
          _
        // Predicated region
        $region61: #{tpu_custom_call.1} parent=47 // pred_check
          %p372 = pneg %p165
        $region62: #{tpu_custom_call.1} parent=47 // pred_check_branch
          %374 = sbr.rel (%p372) target = $region64
        $region63: #{tpu_custom_call.1} parent=47 // pred_region
          %375 = dma.done [#allocation10], 8192
        $region64: #{tpu_custom_call.1} parent=47 // pred_fallthru
          _
        %s376 = sand.u32 %s48, 1
        %s377 = scalar_lea.sflag [#allocation4], %s376
        %s378 = sand.u32 %s48, 1
        %s379 = smul.addr %s378, 256
        %s380 = scalar_lea.vmem [#allocation3], %s379
        %p381 = pneg %p61
        %p382 = pneg %p58
        %s383 = sand.u32 %s28, 1
        %s384 = scalar_lea.sflag [#allocation7], %s383
        %s385 = sand.u32 %s74, 1
        %s386 = smul.addr %s385, 512
        %s387 = scalar_lea.vmem [#allocation6], %s386
        %p388 = pneg %p87
        %p389 = pneg %p84
        %p390 = pneg %p113
        %p391 = pneg %p110
        %s392 = smul.u32 4, %s33
        %p393 = scmp.lt.s32.totalorder %s392, 3
        %s394 = scalar_select %p393, %s392, 3
        %s395 = scalar_lea.vmem %s3, %s394
        %p396 = pneg %p139
        %p397 = pneg %p136
        %p398 = pneg %p165
        %p399 = pneg %p162
        %p400 = pneg %p186
        %p401 = pneg %p183
        %p402 = pneg %p207
        %p403 = pneg %p204
        %p404 = pneg %p233
        %p405 = pneg %p230
        %s406 = sand.u32 %s220, 1
        %s407 = scalar_lea.sflag [#allocation5], %s406
        %s408 = sand.u32 %s220, 1
        %s409 = smul.addr %s408, 512
        %s410 = scalar_lea.vmem [#allocation11], %s409
        %s411 = smul.u32 32, %s32
        %s412 = smul.u32 32, %s32
        %s413 = smul.u32 4, %s33
        %s414 = smul.u32 4, %s33
        %p415 = scmp.lt.s32.totalorder %s414, 3
        %s416 = scalar_select %p415, %s414, 3
        %s417 = scalar_lea.vmem %s3, %s416
        %s418 = smul.u32 4, %s33
        %s419 = smul.u32 64, %s33
        %s420 = smul.u32 32, %s32
        %p421 = scmp.eq.s32.totalorder %s33, 0
        // Predicated region
        $region65: #{tpu_custom_call.1} parent=47 // pred_check
          %p422 = pneg %p421
        $region66: #{tpu_custom_call.1} parent=47 // pred_check_branch
          %424 = sbr.rel (%p422) target = $region68
        $region67: #{tpu_custom_call.1} parent=47 // pred_region
          %425 = vst [vmem:[#allocation2] sm:$0xff] 0.0
          %426 = vst [vmem:[#allocation2 + $0x8] sm:$0xff] 0.0
          %427 = vst [vmem:[#allocation2 + $0x10] sm:$0xff] 0.0
          %428 = vst [vmem:[#allocation2 + $0x18] sm:$0xff] 0.0
          %429 = vst [vmem:[#allocation2 + $0x20] sm:$0xff] 0.0
          %430 = vst [vmem:[#allocation2 + $0x28] sm:$0xff] 0.0
          %431 = vst [vmem:[#allocation2 + $0x30] sm:$0xff] 0.0
          %432 = vst [vmem:[#allocation2 + $0x38] sm:$0xff] 0.0
          %433 = vst [vmem:[#allocation2 + $0x40] sm:$0xff] 0.0
          %434 = vst [vmem:[#allocation2 + $0x48] sm:$0xff] 0.0
          %435 = vst [vmem:[#allocation2 + $0x50] sm:$0xff] 0.0
          %436 = vst [vmem:[#allocation2 + $0x58] sm:$0xff] 0.0
          %437 = vst [vmem:[#allocation2 + $0x60] sm:$0xff] 0.0
          %438 = vst [vmem:[#allocation2 + $0x68] sm:$0xff] 0.0
          %439 = vst [vmem:[#allocation2 + $0x70] sm:$0xff] 0.0
          %440 = vst [vmem:[#allocation2 + $0x78] sm:$0xff] 0.0
          %441 = vst [vmem:[#allocation2 + $0x80] sm:$0xff] 0.0
          %442 = vst [vmem:[#allocation2 + $0x88] sm:$0xff] 0.0
          %443 = vst [vmem:[#allocation2 + $0x90] sm:$0xff] 0.0
          %444 = vst [vmem:[#allocation2 + $0x98] sm:$0xff] 0.0
          %445 = vst [vmem:[#allocation2 + $0xa0] sm:$0xff] 0.0
          %446 = vst [vmem:[#allocation2 + $0xa8] sm:$0xff] 0.0
          %447 = vst [vmem:[#allocation2 + $0xb0] sm:$0xff] 0.0
          %448 = vst [vmem:[#allocation2 + $0xb8] sm:$0xff] 0.0
          %449 = vst [vmem:[#allocation2 + $0xc0] sm:$0xff] 0.0
          %450 = vst [vmem:[#allocation2 + $0xc8] sm:$0xff] 0.0
          %451 = vst [vmem:[#allocation2 + $0xd0] sm:$0xff] 0.0
          %452 = vst [vmem:[#allocation2 + $0xd8] sm:$0xff] 0.0
          %453 = vst [vmem:[#allocation2 + $0xe0] sm:$0xff] 0.0
          %454 = vst [vmem:[#allocation2 + $0xe8] sm:$0xff] 0.0
          %455 = vst [vmem:[#allocation2 + $0xf0] sm:$0xff] 0.0
          %456 = vst [vmem:[#allocation2 + $0xf8] sm:$0xff] 0.0
          %457 = vst [vmem:[#allocation2 + $0x100] sm:$0xff] 0.0
          %458 = vst [vmem:[#allocation2 + $0x108] sm:$0xff] 0.0
          %459 = vst [vmem:[#allocation2 + $0x110] sm:$0xff] 0.0
          %460 = vst [vmem:[#allocation2 + $0x118] sm:$0xff] 0.0
          %461 = vst [vmem:[#allocation2 + $0x120] sm:$0xff] 0.0
          %462 = vst [vmem:[#allocation2 + $0x128] sm:$0xff] 0.0
          %463 = vst [vmem:[#allocation2 + $0x130] sm:$0xff] 0.0
          %464 = vst [vmem:[#allocation2 + $0x138] sm:$0xff] 0.0
          %465 = vst [vmem:[#allocation2 + $0x140] sm:$0xff] 0.0
          %466 = vst [vmem:[#allocation2 + $0x148] sm:$0xff] 0.0
          %467 = vst [vmem:[#allocation2 + $0x150] sm:$0xff] 0.0
          %468 = vst [vmem:[#allocation2 + $0x158] sm:$0xff] 0.0
          %469 = vst [vmem:[#allocation2 + $0x160] sm:$0xff] 0.0
          %470 = vst [vmem:[#allocation2 + $0x168] sm:$0xff] 0.0
          %471 = vst [vmem:[#allocation2 + $0x170] sm:$0xff] 0.0
          %472 = vst [vmem:[#allocation2 + $0x178] sm:$0xff] 0.0
          %473 = vst [vmem:[#allocation2 + $0x180] sm:$0xff] 0.0
          %474 = vst [vmem:[#allocation2 + $0x188] sm:$0xff] 0.0
          %475 = vst [vmem:[#allocation2 + $0x190] sm:$0xff] 0.0
          %476 = vst [vmem:[#allocation2 + $0x198] sm:$0xff] 0.0
          %477 = vst [vmem:[#allocation2 + $0x1a0] sm:$0xff] 0.0
          %478 = vst [vmem:[#allocation2 + $0x1a8] sm:$0xff] 0.0
          %479 = vst [vmem:[#allocation2 + $0x1b0] sm:$0xff] 0.0
          %480 = vst [vmem:[#allocation2 + $0x1b8] sm:$0xff] 0.0
          %481 = vst [vmem:[#allocation2 + $0x1c0] sm:$0xff] 0.0
          %482 = vst [vmem:[#allocation2 + $0x1c8] sm:$0xff] 0.0
          %483 = vst [vmem:[#allocation2 + $0x1d0] sm:$0xff] 0.0
          %484 = vst [vmem:[#allocation2 + $0x1d8] sm:$0xff] 0.0
          %485 = vst [vmem:[#allocation2 + $0x1e0] sm:$0xff] 0.0
          %486 = vst [vmem:[#allocation2 + $0x1e8] sm:$0xff] 0.0
          %487 = vst [vmem:[#allocation2 + $0x1f0] sm:$0xff] 0.0
          %488 = vst [vmem:[#allocation2 + $0x1f8] sm:$0xff] 0.0
        $region68: #{tpu_custom_call.1} parent=47 // pred_fallthru
          _
        %v489 = vld [vmem:[%s354] sm:$0xff]
        %v490 = vld [vmem:[%s354 + $0x8] sm:$0xff]
        %v491 = vld [vmem:[%s354 + $0x10] sm:$0xff]
        %v492 = vld [vmem:[%s354 + $0x18] sm:$0xff]
        %v493 = vld [vmem:[%s354 + $0x20] sm:$0xff]
        %v494 = vld [vmem:[%s354 + $0x28] sm:$0xff]
        %v495 = vld [vmem:[%s354 + $0x30] sm:$0xff]
        %v496 = vld [vmem:[%s354 + $0x38] sm:$0xff]
        %v497 = vld [vmem:[%s354 + $0x40] sm:$0xff]
        %v498 = vld [vmem:[%s354 + $0x48] sm:$0xff]
        %v499 = vld [vmem:[%s354 + $0x50] sm:$0xff]
        %v500 = vld [vmem:[%s354 + $0x58] sm:$0xff]
        %v501 = vld [vmem:[%s354 + $0x60] sm:$0xff]
        %v502 = vld [vmem:[%s354 + $0x68] sm:$0xff]
        %v503 = vld [vmem:[%s354 + $0x70] sm:$0xff]
        %v504 = vld [vmem:[%s354 + $0x78] sm:$0xff]
        %v505 = vld [vmem:[%s354 + $0x80] sm:$0xff]
        %v506 = vld [vmem:[%s354 + $0x88] sm:$0xff]
        %v507 = vld [vmem:[%s354 + $0x90] sm:$0xff]
        %v508 = vld [vmem:[%s354 + $0x98] sm:$0xff]
        %v509 = vld [vmem:[%s354 + $0xa0] sm:$0xff]
        %v510 = vld [vmem:[%s354 + $0xa8] sm:$0xff]
        %v511 = vld [vmem:[%s354 + $0xb0] sm:$0xff]
        %v512 = vld [vmem:[%s354 + $0xb8] sm:$0xff]
        %v513 = vld [vmem:[%s354 + $0xc0] sm:$0xff]
        %v514 = vld [vmem:[%s354 + $0xc8] sm:$0xff]
        %v515 = vld [vmem:[%s354 + $0xd0] sm:$0xff]
        %v516 = vld [vmem:[%s354 + $0xd8] sm:$0xff]
        %v517 = vld [vmem:[%s354 + $0xe0] sm:$0xff]
        %v518 = vld [vmem:[%s354 + $0xe8] sm:$0xff]
        %v519 = vld [vmem:[%s354 + $0xf0] sm:$0xff]
        %v520 = vld [vmem:[%s354 + $0xf8] sm:$0xff]
        %v521 = vld [vmem:[#allocation8] sm:$0xff]
        %v522 = vld [vmem:[#allocation8 + $0x8] sm:$0xff]
        %v523 = vld [vmem:[#allocation8 + $0x10] sm:$0xff]
        %v524 = vld [vmem:[#allocation8 + $0x18] sm:$0xff]
        %v525 = vld [vmem:[#allocation8 + $0x20] sm:$0xff]
        %v526 = vld [vmem:[#allocation8 + $0x28] sm:$0xff]
        %v527 = vld [vmem:[#allocation8 + $0x30] sm:$0xff]
        %v528 = vld [vmem:[#allocation8 + $0x38] sm:$0xff]
        %v529 = vld [vmem:[#allocation8 + $0x40] sm:$0xff]
        %v530 = vld [vmem:[#allocation8 + $0x48] sm:$0xff]
        %v531 = vld [vmem:[#allocation8 + $0x50] sm:$0xff]
        %v532 = vld [vmem:[#allocation8 + $0x58] sm:$0xff]
        %v533 = vld [vmem:[#allocation8 + $0x60] sm:$0xff]
        %v534 = vld [vmem:[#allocation8 + $0x68] sm:$0xff]
        %v535 = vld [vmem:[#allocation8 + $0x70] sm:$0xff]
        %v536 = vld [vmem:[#allocation8 + $0x78] sm:$0xff]
        %v537 = vld [vmem:[#allocation8 + $0x80] sm:$0xff]
        %v538 = vld [vmem:[#allocation8 + $0x88] sm:$0xff]
        %v539 = vld [vmem:[#allocation8 + $0x90] sm:$0xff]
        %v540 = vld [vmem:[#allocation8 + $0x98] sm:$0xff]
        %v541 = vld [vmem:[#allocation8 + $0xa0] sm:$0xff]
        %v542 = vld [vmem:[#allocation8 + $0xa8] sm:$0xff]
        %v543 = vld [vmem:[#allocation8 + $0xb0] sm:$0xff]
        %v544 = vld [vmem:[#allocation8 + $0xb8] sm:$0xff]
        %v545 = vld [vmem:[#allocation8 + $0xc0] sm:$0xff]
        %v546 = vld [vmem:[#allocation8 + $0xc8] sm:$0xff]
        %v547 = vld [vmem:[#allocation8 + $0xd0] sm:$0xff]
        %v548 = vld [vmem:[#allocation8 + $0xd8] sm:$0xff]
        %v549 = vld [vmem:[#allocation8 + $0xe0] sm:$0xff]
        %v550 = vld [vmem:[#allocation8 + $0xe8] sm:$0xff]
        %v551 = vld [vmem:[#allocation8 + $0xf0] sm:$0xff]
        %v552 = vld [vmem:[#allocation8 + $0xf8] sm:$0xff]
        %v553 = vld [vmem:[#allocation8 + $0x100] sm:$0xff]
        %v554 = vld [vmem:[#allocation8 + $0x108] sm:$0xff]
        %v555 = vld [vmem:[#allocation8 + $0x110] sm:$0xff]
        %v556 = vld [vmem:[#allocation8 + $0x118] sm:$0xff]
        %v557 = vld [vmem:[#allocation8 + $0x120] sm:$0xff]
        %v558 = vld [vmem:[#allocation8 + $0x128] sm:$0xff]
        %v559 = vld [vmem:[#allocation8 + $0x130] sm:$0xff]
        %v560 = vld [vmem:[#allocation8 + $0x138] sm:$0xff]
        %v561 = vld [vmem:[#allocation8 + $0x140] sm:$0xff]
        %v562 = vld [vmem:[#allocation8 + $0x148] sm:$0xff]
        %v563 = vld [vmem:[#allocation8 + $0x150] sm:$0xff]
        %v564 = vld [vmem:[#allocation8 + $0x158] sm:$0xff]
        %v565 = vld [vmem:[#allocation8 + $0x160] sm:$0xff]
        %v566 = vld [vmem:[#allocation8 + $0x168] sm:$0xff]
        %v567 = vld [vmem:[#allocation8 + $0x170] sm:$0xff]
        %v568 = vld [vmem:[#allocation8 + $0x178] sm:$0xff]
        %v569 = vld [vmem:[#allocation8 + $0x180] sm:$0xff]
        %v570 = vld [vmem:[#allocation8 + $0x188] sm:$0xff]
        %v571 = vld [vmem:[#allocation8 + $0x190] sm:$0xff]
        %v572 = vld [vmem:[#allocation8 + $0x198] sm:$0xff]
        %v573 = vld [vmem:[#allocation8 + $0x1a0] sm:$0xff]
        %v574 = vld [vmem:[#allocation8 + $0x1a8] sm:$0xff]
        %v575 = vld [vmem:[#allocation8 + $0x1b0] sm:$0xff]
        %v576 = vld [vmem:[#allocation8 + $0x1b8] sm:$0xff]
        %v577 = vld [vmem:[#allocation8 + $0x1c0] sm:$0xff]
        %v578 = vld [vmem:[#allocation8 + $0x1c8] sm:$0xff]
        %v579 = vld [vmem:[#allocation8 + $0x1d0] sm:$0xff]
        %v580 = vld [vmem:[#allocation8 + $0x1d8] sm:$0xff]
        %v581 = vld [vmem:[#allocation8 + $0x1e0] sm:$0xff]
        %v582 = vld [vmem:[#allocation8 + $0x1e8] sm:$0xff]
        %v583 = vld [vmem:[#allocation8 + $0x1f0] sm:$0xff]
        %v584 = vld [vmem:[#allocation8 + $0x1f8] sm:$0xff]
        %v585 = vld [vmem:[%s417] sm:$0xf]
        %v587 = vlaneseq
        %v588 = vshrl.u32 %v587, 7
        %v589 = vsub.s32 0, %v588
        %v590 = vrot.slane %v585, %v589
        %v591 = vlaneseq
        %v592 = vshrl.u32 %v591, 7
        %v593 = vsub.s32 1, %v592
        %v594 = vrot.slane %v585, %v593
        %v595 = vlaneseq
        %v596 = vshrl.u32 %v595, 7
        %v597 = vsub.s32 2, %v596
        %v598 = vrot.slane %v585, %v597
        %v599 = vlaneseq
        %v600 = vshrl.u32 %v599, 7
        %v601 = vsub.s32 3, %v600
        %v602 = vrot.slane %v585, %v601
        %v639 = vunpack.c.l.b16 %v489
        %v640 = vunpack.c.h.b16 %v489
        %v641 = vunpack.c.l.b16 %v490
        %v642 = vunpack.c.h.b16 %v490
        %v643 = vunpack.c.l.b16 %v491
        %v644 = vunpack.c.h.b16 %v491
        %v645 = vunpack.c.l.b16 %v492
        %v646 = vunpack.c.h.b16 %v492
        %v647 = vunpack.c.l.b16 %v493
        %v648 = vunpack.c.h.b16 %v493
        %v649 = vunpack.c.l.b16 %v494
        %v650 = vunpack.c.h.b16 %v494
        %v651 = vunpack.c.l.b16 %v495
        %v652 = vunpack.c.h.b16 %v495
        %v653 = vunpack.c.l.b16 %v496
        %v654 = vunpack.c.h.b16 %v496
        %v655 = vunpack.c.l.b16 %v497
        %v656 = vunpack.c.h.b16 %v497
        %v657 = vunpack.c.l.b16 %v498
        %v658 = vunpack.c.h.b16 %v498
        %v659 = vunpack.c.l.b16 %v499
        %v660 = vunpack.c.h.b16 %v499
        %v661 = vunpack.c.l.b16 %v500
        %v662 = vunpack.c.h.b16 %v500
        %v663 = vunpack.c.l.b16 %v501
        %v664 = vunpack.c.h.b16 %v501
        %v665 = vunpack.c.l.b16 %v502
        %v666 = vunpack.c.h.b16 %v502
        %v667 = vunpack.c.l.b16 %v503
        %v668 = vunpack.c.h.b16 %v503
        %v669 = vunpack.c.l.b16 %v504
        %v670 = vunpack.c.h.b16 %v504
        %v671 = vunpack.c.l.b16 %v505
        %v672 = vunpack.c.h.b16 %v505
        %v673 = vunpack.c.l.b16 %v506
        %v674 = vunpack.c.h.b16 %v506
        %v675 = vunpack.c.l.b16 %v507
        %v676 = vunpack.c.h.b16 %v507
        %v677 = vunpack.c.l.b16 %v508
        %v678 = vunpack.c.h.b16 %v508
        %v679 = vunpack.c.l.b16 %v509
        %v680 = vunpack.c.h.b16 %v509
        %v681 = vunpack.c.l.b16 %v510
        %v682 = vunpack.c.h.b16 %v510
        %v683 = vunpack.c.l.b16 %v511
        %v684 = vunpack.c.h.b16 %v511
        %v685 = vunpack.c.l.b16 %v512
        %v686 = vunpack.c.h.b16 %v512
        %v687 = vunpack.c.l.b16 %v513
        %v688 = vunpack.c.h.b16 %v513
        %v689 = vunpack.c.l.b16 %v514
        %v690 = vunpack.c.h.b16 %v514
        %v691 = vunpack.c.l.b16 %v515
        %v692 = vunpack.c.h.b16 %v515
        %v693 = vunpack.c.l.b16 %v516
        %v694 = vunpack.c.h.b16 %v516
        %v695 = vunpack.c.l.b16 %v517
        %v696 = vunpack.c.h.b16 %v517
        %v697 = vunpack.c.l.b16 %v518
        %v698 = vunpack.c.h.b16 %v518
        %v699 = vunpack.c.l.b16 %v519
        %v700 = vunpack.c.h.b16 %v519
        %v701 = vunpack.c.l.b16 %v520
        %v702 = vunpack.c.h.b16 %v520
        %v703 = vpack.c.b16 %v641, %v639
        %v704 = vpack.c.b16 %v642, %v640
        %v705 = vpack.c.b16 %v645, %v643
        %v706 = vpack.c.b16 %v646, %v644
        %v707 = vpack.c.b16 %v649, %v647
        %v708 = vpack.c.b16 %v650, %v648
        %v709 = vpack.c.b16 %v653, %v651
        %v710 = vpack.c.b16 %v654, %v652
        %v711 = vpack.c.b16 %v657, %v655
        %v712 = vpack.c.b16 %v658, %v656
        %v713 = vpack.c.b16 %v661, %v659
        %v714 = vpack.c.b16 %v662, %v660
        %v715 = vpack.c.b16 %v665, %v663
        %v716 = vpack.c.b16 %v666, %v664
        %v717 = vpack.c.b16 %v669, %v667
        %v718 = vpack.c.b16 %v670, %v668
        %v719 = vpack.c.b16 %v673, %v671
        %v720 = vpack.c.b16 %v674, %v672
        %v721 = vpack.c.b16 %v677, %v675
        %v722 = vpack.c.b16 %v678, %v676
        %v723 = vpack.c.b16 %v681, %v679
        %v724 = vpack.c.b16 %v682, %v680
        %v725 = vpack.c.b16 %v685, %v683
        %v726 = vpack.c.b16 %v686, %v684
        %v727 = vpack.c.b16 %v689, %v687
        %v728 = vpack.c.b16 %v690, %v688
        %v729 = vpack.c.b16 %v693, %v691
        %v730 = vpack.c.b16 %v694, %v692
        %v731 = vpack.c.b16 %v697, %v695
        %v732 = vpack.c.b16 %v698, %v696
        %v733 = vpack.c.b16 %v701, %v699
        %v734 = vpack.c.b16 %v702, %v700
        %v831 = vunpack.c.l.b16 %v521
        %v832 = vunpack.c.h.b16 %v521
        %v833 = vunpack.c.l.b16 %v522
        %v834 = vunpack.c.h.b16 %v522
        %v835 = vunpack.c.l.b16 %v523
        %v836 = vunpack.c.h.b16 %v523
        %v837 = vunpack.c.l.b16 %v524
        %v838 = vunpack.c.h.b16 %v524
        %v839 = vunpack.c.l.b16 %v525
        %v840 = vunpack.c.h.b16 %v525
        %v841 = vunpack.c.l.b16 %v526
        %v842 = vunpack.c.h.b16 %v526
        %v843 = vunpack.c.l.b16 %v527
        %v844 = vunpack.c.h.b16 %v527
        %v845 = vunpack.c.l.b16 %v528
        %v846 = vunpack.c.h.b16 %v528
        %v847 = vunpack.c.l.b16 %v529
        %v848 = vunpack.c.h.b16 %v529
        %v849 = vunpack.c.l.b16 %v530
        %v850 = vunpack.c.h.b16 %v530
        %v851 = vunpack.c.l.b16 %v531
        %v852 = vunpack.c.h.b16 %v531
        %v853 = vunpack.c.l.b16 %v532
        %v854 = vunpack.c.h.b16 %v532
        %v855 = vunpack.c.l.b16 %v533
        %v856 = vunpack.c.h.b16 %v533
        %v857 = vunpack.c.l.b16 %v534
        %v858 = vunpack.c.h.b16 %v534
        %v859 = vunpack.c.l.b16 %v535
        %v860 = vunpack.c.h.b16 %v535
        %v861 = vunpack.c.l.b16 %v536
        %v862 = vunpack.c.h.b16 %v536
        %v863 = vunpack.c.l.b16 %v537
        %v864 = vunpack.c.h.b16 %v537
        %v865 = vunpack.c.l.b16 %v538
        %v866 = vunpack.c.h.b16 %v538
        %v867 = vunpack.c.l.b16 %v539
        %v868 = vunpack.c.h.b16 %v539
        %v869 = vunpack.c.l.b16 %v540
        %v870 = vunpack.c.h.b16 %v540
        %v871 = vunpack.c.l.b16 %v541
        %v872 = vunpack.c.h.b16 %v541
        %v873 = vunpack.c.l.b16 %v542
        %v874 = vunpack.c.h.b16 %v542
        %v875 = vunpack.c.l.b16 %v543
        %v876 = vunpack.c.h.b16 %v543
        %v877 = vunpack.c.l.b16 %v544
        %v878 = vunpack.c.h.b16 %v544
        %v879 = vunpack.c.l.b16 %v545
        %v880 = vunpack.c.h.b16 %v545
        %v881 = vunpack.c.l.b16 %v546
        %v882 = vunpack.c.h.b16 %v546
        %v883 = vunpack.c.l.b16 %v547
        %v884 = vunpack.c.h.b16 %v547
        %v885 = vunpack.c.l.b16 %v548
        %v886 = vunpack.c.h.b16 %v548
        %v887 = vunpack.c.l.b16 %v549
        %v888 = vunpack.c.h.b16 %v549
        %v889 = vunpack.c.l.b16 %v550
        %v890 = vunpack.c.h.b16 %v550
        %v891 = vunpack.c.l.b16 %v551
        %v892 = vunpack.c.h.b16 %v551
        %v893 = vunpack.c.l.b16 %v552
        %v894 = vunpack.c.h.b16 %v552
        %v895 = vunpack.c.l.b16 %v553
        %v896 = vunpack.c.h.b16 %v553
        %v897 = vunpack.c.l.b16 %v554
        %v898 = vunpack.c.h.b16 %v554
        %v899 = vunpack.c.l.b16 %v555
        %v900 = vunpack.c.h.b16 %v555
        %v901 = vunpack.c.l.b16 %v556
        %v902 = vunpack.c.h.b16 %v556
        %v903 = vunpack.c.l.b16 %v557
        %v904 = vunpack.c.h.b16 %v557
        %v905 = vunpack.c.l.b16 %v558
        %v906 = vunpack.c.h.b16 %v558
        %v907 = vunpack.c.l.b16 %v559
        %v908 = vunpack.c.h.b16 %v559
        %v909 = vunpack.c.l.b16 %v560
        %v910 = vunpack.c.h.b16 %v560
        %v911 = vunpack.c.l.b16 %v561
        %v912 = vunpack.c.h.b16 %v561
        %v913 = vunpack.c.l.b16 %v562
        %v914 = vunpack.c.h.b16 %v562
        %v915 = vunpack.c.l.b16 %v563
        %v916 = vunpack.c.h.b16 %v563
        %v917 = vunpack.c.l.b16 %v564
        %v918 = vunpack.c.h.b16 %v564
        %v919 = vunpack.c.l.b16 %v565
        %v920 = vunpack.c.h.b16 %v565
        %v921 = vunpack.c.l.b16 %v566
        %v922 = vunpack.c.h.b16 %v566
        %v923 = vunpack.c.l.b16 %v567
        %v924 = vunpack.c.h.b16 %v567
        %v925 = vunpack.c.l.b16 %v568
        %v926 = vunpack.c.h.b16 %v568
        %v927 = vunpack.c.l.b16 %v569
        %v928 = vunpack.c.h.b16 %v569
        %v929 = vunpack.c.l.b16 %v570
        %v930 = vunpack.c.h.b16 %v570
        %v931 = vunpack.c.l.b16 %v571
        %v932 = vunpack.c.h.b16 %v571
        %v933 = vunpack.c.l.b16 %v572
        %v934 = vunpack.c.h.b16 %v572
        %v935 = vunpack.c.l.b16 %v573
        %v936 = vunpack.c.h.b16 %v573
        %v937 = vunpack.c.l.b16 %v574
        %v938 = vunpack.c.h.b16 %v574
        %v939 = vunpack.c.l.b16 %v575
        %v940 = vunpack.c.h.b16 %v575
        %v941 = vunpack.c.l.b16 %v576
        %v942 = vunpack.c.h.b16 %v576
        %v943 = vunpack.c.l.b16 %v577
        %v944 = vunpack.c.h.b16 %v577
        %v945 = vunpack.c.l.b16 %v578
        %v946 = vunpack.c.h.b16 %v578
        %v947 = vunpack.c.l.b16 %v579
        %v948 = vunpack.c.h.b16 %v579
        %v949 = vunpack.c.l.b16 %v580
        %v950 = vunpack.c.h.b16 %v580
        %v951 = vunpack.c.l.b16 %v581
        %v952 = vunpack.c.h.b16 %v581
        %v953 = vunpack.c.l.b16 %v582
        %v954 = vunpack.c.h.b16 %v582
        %v955 = vunpack.c.l.b16 %v583
        %v956 = vunpack.c.h.b16 %v583
        %v957 = vunpack.c.l.b16 %v584
        %v958 = vunpack.c.h.b16 %v584
        %v959 = vpack.c.b16 %v835, %v831
        %v960 = vpack.c.b16 %v836, %v832
        %v961 = vpack.c.b16 %v837, %v833
        %v962 = vpack.c.b16 %v838, %v834
        %v963 = vpack.c.b16 %v843, %v839
        %v964 = vpack.c.b16 %v844, %v840
        %v965 = vpack.c.b16 %v845, %v841
        %v966 = vpack.c.b16 %v846, %v842
        %v967 = vpack.c.b16 %v851, %v847
        %v968 = vpack.c.b16 %v852, %v848
        %v969 = vpack.c.b16 %v853, %v849
        %v970 = vpack.c.b16 %v854, %v850
        %v971 = vpack.c.b16 %v859, %v855
        %v972 = vpack.c.b16 %v860, %v856
        %v973 = vpack.c.b16 %v861, %v857
        %v974 = vpack.c.b16 %v862, %v858
        %v975 = vpack.c.b16 %v867, %v863
        %v976 = vpack.c.b16 %v868, %v864
        %v977 = vpack.c.b16 %v869, %v865
        %v978 = vpack.c.b16 %v870, %v866
        %v979 = vpack.c.b16 %v875, %v871
        %v980 = vpack.c.b16 %v876, %v872
        %v981 = vpack.c.b16 %v877, %v873
        %v982 = vpack.c.b16 %v878, %v874
        %v983 = vpack.c.b16 %v883, %v879
        %v984 = vpack.c.b16 %v884, %v880
        %v985 = vpack.c.b16 %v885, %v881
        %v986 = vpack.c.b16 %v886, %v882
        %v987 = vpack.c.b16 %v891, %v887
        %v988 = vpack.c.b16 %v892, %v888
        %v989 = vpack.c.b16 %v893, %v889
        %v990 = vpack.c.b16 %v894, %v890
        %v991 = vpack.c.b16 %v899, %v895
        %v992 = vpack.c.b16 %v900, %v896
        %v993 = vpack.c.b16 %v901, %v897
        %v994 = vpack.c.b16 %v902, %v898
        %v995 = vpack.c.b16 %v907, %v903
        %v996 = vpack.c.b16 %v908, %v904
        %v997 = vpack.c.b16 %v909, %v905
        %v998 = vpack.c.b16 %v910, %v906
        %v999 = vpack.c.b16 %v915, %v911
        %v1000 = vpack.c.b16 %v916, %v912
        %v1001 = vpack.c.b16 %v917, %v913
        %v1002 = vpack.c.b16 %v918, %v914
        %v1003 = vpack.c.b16 %v923, %v919
        %v1004 = vpack.c.b16 %v924, %v920
        %v1005 = vpack.c.b16 %v925, %v921
        %v1006 = vpack.c.b16 %v926, %v922
        %v1007 = vpack.c.b16 %v931, %v927
        %v1008 = vpack.c.b16 %v932, %v928
        %v1009 = vpack.c.b16 %v933, %v929
        %v1010 = vpack.c.b16 %v934, %v930
        %v1011 = vpack.c.b16 %v939, %v935
        %v1012 = vpack.c.b16 %v940, %v936
        %v1013 = vpack.c.b16 %v941, %v937
        %v1014 = vpack.c.b16 %v942, %v938
        %v1015 = vpack.c.b16 %v947, %v943
        %v1016 = vpack.c.b16 %v948, %v944
        %v1017 = vpack.c.b16 %v949, %v945
        %v1018 = vpack.c.b16 %v950, %v946
        %v1019 = vpack.c.b16 %v955, %v951
        %v1020 = vpack.c.b16 %v956, %v952
        %v1021 = vpack.c.b16 %v957, %v953
        %v1022 = vpack.c.b16 %v958, %v954
        %1087 = vmatprep.subr.bf16.mxu0 %v960
        %1088 = vmatpush1.bf16.msra.mxu0 %v959
        %1089 = vmatprep.subr.bf16.mxu0 %v964
        %1090 = vmatpush1.bf16.msra.mxu0 %v963
        %1091 = vmatprep.subr.bf16.mxu0 %v968
        %1092 = vmatpush1.bf16.msra.mxu0 %v967
        %1093 = vmatprep.subr.bf16.mxu0 %v972
        %1094 = vmatpush1.bf16.msra.mxu0 %v971
        %1095 = vmatprep.subr.bf16.mxu0 %v976
        %1096 = vmatpush1.bf16.msra.mxu0 %v975
        %1097 = vmatprep.subr.bf16.mxu0 %v980
        %1098 = vmatpush1.bf16.msra.mxu0 %v979
        %1099 = vmatprep.subr.bf16.mxu0 %v984
        %1100 = vmatpush1.bf16.msra.mxu0 %v983
        %1101 = vmatprep.subr.bf16.mxu0 %v988
        %1102 = vmatpush1.bf16.msra.mxu0 %v987
        %1103 = vmatprep.subr.bf16.mxu0 %v992
        %1104 = vmatpush1.bf16.msra.mxu0 %v991
        %1105 = vmatprep.subr.bf16.mxu0 %v996
        %1106 = vmatpush1.bf16.msra.mxu0 %v995
        %1107 = vmatprep.subr.bf16.mxu0 %v1000
        %1108 = vmatpush1.bf16.msra.mxu0 %v999
        %1109 = vmatprep.subr.bf16.mxu0 %v1004
        %1110 = vmatpush1.bf16.msra.mxu0 %v1003
        %1111 = vmatprep.subr.bf16.mxu0 %v1008
        %1112 = vmatpush1.bf16.msra.mxu0 %v1007
        %1113 = vmatprep.subr.bf16.mxu0 %v1012
        %1114 = vmatpush1.bf16.msra.mxu0 %v1011
        %1115 = vmatprep.subr.bf16.mxu0 %v1016
        %1116 = vmatpush1.bf16.msra.mxu0 %v1015
        %1117 = vmatprep.subr.bf16.mxu0 %v1020
        %1118 = vmatpush1.bf16.msra.mxu0 %v1019
        %1119 = vmatprep.mubr.bf16.mxu0 %v704
        %1120 = vmatmul.mubr.bf16.gmra.mrb[0].mxu0 %v703
        %v1121 = vpop.f32.mrb[0].mxu0
        %v1122 = vadd.f32 %v590, %v1121
        %v1123 = vpop.f32.mrb[0].mxu0
        %v1124 = vadd.f32 %v594, %v1123
        %v1125 = vpop.f32.mrb[0].mxu0
        %v1126 = vadd.f32 %v590, %v1125
        %v1127 = vpop.f32.mrb[0].mxu0
        %v1128 = vadd.f32 %v594, %v1127
        %1129 = vmatprep.mubr.bf16.mxu0 %v706
        %1130 = vmatmul.mubr.bf16.gmra.mrb[0].mxu0 %v705
        %v1131 = vpop.f32.mrb[0].mxu0
        %v1132 = vadd.f32 %v590, %v1131
        %v1133 = vpop.f32.mrb[0].mxu0
        %v1134 = vadd.f32 %v594, %v1133
        %v1135 = vpop.f32.mrb[0].mxu0
        %v1136 = vadd.f32 %v590, %v1135
        %v1137 = vpop.f32.mrb[0].mxu0
        %v1138 = vadd.f32 %v594, %v1137
        %1139 = vmatprep.mubr.bf16.mxu0 %v708
        %1140 = vmatmul.mubr.bf16.gmra.mrb[0].mxu0 %v707
        %v1141 = vpop.f32.mrb[0].mxu0
        %v1142 = vadd.f32 %v590, %v1141
        %v1143 = vpop.f32.mrb[0].mxu0
        %v1144 = vadd.f32 %v594, %v1143
        %v1145 = vpop.f32.mrb[0].mxu0
        %v1146 = vadd.f32 %v590, %v1145
        %v1147 = vpop.f32.mrb[0].mxu0
        %v1148 = vadd.f32 %v594, %v1147
        %1149 = vmatprep.mubr.bf16.mxu0 %v710
        %1150 = vmatmul.mubr.bf16.gmra.mrb[0].mxu0 %v709
        %v1151 = vpop.f32.mrb[0].mxu0
        %v1152 = vadd.f32 %v590, %v1151
        %v1153 = vpop.f32.mrb[0].mxu0
        %v1154 = vadd.f32 %v594, %v1153
        %v1155 = vpop.f32.mrb[0].mxu0
        %v1156 = vadd.f32 %v590, %v1155
        %v1157 = vpop.f32.mrb[0].mxu0
        %v1158 = vadd.f32 %v594, %v1157
        %1159 = vmatprep.mubr.bf16.mxu0 %v712
        %1160 = vmatmul.mubr.bf16.gmra.mrb[0].mxu0 %v711
        %v1161 = vpop.f32.mrb[0].mxu0
        %v1162 = vadd.f32 %v590, %v1161
        %v1163 = vpop.f32.mrb[0].mxu0
        %v1164 = vadd.f32 %v594, %v1163
        %v1165 = vpop.f32.mrb[0].mxu0
        %v1166 = vadd.f32 %v590, %v1165
        %v1167 = vpop.f32.mrb[0].mxu0
        %v1168 = vadd.f32 %v594, %v1167
        %1169 = vmatprep.mubr.bf16.mxu0 %v714
        %1170 = vmatmul.mubr.bf16.gmra.mrb[0].mxu0 %v713
        %v1171 = vpop.f32.mrb[0].mxu0
        %v1172 = vadd.f32 %v590, %v1171
        %v1173 = vpop.f32.mrb[0].mxu0
        %v1174 = vadd.f32 %v594, %v1173
        %v1175 = vpop.f32.mrb[0].mxu0
        %v1176 = vadd.f32 %v590, %v1175
        %v1177 = vpop.f32.mrb[0].mxu0
        %v1178 = vadd.f32 %v594, %v1177
        %1179 = vmatprep.mubr.bf16.mxu0 %v716
        %1180 = vmatmul.mubr.bf16.gmra.mrb[0].mxu0 %v715
        %v1181 = vpop.f32.mrb[0].mxu0
        %v1182 = vadd.f32 %v590, %v1181
        %v1183 = vpop.f32.mrb[0].mxu0
        %v1184 = vadd.f32 %v594, %v1183
        %v1185 = vpop.f32.mrb[0].mxu0
        %v1186 = vadd.f32 %v590, %v1185
        %v1187 = vpop.f32.mrb[0].mxu0
        %v1188 = vadd.f32 %v594, %v1187
        %1189 = vmatprep.mubr.bf16.mxu0 %v718
        %1190 = vmatmul.mubr.bf16.gmra.mrb[0].mxu0 %v717
        %v1191 = vpop.f32.mrb[0].mxu0
        %v1192 = vadd.f32 %v590, %v1191
        %v1193 = vpop.f32.mrb[0].mxu0
        %v1194 = vadd.f32 %v594, %v1193
        %v1195 = vpop.f32.mrb[0].mxu0
        %v1196 = vadd.f32 %v590, %v1195
        %v1197 = vpop.f32.mrb[0].mxu0
        %v1198 = vadd.f32 %v594, %v1197
        %1199 = vmatprep.mubr.bf16.mxu0 %v720
        %1200 = vmatmul.mubr.bf16.gmra.mrb[0].mxu0 %v719
        %v1201 = vpop.f32.mrb[0].mxu0
        %v1202 = vadd.f32 %v590, %v1201
        %v1203 = vpop.f32.mrb[0].mxu0
        %v1204 = vadd.f32 %v594, %v1203
        %v1205 = vpop.f32.mrb[0].mxu0
        %v1206 = vadd.f32 %v590, %v1205
        %v1207 = vpop.f32.mrb[0].mxu0
        %v1208 = vadd.f32 %v594, %v1207
        %1209 = vmatprep.mubr.bf16.mxu0 %v722
        %1210 = vmatmul.mubr.bf16.gmra.mrb[0].mxu0 %v721
        %v1211 = vpop.f32.mrb[0].mxu0
        %v1212 = vadd.f32 %v590, %v1211
        %v1213 = vpop.f32.mrb[0].mxu0
        %v1214 = vadd.f32 %v594, %v1213
        %v1215 = vpop.f32.mrb[0].mxu0
        %v1216 = vadd.f32 %v590, %v1215
        %v1217 = vpop.f32.mrb[0].mxu0
        %v1218 = vadd.f32 %v594, %v1217
        %1219 = vmatprep.mubr.bf16.mxu0 %v724
        %1220 = vmatmul.mubr.bf16.gmra.mrb[0].mxu0 %v723
        %v1221 = vpop.f32.mrb[0].mxu0
        %v1222 = vadd.f32 %v590, %v1221
        %v1223 = vpop.f32.mrb[0].mxu0
        %v1224 = vadd.f32 %v594, %v1223
        %v1225 = vpop.f32.mrb[0].mxu0
        %v1226 = vadd.f32 %v590, %v1225
        %v1227 = vpop.f32.mrb[0].mxu0
        %v1228 = vadd.f32 %v594, %v1227
        %1229 = vmatprep.mubr.bf16.mxu0 %v726
        %1230 = vmatmul.mubr.bf16.gmra.mrb[0].mxu0 %v725
        %v1231 = vpop.f32.mrb[0].mxu0
        %v1232 = vadd.f32 %v590, %v1231
        %v1233 = vpop.f32.mrb[0].mxu0
        %v1234 = vadd.f32 %v594, %v1233
        %v1235 = vpop.f32.mrb[0].mxu0
        %v1236 = vadd.f32 %v590, %v1235
        %v1237 = vpop.f32.mrb[0].mxu0
        %v1238 = vadd.f32 %v594, %v1237
        %1239 = vmatprep.mubr.bf16.mxu0 %v728
        %1240 = vmatmul.mubr.bf16.gmra.mrb[0].mxu0 %v727
        %v1241 = vpop.f32.mrb[0].mxu0
        %v1242 = vadd.f32 %v590, %v1241
        %v1243 = vpop.f32.mrb[0].mxu0
        %v1244 = vadd.f32 %v594, %v1243
        %v1245 = vpop.f32.mrb[0].mxu0
        %v1246 = vadd.f32 %v590, %v1245
        %v1247 = vpop.f32.mrb[0].mxu0
        %v1248 = vadd.f32 %v594, %v1247
        %1249 = vmatprep.mubr.bf16.mxu0 %v730
        %1250 = vmatmul.mubr.bf16.gmra.mrb[0].mxu0 %v729
        %v1251 = vpop.f32.mrb[0].mxu0
        %v1252 = vadd.f32 %v590, %v1251
        %v1253 = vpop.f32.mrb[0].mxu0
        %v1254 = vadd.f32 %v594, %v1253
        %v1255 = vpop.f32.mrb[0].mxu0
        %v1256 = vadd.f32 %v590, %v1255
        %v1257 = vpop.f32.mrb[0].mxu0
        %v1258 = vadd.f32 %v594, %v1257
        %1259 = vmatprep.mubr.bf16.mxu0 %v732
        %1260 = vmatmul.mubr.bf16.gmra.mrb[0].mxu0 %v731
        %v1261 = vpop.f32.mrb[0].mxu0
        %v1262 = vadd.f32 %v590, %v1261
        %v1263 = vpop.f32.mrb[0].mxu0
        %v1264 = vadd.f32 %v594, %v1263
        %v1265 = vpop.f32.mrb[0].mxu0
        %v1266 = vadd.f32 %v590, %v1265
        %v1267 = vpop.f32.mrb[0].mxu0
        %v1268 = vadd.f32 %v594, %v1267
        %1269 = vmatprep.mubr.bf16.mxu0 %v734
        %1270 = vmatmul.mubr.bf16.gmra.mrb[0].mxu0 %v733
        %v1271 = vpop.f32.mrb[0].mxu0
        %v1272 = vadd.f32 %v590, %v1271
        %v1273 = vpop.f32.mrb[0].mxu0
        %v1274 = vadd.f32 %v594, %v1273
        %v1275 = vpop.f32.mrb[0].mxu0
        %v1276 = vadd.f32 %v590, %v1275
        %v1277 = vpop.f32.mrb[0].mxu0
        %v1278 = vadd.f32 %v594, %v1277
        %1279 = vdwg.mxu0
        %1280 = vmatprep.subr.bf16.mxu0 %v962
        %1281 = vmatpush1.bf16.msra.mxu0 %v961
        %1282 = vmatprep.subr.bf16.mxu0 %v966
        %1283 = vmatpush1.bf16.msra.mxu0 %v965
        %1284 = vmatprep.subr.bf16.mxu0 %v970
        %1285 = vmatpush1.bf16.msra.mxu0 %v969
        %1286 = vmatprep.subr.bf16.mxu0 %v974
        %1287 = vmatpush1.bf16.msra.mxu0 %v973
        %1288 = vmatprep.subr.bf16.mxu0 %v978
        %1289 = vmatpush1.bf16.msra.mxu0 %v977
        %1290 = vmatprep.subr.bf16.mxu0 %v982
        %1291 = vmatpush1.bf16.msra.mxu0 %v981
        %1292 = vmatprep.subr.bf16.mxu0 %v986
        %1293 = vmatpush1.bf16.msra.mxu0 %v985
        %1294 = vmatprep.subr.bf16.mxu0 %v990
        %1295 = vmatpush1.bf16.msra.mxu0 %v989
        %1296 = vmatprep.subr.bf16.mxu0 %v994
        %1297 = vmatpush1.bf16.msra.mxu0 %v993
        %1298 = vmatprep.subr.bf16.mxu0 %v998
        %1299 = vmatpush1.bf16.msra.mxu0 %v997
        %1300 = vmatprep.subr.bf16.mxu0 %v1002
        %1301 = vmatpush1.bf16.msra.mxu0 %v1001
        %1302 = vmatprep.subr.bf16.mxu0 %v1006
        %1303 = vmatpush1.bf16.msra.mxu0 %v1005
        %1304 = vmatprep.subr.bf16.mxu0 %v1010
        %1305 = vmatpush1.bf16.msra.mxu0 %v1009
        %1306 = vmatprep.subr.bf16.mxu0 %v1014
        %1307 = vmatpush1.bf16.msra.mxu0 %v1013
        %1308 = vmatprep.subr.bf16.mxu0 %v1018
        %1309 = vmatpush1.bf16.msra.mxu0 %v1017
        %1310 = vmatprep.subr.bf16.mxu0 %v1022
        %1311 = vmatpush1.bf16.msra.mxu0 %v1021
        %1312 = vmatprep.mubr.bf16.mxu0 %v704
        %1313 = vmatmul.mubr.bf16.gmra.mrb[0].mxu0 %v703
        %v1314 = vpop.f32.mrb[0].mxu0
        %v1315 = vadd.f32 %v598, %v1314
        %v1316 = vpop.f32.mrb[0].mxu0
        %v1317 = vadd.f32 %v602, %v1316
        %v1318 = vpop.f32.mrb[0].mxu0
        %v1319 = vadd.f32 %v598, %v1318
        %v1320 = vpop.f32.mrb[0].mxu0
        %v1321 = vadd.f32 %v602, %v1320
        %1322 = vmatprep.mubr.bf16.mxu0 %v706
        %1323 = vmatmul.mubr.bf16.gmra.mrb[0].mxu0 %v705
        %v1324 = vpop.f32.mrb[0].mxu0
        %v1325 = vadd.f32 %v598, %v1324
        %v1326 = vpop.f32.mrb[0].mxu0
        %v1327 = vadd.f32 %v602, %v1326
        %v1328 = vpop.f32.mrb[0].mxu0
        %v1329 = vadd.f32 %v598, %v1328
        %v1330 = vpop.f32.mrb[0].mxu0
        %v1331 = vadd.f32 %v602, %v1330
        %1332 = vmatprep.mubr.bf16.mxu0 %v708
        %1333 = vmatmul.mubr.bf16.gmra.mrb[0].mxu0 %v707
        %v1334 = vpop.f32.mrb[0].mxu0
        %v1335 = vadd.f32 %v598, %v1334
        %v1336 = vpop.f32.mrb[0].mxu0
        %v1337 = vadd.f32 %v602, %v1336
        %v1338 = vpop.f32.mrb[0].mxu0
        %v1339 = vadd.f32 %v598, %v1338
        %v1340 = vpop.f32.mrb[0].mxu0
        %v1341 = vadd.f32 %v602, %v1340
        %1342 = vmatprep.mubr.bf16.mxu0 %v710
        %1343 = vmatmul.mubr.bf16.gmra.mrb[0].mxu0 %v709
        %v1344 = vpop.f32.mrb[0].mxu0
        %v1345 = vadd.f32 %v598, %v1344
        %v1346 = vpop.f32.mrb[0].mxu0
        %v1347 = vadd.f32 %v602, %v1346
        %v1348 = vpop.f32.mrb[0].mxu0
        %v1349 = vadd.f32 %v598, %v1348
        %v1350 = vpop.f32.mrb[0].mxu0
        %v1351 = vadd.f32 %v602, %v1350
        %1352 = vmatprep.mubr.bf16.mxu0 %v712
        %1353 = vmatmul.mubr.bf16.gmra.mrb[0].mxu0 %v711
        %v1354 = vpop.f32.mrb[0].mxu0
        %v1355 = vadd.f32 %v598, %v1354
        %v1356 = vpop.f32.mrb[0].mxu0
        %v1357 = vadd.f32 %v602, %v1356
        %v1358 = vpop.f32.mrb[0].mxu0
        %v1359 = vadd.f32 %v598, %v1358
        %v1360 = vpop.f32.mrb[0].mxu0
        %v1361 = vadd.f32 %v602, %v1360
        %1362 = vmatprep.mubr.bf16.mxu0 %v714
        %1363 = vmatmul.mubr.bf16.gmra.mrb[0].mxu0 %v713
        %v1364 = vpop.f32.mrb[0].mxu0
        %v1365 = vadd.f32 %v598, %v1364
        %v1366 = vpop.f32.mrb[0].mxu0
        %v1367 = vadd.f32 %v602, %v1366
        %v1368 = vpop.f32.mrb[0].mxu0
        %v1369 = vadd.f32 %v598, %v1368
        %v1370 = vpop.f32.mrb[0].mxu0
        %v1371 = vadd.f32 %v602, %v1370
        %1372 = vmatprep.mubr.bf16.mxu0 %v716
        %1373 = vmatmul.mubr.bf16.gmra.mrb[0].mxu0 %v715
        %v1374 = vpop.f32.mrb[0].mxu0
        %v1375 = vadd.f32 %v598, %v1374
        %v1376 = vpop.f32.mrb[0].mxu0
        %v1377 = vadd.f32 %v602, %v1376
        %v1378 = vpop.f32.mrb[0].mxu0
        %v1379 = vadd.f32 %v598, %v1378
        %v1380 = vpop.f32.mrb[0].mxu0
        %v1381 = vadd.f32 %v602, %v1380
        %1382 = vmatprep.mubr.bf16.mxu0 %v718
        %1383 = vmatmul.mubr.bf16.gmra.mrb[0].mxu0 %v717
        %v1384 = vpop.f32.mrb[0].mxu0
        %v1385 = vadd.f32 %v598, %v1384
        %v1386 = vpop.f32.mrb[0].mxu0
        %v1387 = vadd.f32 %v602, %v1386
        %v1388 = vpop.f32.mrb[0].mxu0
        %v1389 = vadd.f32 %v598, %v1388
        %v1390 = vpop.f32.mrb[0].mxu0
        %v1391 = vadd.f32 %v602, %v1390
        %1392 = vmatprep.mubr.bf16.mxu0 %v720
        %1393 = vmatmul.mubr.bf16.gmra.mrb[0].mxu0 %v719
        %v1394 = vpop.f32.mrb[0].mxu0
        %v1395 = vadd.f32 %v598, %v1394
        %v1396 = vpop.f32.mrb[0].mxu0
        %v1397 = vadd.f32 %v602, %v1396
        %v1398 = vpop.f32.mrb[0].mxu0
        %v1399 = vadd.f32 %v598, %v1398
        %v1400 = vpop.f32.mrb[0].mxu0
        %v1401 = vadd.f32 %v602, %v1400
        %1402 = vmatprep.mubr.bf16.mxu0 %v722
        %1403 = vmatmul.mubr.bf16.gmra.mrb[0].mxu0 %v721
        %v1404 = vpop.f32.mrb[0].mxu0
        %v1405 = vadd.f32 %v598, %v1404
        %v1406 = vpop.f32.mrb[0].mxu0
        %v1407 = vadd.f32 %v602, %v1406
        %v1408 = vpop.f32.mrb[0].mxu0
        %v1409 = vadd.f32 %v598, %v1408
        %v1410 = vpop.f32.mrb[0].mxu0
        %v1411 = vadd.f32 %v602, %v1410
        %1412 = vmatprep.mubr.bf16.mxu0 %v724
        %1413 = vmatmul.mubr.bf16.gmra.mrb[0].mxu0 %v723
        %v1414 = vpop.f32.mrb[0].mxu0
        %v1415 = vadd.f32 %v598, %v1414
        %v1416 = vpop.f32.mrb[0].mxu0
        %v1417 = vadd.f32 %v602, %v1416
        %v1418 = vpop.f32.mrb[0].mxu0
        %v1419 = vadd.f32 %v598, %v1418
        %v1420 = vpop.f32.mrb[0].mxu0
        %v1421 = vadd.f32 %v602, %v1420
        %1422 = vmatprep.mubr.bf16.mxu0 %v726
        %1423 = vmatmul.mubr.bf16.gmra.mrb[0].mxu0 %v725
        %v1424 = vpop.f32.mrb[0].mxu0
        %v1425 = vadd.f32 %v598, %v1424
        %v1426 = vpop.f32.mrb[0].mxu0
        %v1427 = vadd.f32 %v602, %v1426
        %v1428 = vpop.f32.mrb[0].mxu0
        %v1429 = vadd.f32 %v598, %v1428
        %v1430 = vpop.f32.mrb[0].mxu0
        %v1431 = vadd.f32 %v602, %v1430
        %1432 = vmatprep.mubr.bf16.mxu0 %v728
        %1433 = vmatmul.mubr.bf16.gmra.mrb[0].mxu0 %v727
        %v1434 = vpop.f32.mrb[0].mxu0
        %v1435 = vadd.f32 %v598, %v1434
        %v1436 = vpop.f32.mrb[0].mxu0
        %v1437 = vadd.f32 %v602, %v1436
        %v1438 = vpop.f32.mrb[0].mxu0
        %v1439 = vadd.f32 %v598, %v1438
        %v1440 = vpop.f32.mrb[0].mxu0
        %v1441 = vadd.f32 %v602, %v1440
        %1442 = vmatprep.mubr.bf16.mxu0 %v730
        %1443 = vmatmul.mubr.bf16.gmra.mrb[0].mxu0 %v729
        %v1444 = vpop.f32.mrb[0].mxu0
        %v1445 = vadd.f32 %v598, %v1444
        %v1446 = vpop.f32.mrb[0].mxu0
        %v1447 = vadd.f32 %v602, %v1446
        %v1448 = vpop.f32.mrb[0].mxu0
        %v1449 = vadd.f32 %v598, %v1448
        %v1450 = vpop.f32.mrb[0].mxu0
        %v1451 = vadd.f32 %v602, %v1450
        %1452 = vmatprep.mubr.bf16.mxu0 %v732
        %1453 = vmatmul.mubr.bf16.gmra.mrb[0].mxu0 %v731
        %v1454 = vpop.f32.mrb[0].mxu0
        %v1455 = vadd.f32 %v598, %v1454
        %v1456 = vpop.f32.mrb[0].mxu0
        %v1457 = vadd.f32 %v602, %v1456
        %v1458 = vpop.f32.mrb[0].mxu0
        %v1459 = vadd.f32 %v598, %v1458
        %v1460 = vpop.f32.mrb[0].mxu0
        %v1461 = vadd.f32 %v602, %v1460
        %1462 = vmatprep.mubr.bf16.mxu0 %v734
        %1463 = vmatmul.mubr.bf16.gmra.mrb[0].mxu0 %v733
        %v1464 = vpop.f32.mrb[0].mxu0
        %v1465 = vadd.f32 %v598, %v1464
        %v1466 = vpop.f32.mrb[0].mxu0
        %v1467 = vadd.f32 %v602, %v1466
        %v1468 = vpop.f32.mrb[0].mxu0
        %v1469 = vadd.f32 %v598, %v1468
        %v1470 = vpop.f32.mrb[0].mxu0
        %v1471 = vadd.f32 %v602, %v1470
        %1472 = vdwg.mxu0
        %v1473 = vmul.f32 %v1122, 0.5
        %v1474 = vmul.f32 %v1124, 0.5
        %v1475 = vmul.f32 %v1315, 0.5
        %v1476 = vmul.f32 %v1317, 0.5
        %v1477 = vmul.f32 %v1126, 0.5
        %v1478 = vmul.f32 %v1128, 0.5
        %v1479 = vmul.f32 %v1319, 0.5
        %v1480 = vmul.f32 %v1321, 0.5
        %v1481 = vmul.f32 %v1132, 0.5
        %v1482 = vmul.f32 %v1134, 0.5
        %v1483 = vmul.f32 %v1325, 0.5
        %v1484 = vmul.f32 %v1327, 0.5
        %v1485 = vmul.f32 %v1136, 0.5
        %v1486 = vmul.f32 %v1138, 0.5
        %v1487 = vmul.f32 %v1329, 0.5
        %v1488 = vmul.f32 %v1331, 0.5
        %v1489 = vmul.f32 %v1142, 0.5
        %v1490 = vmul.f32 %v1144, 0.5
        %v1491 = vmul.f32 %v1335, 0.5
        %v1492 = vmul.f32 %v1337, 0.5
        %v1493 = vmul.f32 %v1146, 0.5
        %v1494 = vmul.f32 %v1148, 0.5
        %v1495 = vmul.f32 %v1339, 0.5
        %v1496 = vmul.f32 %v1341, 0.5
        %v1497 = vmul.f32 %v1152, 0.5
        %v1498 = vmul.f32 %v1154, 0.5
        %v1499 = vmul.f32 %v1345, 0.5
        %v1500 = vmul.f32 %v1347, 0.5
        %v1501 = vmul.f32 %v1156, 0.5
        %v1502 = vmul.f32 %v1158, 0.5
        %v1503 = vmul.f32 %v1349, 0.5
        %v1504 = vmul.f32 %v1351, 0.5
        %v1505 = vmul.f32 %v1162, 0.5
        %v1506 = vmul.f32 %v1164, 0.5
        %v1507 = vmul.f32 %v1355, 0.5
        %v1508 = vmul.f32 %v1357, 0.5
        %v1509 = vmul.f32 %v1166, 0.5
        %v1510 = vmul.f32 %v1168, 0.5
        %v1511 = vmul.f32 %v1359, 0.5
        %v1512 = vmul.f32 %v1361, 0.5
        %v1513 = vmul.f32 %v1172, 0.5
        %v1514 = vmul.f32 %v1174, 0.5
        %v1515 = vmul.f32 %v1365, 0.5
        %v1516 = vmul.f32 %v1367, 0.5
        %v1517 = vmul.f32 %v1176, 0.5
        %v1518 = vmul.f32 %v1178, 0.5
        %v1519 = vmul.f32 %v1369, 0.5
        %v1520 = vmul.f32 %v1371, 0.5
        %v1521 = vmul.f32 %v1182, 0.5
        %v1522 = vmul.f32 %v1184, 0.5
        %v1523 = vmul.f32 %v1375, 0.5
        %v1524 = vmul.f32 %v1377, 0.5
        %v1525 = vmul.f32 %v1186, 0.5
        %v1526 = vmul.f32 %v1188, 0.5
        %v1527 = vmul.f32 %v1379, 0.5
        %v1528 = vmul.f32 %v1381, 0.5
        %v1529 = vmul.f32 %v1192, 0.5
        %v1530 = vmul.f32 %v1194, 0.5
        %v1531 = vmul.f32 %v1385, 0.5
        %v1532 = vmul.f32 %v1387, 0.5
        %v1533 = vmul.f32 %v1196, 0.5
        %v1534 = vmul.f32 %v1198, 0.5
        %v1535 = vmul.f32 %v1389, 0.5
        %v1536 = vmul.f32 %v1391, 0.5
        %v1537 = vmul.f32 %v1202, 0.5
        %v1538 = vmul.f32 %v1204, 0.5
        %v1539 = vmul.f32 %v1395, 0.5
        %v1540 = vmul.f32 %v1397, 0.5
        %v1541 = vmul.f32 %v1206, 0.5
        %v1542 = vmul.f32 %v1208, 0.5
        %v1543 = vmul.f32 %v1399, 0.5
        %v1544 = vmul.f32 %v1401, 0.5
        %v1545 = vmul.f32 %v1212, 0.5
        %v1546 = vmul.f32 %v1214, 0.5
        %v1547 = vmul.f32 %v1405, 0.5
        %v1548 = vmul.f32 %v1407, 0.5
        %v1549 = vmul.f32 %v1216, 0.5
        %v1550 = vmul.f32 %v1218, 0.5
        %v1551 = vmul.f32 %v1409, 0.5
        %v1552 = vmul.f32 %v1411, 0.5
        %v1553 = vmul.f32 %v1222, 0.5
        %v1554 = vmul.f32 %v1224, 0.5
        %v1555 = vmul.f32 %v1415, 0.5
        %v1556 = vmul.f32 %v1417, 0.5
        %v1557 = vmul.f32 %v1226, 0.5
        %v1558 = vmul.f32 %v1228, 0.5
        %v1559 = vmul.f32 %v1419, 0.5
        %v1560 = vmul.f32 %v1421, 0.5
        %v1561 = vmul.f32 %v1232, 0.5
        %v1562 = vmul.f32 %v1234, 0.5
        %v1563 = vmul.f32 %v1425, 0.5
        %v1564 = vmul.f32 %v1427, 0.5
        %v1565 = vmul.f32 %v1236, 0.5
        %v1566 = vmul.f32 %v1238, 0.5
        %v1567 = vmul.f32 %v1429, 0.5
        %v1568 = vmul.f32 %v1431, 0.5
        %v1569 = vmul.f32 %v1242, 0.5
        %v1570 = vmul.f32 %v1244, 0.5
        %v1571 = vmul.f32 %v1435, 0.5
        %v1572 = vmul.f32 %v1437, 0.5
        %v1573 = vmul.f32 %v1246, 0.5
        %v1574 = vmul.f32 %v1248, 0.5
        %v1575 = vmul.f32 %v1439, 0.5
        %v1576 = vmul.f32 %v1441, 0.5
        %v1577 = vmul.f32 %v1252, 0.5
        %v1578 = vmul.f32 %v1254, 0.5
        %v1579 = vmul.f32 %v1445, 0.5
        %v1580 = vmul.f32 %v1447, 0.5
        %v1581 = vmul.f32 %v1256, 0.5
        %v1582 = vmul.f32 %v1258, 0.5
        %v1583 = vmul.f32 %v1449, 0.5
        %v1584 = vmul.f32 %v1451, 0.5
        %v1585 = vmul.f32 %v1262, 0.5
        %v1586 = vmul.f32 %v1264, 0.5
        %v1587 = vmul.f32 %v1455, 0.5
        %v1588 = vmul.f32 %v1457, 0.5
        %v1589 = vmul.f32 %v1266, 0.5
        %v1590 = vmul.f32 %v1268, 0.5
        %v1591 = vmul.f32 %v1459, 0.5
        %v1592 = vmul.f32 %v1461, 0.5
        %v1593 = vmul.f32 %v1272, 0.5
        %v1594 = vmul.f32 %v1274, 0.5
        %v1595 = vmul.f32 %v1465, 0.5
        %v1596 = vmul.f32 %v1467, 0.5
        %v1597 = vmul.f32 %v1276, 0.5
        %v1598 = vmul.f32 %v1278, 0.5
        %v1599 = vmul.f32 %v1469, 0.5
        %v1600 = vmul.f32 %v1471, 0.5
        %v1601 = vmul.f32 %v1122, 0.70710677
        %v1602 = vmul.f32 %v1124, 0.70710677
        %v1603 = vmul.f32 %v1315, 0.70710677
        %v1604 = vmul.f32 %v1317, 0.70710677
        %v1605 = vmul.f32 %v1126, 0.70710677
        %v1606 = vmul.f32 %v1128, 0.70710677
        %v1607 = vmul.f32 %v1319, 0.70710677
        %v1608 = vmul.f32 %v1321, 0.70710677
        %v1609 = vmul.f32 %v1132, 0.70710677
        %v1610 = vmul.f32 %v1134, 0.70710677
        %v1611 = vmul.f32 %v1325, 0.70710677
        %v1612 = vmul.f32 %v1327, 0.70710677
        %v1613 = vmul.f32 %v1136, 0.70710677
        %v1614 = vmul.f32 %v1138, 0.70710677
        %v1615 = vmul.f32 %v1329, 0.70710677
        %v1616 = vmul.f32 %v1331, 0.70710677
        %v1617 = vmul.f32 %v1142, 0.70710677
        %v1618 = vmul.f32 %v1144, 0.70710677
        %v1619 = vmul.f32 %v1335, 0.70710677
        %v1620 = vmul.f32 %v1337, 0.70710677
        %v1621 = vmul.f32 %v1146, 0.70710677
        %v1622 = vmul.f32 %v1148, 0.70710677
        %v1623 = vmul.f32 %v1339, 0.70710677
        %v1624 = vmul.f32 %v1341, 0.70710677
        %v1625 = vmul.f32 %v1152, 0.70710677
        %v1626 = vmul.f32 %v1154, 0.70710677
        %v1627 = vmul.f32 %v1345, 0.70710677
        %v1628 = vmul.f32 %v1347, 0.70710677
        %v1629 = vmul.f32 %v1156, 0.70710677
        %v1630 = vmul.f32 %v1158, 0.70710677
        %v1631 = vmul.f32 %v1349, 0.70710677
        %v1632 = vmul.f32 %v1351, 0.70710677
        %v1633 = vmul.f32 %v1162, 0.70710677
        %v1634 = vmul.f32 %v1164, 0.70710677
        %v1635 = vmul.f32 %v1355, 0.70710677
        %v1636 = vmul.f32 %v1357, 0.70710677
        %v1637 = vmul.f32 %v1166, 0.70710677
        %v1638 = vmul.f32 %v1168, 0.70710677
        %v1639 = vmul.f32 %v1359, 0.70710677
        %v1640 = vmul.f32 %v1361, 0.70710677
        %v1641 = vmul.f32 %v1172, 0.70710677
        %v1642 = vmul.f32 %v1174, 0.70710677
        %v1643 = vmul.f32 %v1365, 0.70710677
        %v1644 = vmul.f32 %v1367, 0.70710677
        %v1645 = vmul.f32 %v1176, 0.70710677
        %v1646 = vmul.f32 %v1178, 0.70710677
        %v1647 = vmul.f32 %v1369, 0.70710677
        %v1648 = vmul.f32 %v1371, 0.70710677
        %v1649 = vmul.f32 %v1182, 0.70710677
        %v1650 = vmul.f32 %v1184, 0.70710677
        %v1651 = vmul.f32 %v1375, 0.70710677
        %v1652 = vmul.f32 %v1377, 0.70710677
        %v1653 = vmul.f32 %v1186, 0.70710677
        %v1654 = vmul.f32 %v1188, 0.70710677
        %v1655 = vmul.f32 %v1379, 0.70710677
        %v1656 = vmul.f32 %v1381, 0.70710677
        %v1657 = vmul.f32 %v1192, 0.70710677
        %v1658 = vmul.f32 %v1194, 0.70710677
        %v1659 = vmul.f32 %v1385, 0.70710677
        %v1660 = vmul.f32 %v1387, 0.70710677
        %v1661 = vmul.f32 %v1196, 0.70710677
        %v1662 = vmul.f32 %v1198, 0.70710677
        %v1663 = vmul.f32 %v1389, 0.70710677
        %v1664 = vmul.f32 %v1391, 0.70710677
        %v1665 = vmul.f32 %v1202, 0.70710677
        %v1666 = vmul.f32 %v1204, 0.70710677
        %v1667 = vmul.f32 %v1395, 0.70710677
        %v1668 = vmul.f32 %v1397, 0.70710677
        %v1669 = vmul.f32 %v1206, 0.70710677
        %v1670 = vmul.f32 %v1208, 0.70710677
        %v1671 = vmul.f32 %v1399, 0.70710677
        %v1672 = vmul.f32 %v1401, 0.70710677
        %v1673 = vmul.f32 %v1212, 0.70710677
        %v1674 = vmul.f32 %v1214, 0.70710677
        %v1675 = vmul.f32 %v1405, 0.70710677
        %v1676 = vmul.f32 %v1407, 0.70710677
        %v1677 = vmul.f32 %v1216, 0.70710677
        %v1678 = vmul.f32 %v1218, 0.70710677
        %v1679 = vmul.f32 %v1409, 0.70710677
        %v1680 = vmul.f32 %v1411, 0.70710677
        %v1681 = vmul.f32 %v1222, 0.70710677
        %v1682 = vmul.f32 %v1224, 0.70710677
        %v1683 = vmul.f32 %v1415, 0.70710677
        %v1684 = vmul.f32 %v1417, 0.70710677
        %v1685 = vmul.f32 %v1226, 0.70710677
        %v1686 = vmul.f32 %v1228, 0.70710677
        %v1687 = vmul.f32 %v1419, 0.70710677
        %v1688 = vmul.f32 %v1421, 0.70710677
        %v1689 = vmul.f32 %v1232, 0.70710677
        %v1690 = vmul.f32 %v1234, 0.70710677
        %v1691 = vmul.f32 %v1425, 0.70710677
        %v1692 = vmul.f32 %v1427, 0.70710677
        %v1693 = vmul.f32 %v1236, 0.70710677
        %v1694 = vmul.f32 %v1238, 0.70710677
        %v1695 = vmul.f32 %v1429, 0.70710677
        %v1696 = vmul.f32 %v1431, 0.70710677
        %v1697 = vmul.f32 %v1242, 0.70710677
        %v1698 = vmul.f32 %v1244, 0.70710677
        %v1699 = vmul.f32 %v1435, 0.70710677
        %v1700 = vmul.f32 %v1437, 0.70710677
        %v1701 = vmul.f32 %v1246, 0.70710677
        %v1702 = vmul.f32 %v1248, 0.70710677
        %v1703 = vmul.f32 %v1439, 0.70710677
        %v1704 = vmul.f32 %v1441, 0.70710677
        %v1705 = vmul.f32 %v1252, 0.70710677
        %v1706 = vmul.f32 %v1254, 0.70710677
        %v1707 = vmul.f32 %v1445, 0.70710677
        %v1708 = vmul.f32 %v1447, 0.70710677
        %v1709 = vmul.f32 %v1256, 0.70710677
        %v1710 = vmul.f32 %v1258, 0.70710677
        %v1711 = vmul.f32 %v1449, 0.70710677
        %v1712 = vmul.f32 %v1451, 0.70710677
        %v1713 = vmul.f32 %v1262, 0.70710677
        %v1714 = vmul.f32 %v1264, 0.70710677
        %v1715 = vmul.f32 %v1455, 0.70710677
        %v1716 = vmul.f32 %v1457, 0.70710677
        %v1717 = vmul.f32 %v1266, 0.70710677
        %v1718 = vmul.f32 %v1268, 0.70710677
        %v1719 = vmul.f32 %v1459, 0.70710677
        %v1720 = vmul.f32 %v1461, 0.70710677
        %v1721 = vmul.f32 %v1272, 0.70710677
        %v1722 = vmul.f32 %v1274, 0.70710677
        %v1723 = vmul.f32 %v1465, 0.70710677
        %v1724 = vmul.f32 %v1467, 0.70710677
        %v1725 = vmul.f32 %v1276, 0.70710677
        %v1726 = vmul.f32 %v1278, 0.70710677
        %v1727 = vmul.f32 %v1469, 0.70710677
        %v1728 = vmul.f32 %v1471, 0.70710677
        %v1729 = verf.f32.pop %v1601
        %v1730 = verf.f32.pop %v1602
        %v1731 = verf.f32.pop %v1603
        %v1732 = verf.f32.pop %v1604
        %v1733 = verf.f32.pop %v1605
        %v1734 = verf.f32.pop %v1606
        %v1735 = verf.f32.pop %v1607
        %v1736 = verf.f32.pop %v1608
        %v1737 = verf.f32.pop %v1609
        %v1738 = verf.f32.pop %v1610
        %v1739 = verf.f32.pop %v1611
        %v1740 = verf.f32.pop %v1612
        %v1741 = verf.f32.pop %v1613
        %v1742 = verf.f32.pop %v1614
        %v1743 = verf.f32.pop %v1615
        %v1744 = verf.f32.pop %v1616
        %v1745 = verf.f32.pop %v1617
        %v1746 = verf.f32.pop %v1618
        %v1747 = verf.f32.pop %v1619
        %v1748 = verf.f32.pop %v1620
        %v1749 = verf.f32.pop %v1621
        %v1750 = verf.f32.pop %v1622
        %v1751 = verf.f32.pop %v1623
        %v1752 = verf.f32.pop %v1624
        %v1753 = verf.f32.pop %v1625
        %v1754 = verf.f32.pop %v1626
        %v1755 = verf.f32.pop %v1627
        %v1756 = verf.f32.pop %v1628
        %v1757 = verf.f32.pop %v1629
        %v1758 = verf.f32.pop %v1630
        %v1759 = verf.f32.pop %v1631
        %v1760 = verf.f32.pop %v1632
        %v1761 = verf.f32.pop %v1633
        %v1762 = verf.f32.pop %v1634
        %v1763 = verf.f32.pop %v1635
        %v1764 = verf.f32.pop %v1636
        %v1765 = verf.f32.pop %v1637
        %v1766 = verf.f32.pop %v1638
        %v1767 = verf.f32.pop %v1639
        %v1768 = verf.f32.pop %v1640
        %v1769 = verf.f32.pop %v1641
        %v1770 = verf.f32.pop %v1642
        %v1771 = verf.f32.pop %v1643
        %v1772 = verf.f32.pop %v1644
        %v1773 = verf.f32.pop %v1645
        %v1774 = verf.f32.pop %v1646
        %v1775 = verf.f32.pop %v1647
        %v1776 = verf.f32.pop %v1648
        %v1777 = verf.f32.pop %v1649
        %v1778 = verf.f32.pop %v1650
        %v1779 = verf.f32.pop %v1651
        %v1780 = verf.f32.pop %v1652
        %v1781 = verf.f32.pop %v1653
        %v1782 = verf.f32.pop %v1654
        %v1783 = verf.f32.pop %v1655
        %v1784 = verf.f32.pop %v1656
        %v1785 = verf.f32.pop %v1657
        %v1786 = verf.f32.pop %v1658
        %v1787 = verf.f32.pop %v1659
        %v1788 = verf.f32.pop %v1660
        %v1789 = verf.f32.pop %v1661
        %v1790 = verf.f32.pop %v1662
        %v1791 = verf.f32.pop %v1663
        %v1792 = verf.f32.pop %v1664
        %v1793 = verf.f32.pop %v1665
        %v1794 = verf.f32.pop %v1666
        %v1795 = verf.f32.pop %v1667
        %v1796 = verf.f32.pop %v1668
        %v1797 = verf.f32.pop %v1669
        %v1798 = verf.f32.pop %v1670
        %v1799 = verf.f32.pop %v1671
        %v1800 = verf.f32.pop %v1672
        %v1801 = verf.f32.pop %v1673
        %v1802 = verf.f32.pop %v1674
        %v1803 = verf.f32.pop %v1675
        %v1804 = verf.f32.pop %v1676
        %v1805 = verf.f32.pop %v1677
        %v1806 = verf.f32.pop %v1678
        %v1807 = verf.f32.pop %v1679
        %v1808 = verf.f32.pop %v1680
        %v1809 = verf.f32.pop %v1681
        %v1810 = verf.f32.pop %v1682
        %v1811 = verf.f32.pop %v1683
        %v1812 = verf.f32.pop %v1684
        %v1813 = verf.f32.pop %v1685
        %v1814 = verf.f32.pop %v1686
        %v1815 = verf.f32.pop %v1687
        %v1816 = verf.f32.pop %v1688
        %v1817 = verf.f32.pop %v1689
        %v1818 = verf.f32.pop %v1690
        %v1819 = verf.f32.pop %v1691
        %v1820 = verf.f32.pop %v1692
        %v1821 = verf.f32.pop %v1693
        %v1822 = verf.f32.pop %v1694
        %v1823 = verf.f32.pop %v1695
        %v1824 = verf.f32.pop %v1696
        %v1825 = verf.f32.pop %v1697
        %v1826 = verf.f32.pop %v1698
        %v1827 = verf.f32.pop %v1699
        %v1828 = verf.f32.pop %v1700
        %v1829 = verf.f32.pop %v1701
        %v1830 = verf.f32.pop %v1702
        %v1831 = verf.f32.pop %v1703
        %v1832 = verf.f32.pop %v1704
        %v1833 = verf.f32.pop %v1705
        %v1834 = verf.f32.pop %v1706
        %v1835 = verf.f32.pop %v1707
        %v1836 = verf.f32.pop %v1708
        %v1837 = verf.f32.pop %v1709
        %v1838 = verf.f32.pop %v1710
        %v1839 = verf.f32.pop %v1711
        %v1840 = verf.f32.pop %v1712
        %v1841 = verf.f32.pop %v1713
        %v1842 = verf.f32.pop %v1714
        %v1843 = verf.f32.pop %v1715
        %v1844 = verf.f32.pop %v1716
        %v1845 = verf.f32.pop %v1717
        %v1846 = verf.f32.pop %v1718
        %v1847 = verf.f32.pop %v1719
        %v1848 = verf.f32.pop %v1720
        %v1849 = verf.f32.pop %v1721
        %v1850 = verf.f32.pop %v1722
        %v1851 = verf.f32.pop %v1723
        %v1852 = verf.f32.pop %v1724
        %v1853 = verf.f32.pop %v1725
        %v1854 = verf.f32.pop %v1726
        %v1855 = verf.f32.pop %v1727
        %v1856 = verf.f32.pop %v1728
        %v1857 = vadd.f32 %v1729, 1.0
        %v1858 = vadd.f32 %v1730, 1.0
        %v1859 = vadd.f32 %v1731, 1.0
        %v1860 = vadd.f32 %v1732, 1.0
        %v1861 = vadd.f32 %v1733, 1.0
        %v1862 = vadd.f32 %v1734, 1.0
        %v1863 = vadd.f32 %v1735, 1.0
        %v1864 = vadd.f32 %v1736, 1.0
        %v1865 = vadd.f32 %v1737, 1.0
        %v1866 = vadd.f32 %v1738, 1.0
        %v1867 = vadd.f32 %v1739, 1.0
        %v1868 = vadd.f32 %v1740, 1.0
        %v1869 = vadd.f32 %v1741, 1.0
        %v1870 = vadd.f32 %v1742, 1.0
        %v1871 = vadd.f32 %v1743, 1.0
        %v1872 = vadd.f32 %v1744, 1.0
        %v1873 = vadd.f32 %v1745, 1.0
        %v1874 = vadd.f32 %v1746, 1.0
        %v1875 = vadd.f32 %v1747, 1.0
        %v1876 = vadd.f32 %v1748, 1.0
        %v1877 = vadd.f32 %v1749, 1.0
        %v1878 = vadd.f32 %v1750, 1.0
        %v1879 = vadd.f32 %v1751, 1.0
        %v1880 = vadd.f32 %v1752, 1.0
        %v1881 = vadd.f32 %v1753, 1.0
        %v1882 = vadd.f32 %v1754, 1.0
        %v1883 = vadd.f32 %v1755, 1.0
        %v1884 = vadd.f32 %v1756, 1.0
        %v1885 = vadd.f32 %v1757, 1.0
        %v1886 = vadd.f32 %v1758, 1.0
        %v1887 = vadd.f32 %v1759, 1.0
        %v1888 = vadd.f32 %v1760, 1.0
        %v1889 = vadd.f32 %v1761, 1.0
        %v1890 = vadd.f32 %v1762, 1.0
        %v1891 = vadd.f32 %v1763, 1.0
        %v1892 = vadd.f32 %v1764, 1.0
        %v1893 = vadd.f32 %v1765, 1.0
        %v1894 = vadd.f32 %v1766, 1.0
        %v1895 = vadd.f32 %v1767, 1.0
        %v1896 = vadd.f32 %v1768, 1.0
        %v1897 = vadd.f32 %v1769, 1.0
        %v1898 = vadd.f32 %v1770, 1.0
        %v1899 = vadd.f32 %v1771, 1.0
        %v1900 = vadd.f32 %v1772, 1.0
        %v1901 = vadd.f32 %v1773, 1.0
        %v1902 = vadd.f32 %v1774, 1.0
        %v1903 = vadd.f32 %v1775, 1.0
        %v1904 = vadd.f32 %v1776, 1.0
        %v1905 = vadd.f32 %v1777, 1.0
        %v1906 = vadd.f32 %v1778, 1.0
        %v1907 = vadd.f32 %v1779, 1.0
        %v1908 = vadd.f32 %v1780, 1.0
        %v1909 = vadd.f32 %v1781, 1.0
        %v1910 = vadd.f32 %v1782, 1.0
        %v1911 = vadd.f32 %v1783, 1.0
        %v1912 = vadd.f32 %v1784, 1.0
        %v1913 = vadd.f32 %v1785, 1.0
        %v1914 = vadd.f32 %v1786, 1.0
        %v1915 = vadd.f32 %v1787, 1.0
        %v1916 = vadd.f32 %v1788, 1.0
        %v1917 = vadd.f32 %v1789, 1.0
        %v1918 = vadd.f32 %v1790, 1.0
        %v1919 = vadd.f32 %v1791, 1.0
        %v1920 = vadd.f32 %v1792, 1.0
        %v1921 = vadd.f32 %v1793, 1.0
        %v1922 = vadd.f32 %v1794, 1.0
        %v1923 = vadd.f32 %v1795, 1.0
        %v1924 = vadd.f32 %v1796, 1.0
        %v1925 = vadd.f32 %v1797, 1.0
        %v1926 = vadd.f32 %v1798, 1.0
        %v1927 = vadd.f32 %v1799, 1.0
        %v1928 = vadd.f32 %v1800, 1.0
        %v1929 = vadd.f32 %v1801, 1.0
        %v1930 = vadd.f32 %v1802, 1.0
        %v1931 = vadd.f32 %v1803, 1.0
        %v1932 = vadd.f32 %v1804, 1.0
        %v1933 = vadd.f32 %v1805, 1.0
        %v1934 = vadd.f32 %v1806, 1.0
        %v1935 = vadd.f32 %v1807, 1.0
        %v1936 = vadd.f32 %v1808, 1.0
        %v1937 = vadd.f32 %v1809, 1.0
        %v1938 = vadd.f32 %v1810, 1.0
        %v1939 = vadd.f32 %v1811, 1.0
        %v1940 = vadd.f32 %v1812, 1.0
        %v1941 = vadd.f32 %v1813, 1.0
        %v1942 = vadd.f32 %v1814, 1.0
        %v1943 = vadd.f32 %v1815, 1.0
        %v1944 = vadd.f32 %v1816, 1.0
        %v1945 = vadd.f32 %v1817, 1.0
        %v1946 = vadd.f32 %v1818, 1.0
        %v1947 = vadd.f32 %v1819, 1.0
        %v1948 = vadd.f32 %v1820, 1.0
        %v1949 = vadd.f32 %v1821, 1.0
        %v1950 = vadd.f32 %v1822, 1.0
        %v1951 = vadd.f32 %v1823, 1.0
        %v1952 = vadd.f32 %v1824, 1.0
        %v1953 = vadd.f32 %v1825, 1.0
        %v1954 = vadd.f32 %v1826, 1.0
        %v1955 = vadd.f32 %v1827, 1.0
        %v1956 = vadd.f32 %v1828, 1.0
        %v1957 = vadd.f32 %v1829, 1.0
        %v1958 = vadd.f32 %v1830, 1.0
        %v1959 = vadd.f32 %v1831, 1.0
        %v1960 = vadd.f32 %v1832, 1.0
        %v1961 = vadd.f32 %v1833, 1.0
        %v1962 = vadd.f32 %v1834, 1.0
        %v1963 = vadd.f32 %v1835, 1.0
        %v1964 = vadd.f32 %v1836, 1.0
        %v1965 = vadd.f32 %v1837, 1.0
        %v1966 = vadd.f32 %v1838, 1.0
        %v1967 = vadd.f32 %v1839, 1.0
        %v1968 = vadd.f32 %v1840, 1.0
        %v1969 = vadd.f32 %v1841, 1.0
        %v1970 = vadd.f32 %v1842, 1.0
        %v1971 = vadd.f32 %v1843, 1.0
        %v1972 = vadd.f32 %v1844, 1.0
        %v1973 = vadd.f32 %v1845, 1.0
        %v1974 = vadd.f32 %v1846, 1.0
        %v1975 = vadd.f32 %v1847, 1.0
        %v1976 = vadd.f32 %v1848, 1.0
        %v1977 = vadd.f32 %v1849, 1.0
        %v1978 = vadd.f32 %v1850, 1.0
        %v1979 = vadd.f32 %v1851, 1.0
        %v1980 = vadd.f32 %v1852, 1.0
        %v1981 = vadd.f32 %v1853, 1.0
        %v1982 = vadd.f32 %v1854, 1.0
        %v1983 = vadd.f32 %v1855, 1.0
        %v1984 = vadd.f32 %v1856, 1.0
        %v1985 = vmul.f32 %v1473, %v1857
        %v1986 = vmul.f32 %v1474, %v1858
        %v1987 = vmul.f32 %v1475, %v1859
        %v1988 = vmul.f32 %v1476, %v1860
        %v1989 = vmul.f32 %v1477, %v1861
        %v1990 = vmul.f32 %v1478, %v1862
        %v1991 = vmul.f32 %v1479, %v1863
        %v1992 = vmul.f32 %v1480, %v1864
        %v1993 = vmul.f32 %v1481, %v1865
        %v1994 = vmul.f32 %v1482, %v1866
        %v1995 = vmul.f32 %v1483, %v1867
        %v1996 = vmul.f32 %v1484, %v1868
        %v1997 = vmul.f32 %v1485, %v1869
        %v1998 = vmul.f32 %v1486, %v1870
        %v1999 = vmul.f32 %v1487, %v1871
        %v2000 = vmul.f32 %v1488, %v1872
        %v2001 = vmul.f32 %v1489, %v1873
        %v2002 = vmul.f32 %v1490, %v1874
        %v2003 = vmul.f32 %v1491, %v1875
        %v2004 = vmul.f32 %v1492, %v1876
        %v2005 = vmul.f32 %v1493, %v1877
        %v2006 = vmul.f32 %v1494, %v1878
        %v2007 = vmul.f32 %v1495, %v1879
        %v2008 = vmul.f32 %v1496, %v1880
        %v2009 = vmul.f32 %v1497, %v1881
        %v2010 = vmul.f32 %v1498, %v1882
        %v2011 = vmul.f32 %v1499, %v1883
        %v2012 = vmul.f32 %v1500, %v1884
        %v2013 = vmul.f32 %v1501, %v1885
        %v2014 = vmul.f32 %v1502, %v1886
        %v2015 = vmul.f32 %v1503, %v1887
        %v2016 = vmul.f32 %v1504, %v1888
        %v2017 = vmul.f32 %v1505, %v1889
        %v2018 = vmul.f32 %v1506, %v1890
        %v2019 = vmul.f32 %v1507, %v1891
        %v2020 = vmul.f32 %v1508, %v1892
        %v2021 = vmul.f32 %v1509, %v1893
        %v2022 = vmul.f32 %v1510, %v1894
        %v2023 = vmul.f32 %v1511, %v1895
        %v2024 = vmul.f32 %v1512, %v1896
        %v2025 = vmul.f32 %v1513, %v1897
        %v2026 = vmul.f32 %v1514, %v1898
        %v2027 = vmul.f32 %v1515, %v1899
        %v2028 = vmul.f32 %v1516, %v1900
        %v2029 = vmul.f32 %v1517, %v1901
        %v2030 = vmul.f32 %v1518, %v1902
        %v2031 = vmul.f32 %v1519, %v1903
        %v2032 = vmul.f32 %v1520, %v1904
        %v2033 = vmul.f32 %v1521, %v1905
        %v2034 = vmul.f32 %v1522, %v1906
        %v2035 = vmul.f32 %v1523, %v1907
        %v2036 = vmul.f32 %v1524, %v1908
        %v2037 = vmul.f32 %v1525, %v1909
        %v2038 = vmul.f32 %v1526, %v1910
        %v2039 = vmul.f32 %v1527, %v1911
        %v2040 = vmul.f32 %v1528, %v1912
        %v2041 = vmul.f32 %v1529, %v1913
        %v2042 = vmul.f32 %v1530, %v1914
        %v2043 = vmul.f32 %v1531, %v1915
        %v2044 = vmul.f32 %v1532, %v1916
        %v2045 = vmul.f32 %v1533, %v1917
        %v2046 = vmul.f32 %v1534, %v1918
        %v2047 = vmul.f32 %v1535, %v1919
        %v2048 = vmul.f32 %v1536, %v1920
        %v2049 = vmul.f32 %v1537, %v1921
        %v2050 = vmul.f32 %v1538, %v1922
        %v2051 = vmul.f32 %v1539, %v1923
        %v2052 = vmul.f32 %v1540, %v1924
        %v2053 = vmul.f32 %v1541, %v1925
        %v2054 = vmul.f32 %v1542, %v1926
        %v2055 = vmul.f32 %v1543, %v1927
        %v2056 = vmul.f32 %v1544, %v1928
        %v2057 = vmul.f32 %v1545, %v1929
        %v2058 = vmul.f32 %v1546, %v1930
        %v2059 = vmul.f32 %v1547, %v1931
        %v2060 = vmul.f32 %v1548, %v1932
        %v2061 = vmul.f32 %v1549, %v1933
        %v2062 = vmul.f32 %v1550, %v1934
        %v2063 = vmul.f32 %v1551, %v1935
        %v2064 = vmul.f32 %v1552, %v1936
        %v2065 = vmul.f32 %v1553, %v1937
        %v2066 = vmul.f32 %v1554, %v1938
        %v2067 = vmul.f32 %v1555, %v1939
        %v2068 = vmul.f32 %v1556, %v1940
        %v2069 = vmul.f32 %v1557, %v1941
        %v2070 = vmul.f32 %v1558, %v1942
        %v2071 = vmul.f32 %v1559, %v1943
        %v2072 = vmul.f32 %v1560, %v1944
        %v2073 = vmul.f32 %v1561, %v1945
        %v2074 = vmul.f32 %v1562, %v1946
        %v2075 = vmul.f32 %v1563, %v1947
        %v2076 = vmul.f32 %v1564, %v1948
        %v2077 = vmul.f32 %v1565, %v1949
        %v2078 = vmul.f32 %v1566, %v1950
        %v2079 = vmul.f32 %v1567, %v1951
        %v2080 = vmul.f32 %v1568, %v1952
        %v2081 = vmul.f32 %v1569, %v1953
        %v2082 = vmul.f32 %v1570, %v1954
        %v2083 = vmul.f32 %v1571, %v1955
        %v2084 = vmul.f32 %v1572, %v1956
        %v2085 = vmul.f32 %v1573, %v1957
        %v2086 = vmul.f32 %v1574, %v1958
        %v2087 = vmul.f32 %v1575, %v1959
        %v2088 = vmul.f32 %v1576, %v1960
        %v2089 = vmul.f32 %v1577, %v1961
        %v2090 = vmul.f32 %v1578, %v1962
        %v2091 = vmul.f32 %v1579, %v1963
        %v2092 = vmul.f32 %v1580, %v1964
        %v2093 = vmul.f32 %v1581, %v1965
        %v2094 = vmul.f32 %v1582, %v1966
        %v2095 = vmul.f32 %v1583, %v1967
        %v2096 = vmul.f32 %v1584, %v1968
        %v2097 = vmul.f32 %v1585, %v1969
        %v2098 = vmul.f32 %v1586, %v1970
        %v2099 = vmul.f32 %v1587, %v1971
        %v2100 = vmul.f32 %v1588, %v1972
        %v2101 = vmul.f32 %v1589, %v1973
        %v2102 = vmul.f32 %v1590, %v1974
        %v2103 = vmul.f32 %v1591, %v1975
        %v2104 = vmul.f32 %v1592, %v1976
        %v2105 = vmul.f32 %v1593, %v1977
        %v2106 = vmul.f32 %v1594, %v1978
        %v2107 = vmul.f32 %v1595, %v1979
        %v2108 = vmul.f32 %v1596, %v1980
        %v2109 = vmul.f32 %v1597, %v1981
        %v2110 = vmul.f32 %v1598, %v1982
        %v2111 = vmul.f32 %v1599, %v1983
        %v2112 = vmul.f32 %v1600, %v1984
        %v2113 = vld [vmem:[#allocation2] sm:$0xff]
        %v2114 = vld [vmem:[#allocation2 + $0x8] sm:$0xff]
        %v2115 = vld [vmem:[#allocation2 + $0x10] sm:$0xff]
        %v2116 = vld [vmem:[#allocation2 + $0x18] sm:$0xff]
        %v2117 = vld [vmem:[#allocation2 + $0x20] sm:$0xff]
        %v2118 = vld [vmem:[#allocation2 + $0x28] sm:$0xff]
        %v2119 = vld [vmem:[#allocation2 + $0x30] sm:$0xff]
        %v2120 = vld [vmem:[#allocation2 + $0x38] sm:$0xff]
        %v2121 = vld [vmem:[#allocation2 + $0x40] sm:$0xff]
        %v2122 = vld [vmem:[#allocation2 + $0x48] sm:$0xff]
        %v2123 = vld [vmem:[#allocation2 + $0x50] sm:$0xff]
        %v2124 = vld [vmem:[#allocation2 + $0x58] sm:$0xff]
        %v2125 = vld [vmem:[#allocation2 + $0x60] sm:$0xff]
        %v2126 = vld [vmem:[#allocation2 + $0x68] sm:$0xff]
        %v2127 = vld [vmem:[#allocation2 + $0x70] sm:$0xff]
        %v2128 = vld [vmem:[#allocation2 + $0x78] sm:$0xff]
        %v2129 = vld [vmem:[#allocation2 + $0x80] sm:$0xff]
        %v2130 = vld [vmem:[#allocation2 + $0x88] sm:$0xff]
        %v2131 = vld [vmem:[#allocation2 + $0x90] sm:$0xff]
        %v2132 = vld [vmem:[#allocation2 + $0x98] sm:$0xff]
        %v2133 = vld [vmem:[#allocation2 + $0xa0] sm:$0xff]
        %v2134 = vld [vmem:[#allocation2 + $0xa8] sm:$0xff]
        %v2135 = vld [vmem:[#allocation2 + $0xb0] sm:$0xff]
        %v2136 = vld [vmem:[#allocation2 + $0xb8] sm:$0xff]
        %v2137 = vld [vmem:[#allocation2 + $0xc0] sm:$0xff]
        %v2138 = vld [vmem:[#allocation2 + $0xc8] sm:$0xff]
        %v2139 = vld [vmem:[#allocation2 + $0xd0] sm:$0xff]
        %v2140 = vld [vmem:[#allocation2 + $0xd8] sm:$0xff]
        %v2141 = vld [vmem:[#allocation2 + $0xe0] sm:$0xff]
        %v2142 = vld [vmem:[#allocation2 + $0xe8] sm:$0xff]
        %v2143 = vld [vmem:[#allocation2 + $0xf0] sm:$0xff]
        %v2144 = vld [vmem:[#allocation2 + $0xf8] sm:$0xff]
        %v2145 = vld [vmem:[#allocation2 + $0x100] sm:$0xff]
        %v2146 = vld [vmem:[#allocation2 + $0x108] sm:$0xff]
        %v2147 = vld [vmem:[#allocation2 + $0x110] sm:$0xff]
        %v2148 = vld [vmem:[#allocation2 + $0x118] sm:$0xff]
        %v2149 = vld [vmem:[#allocation2 + $0x120] sm:$0xff]
        %v2150 = vld [vmem:[#allocation2 + $0x128] sm:$0xff]
        %v2151 = vld [vmem:[#allocation2 + $0x130] sm:$0xff]
        %v2152 = vld [vmem:[#allocation2 + $0x138] sm:$0xff]
        %v2153 = vld [vmem:[#allocation2 + $0x140] sm:$0xff]
        %v2154 = vld [vmem:[#allocation2 + $0x148] sm:$0xff]
        %v2155 = vld [vmem:[#allocation2 + $0x150] sm:$0xff]
        %v2156 = vld [vmem:[#allocation2 + $0x158] sm:$0xff]
        %v2157 = vld [vmem:[#allocation2 + $0x160] sm:$0xff]
        %v2158 = vld [vmem:[#allocation2 + $0x168] sm:$0xff]
        %v2159 = vld [vmem:[#allocation2 + $0x170] sm:$0xff]
        %v2160 = vld [vmem:[#allocation2 + $0x178] sm:$0xff]
        %v2161 = vld [vmem:[#allocation2 + $0x180] sm:$0xff]
        %v2162 = vld [vmem:[#allocation2 + $0x188] sm:$0xff]
        %v2163 = vld [vmem:[#allocation2 + $0x190] sm:$0xff]
        %v2164 = vld [vmem:[#allocation2 + $0x198] sm:$0xff]
        %v2165 = vld [vmem:[#allocation2 + $0x1a0] sm:$0xff]
        %v2166 = vld [vmem:[#allocation2 + $0x1a8] sm:$0xff]
        %v2167 = vld [vmem:[#allocation2 + $0x1b0] sm:$0xff]
        %v2168 = vld [vmem:[#allocation2 + $0x1b8] sm:$0xff]
        %v2169 = vld [vmem:[#allocation2 + $0x1c0] sm:$0xff]
        %v2170 = vld [vmem:[#allocation2 + $0x1c8] sm:$0xff]
        %v2171 = vld [vmem:[#allocation2 + $0x1d0] sm:$0xff]
        %v2172 = vld [vmem:[#allocation2 + $0x1d8] sm:$0xff]
        %v2173 = vld [vmem:[#allocation2 + $0x1e0] sm:$0xff]
        %v2174 = vld [vmem:[#allocation2 + $0x1e8] sm:$0xff]
        %v2175 = vld [vmem:[#allocation2 + $0x1f0] sm:$0xff]
        %v2176 = vld [vmem:[#allocation2 + $0x1f8] sm:$0xff]
        %v2177 = vpack.c.bf16 %v1989, %v1985
        %v2178 = vpack.c.bf16 %v1990, %v1986
        %v2179 = vpack.c.bf16 %v1991, %v1987
        %v2180 = vpack.c.bf16 %v1992, %v1988
        %v2181 = vpack.c.bf16 %v1997, %v1993
        %v2182 = vpack.c.bf16 %v1998, %v1994
        %v2183 = vpack.c.bf16 %v1999, %v1995
        %v2184 = vpack.c.bf16 %v2000, %v1996
        %v2185 = vpack.c.bf16 %v2005, %v2001
        %v2186 = vpack.c.bf16 %v2006, %v2002
        %v2187 = vpack.c.bf16 %v2007, %v2003
        %v2188 = vpack.c.bf16 %v2008, %v2004
        %v2189 = vpack.c.bf16 %v2013, %v2009
        %v2190 = vpack.c.bf16 %v2014, %v2010
        %v2191 = vpack.c.bf16 %v2015, %v2011
        %v2192 = vpack.c.bf16 %v2016, %v2012
        %v2193 = vpack.c.bf16 %v2021, %v2017
        %v2194 = vpack.c.bf16 %v2022, %v2018
        %v2195 = vpack.c.bf16 %v2023, %v2019
        %v2196 = vpack.c.bf16 %v2024, %v2020
        %v2197 = vpack.c.bf16 %v2029, %v2025
        %v2198 = vpack.c.bf16 %v2030, %v2026
        %v2199 = vpack.c.bf16 %v2031, %v2027
        %v2200 = vpack.c.bf16 %v2032, %v2028
        %v2201 = vpack.c.bf16 %v2037, %v2033
        %v2202 = vpack.c.bf16 %v2038, %v2034
        %v2203 = vpack.c.bf16 %v2039, %v2035
        %v2204 = vpack.c.bf16 %v2040, %v2036
        %v2205 = vpack.c.bf16 %v2045, %v2041
        %v2206 = vpack.c.bf16 %v2046, %v2042
        %v2207 = vpack.c.bf16 %v2047, %v2043
        %v2208 = vpack.c.bf16 %v2048, %v2044
        %v2209 = vpack.c.bf16 %v2053, %v2049
        %v2210 = vpack.c.bf16 %v2054, %v2050
        %v2211 = vpack.c.bf16 %v2055, %v2051
        %v2212 = vpack.c.bf16 %v2056, %v2052
        %v2213 = vpack.c.bf16 %v2061, %v2057
        %v2214 = vpack.c.bf16 %v2062, %v2058
        %v2215 = vpack.c.bf16 %v2063, %v2059
        %v2216 = vpack.c.bf16 %v2064, %v2060
        %v2217 = vpack.c.bf16 %v2069, %v2065
        %v2218 = vpack.c.bf16 %v2070, %v2066
        %v2219 = vpack.c.bf16 %v2071, %v2067
        %v2220 = vpack.c.bf16 %v2072, %v2068
        %v2221 = vpack.c.bf16 %v2077, %v2073
        %v2222 = vpack.c.bf16 %v2078, %v2074
        %v2223 = vpack.c.bf16 %v2079, %v2075
        %v2224 = vpack.c.bf16 %v2080, %v2076
        %v2225 = vpack.c.bf16 %v2085, %v2081
        %v2226 = vpack.c.bf16 %v2086, %v2082
        %v2227 = vpack.c.bf16 %v2087, %v2083
        %v2228 = vpack.c.bf16 %v2088, %v2084
        %v2229 = vpack.c.bf16 %v2093, %v2089
        %v2230 = vpack.c.bf16 %v2094, %v2090
        %v2231 = vpack.c.bf16 %v2095, %v2091
        %v2232 = vpack.c.bf16 %v2096, %v2092
        %v2233 = vpack.c.bf16 %v2101, %v2097
        %v2234 = vpack.c.bf16 %v2102, %v2098
        %v2235 = vpack.c.bf16 %v2103, %v2099
        %v2236 = vpack.c.bf16 %v2104, %v2100
        %v2237 = vpack.c.bf16 %v2109, %v2105
        %v2238 = vpack.c.bf16 %v2110, %v2106
        %v2239 = vpack.c.bf16 %v2111, %v2107
        %v2240 = vpack.c.bf16 %v2112, %v2108
        %v2241 = vld [vmem:[#allocation9] sm:$0xff]
        %v2242 = vld [vmem:[#allocation9 + $0x8] sm:$0xff]
        %v2243 = vld [vmem:[#allocation9 + $0x10] sm:$0xff]
        %v2244 = vld [vmem:[#allocation9 + $0x18] sm:$0xff]
        %v2245 = vld [vmem:[#allocation9 + $0x20] sm:$0xff]
        %v2246 = vld [vmem:[#allocation9 + $0x28] sm:$0xff]
        %v2247 = vld [vmem:[#allocation9 + $0x30] sm:$0xff]
        %v2248 = vld [vmem:[#allocation9 + $0x38] sm:$0xff]
        %v2249 = vld [vmem:[#allocation9 + $0x40] sm:$0xff]
        %v2250 = vld [vmem:[#allocation9 + $0x48] sm:$0xff]
        %v2251 = vld [vmem:[#allocation9 + $0x50] sm:$0xff]
        %v2252 = vld [vmem:[#allocation9 + $0x58] sm:$0xff]
        %v2253 = vld [vmem:[#allocation9 + $0x60] sm:$0xff]
        %v2254 = vld [vmem:[#allocation9 + $0x68] sm:$0xff]
        %v2255 = vld [vmem:[#allocation9 + $0x70] sm:$0xff]
        %v2256 = vld [vmem:[#allocation9 + $0x78] sm:$0xff]
        %v2257 = vld [vmem:[#allocation9 + $0x80] sm:$0xff]
        %v2258 = vld [vmem:[#allocation9 + $0x88] sm:$0xff]
        %v2259 = vld [vmem:[#allocation9 + $0x90] sm:$0xff]
        %v2260 = vld [vmem:[#allocation9 + $0x98] sm:$0xff]
        %v2261 = vld [vmem:[#allocation9 + $0xa0] sm:$0xff]
        %v2262 = vld [vmem:[#allocation9 + $0xa8] sm:$0xff]
        %v2263 = vld [vmem:[#allocation9 + $0xb0] sm:$0xff]
        %v2264 = vld [vmem:[#allocation9 + $0xb8] sm:$0xff]
        %v2265 = vld [vmem:[#allocation9 + $0xc0] sm:$0xff]
        %v2266 = vld [vmem:[#allocation9 + $0xc8] sm:$0xff]
        %v2267 = vld [vmem:[#allocation9 + $0xd0] sm:$0xff]
        %v2268 = vld [vmem:[#allocation9 + $0xd8] sm:$0xff]
        %v2269 = vld [vmem:[#allocation9 + $0xe0] sm:$0xff]
        %v2270 = vld [vmem:[#allocation9 + $0xe8] sm:$0xff]
        %v2271 = vld [vmem:[#allocation9 + $0xf0] sm:$0xff]
        %v2272 = vld [vmem:[#allocation9 + $0xf8] sm:$0xff]
        %v2273 = vld [vmem:[#allocation9 + $0x100] sm:$0xff]
        %v2274 = vld [vmem:[#allocation9 + $0x108] sm:$0xff]
        %v2275 = vld [vmem:[#allocation9 + $0x110] sm:$0xff]
        %v2276 = vld [vmem:[#allocation9 + $0x118] sm:$0xff]
        %v2277 = vld [vmem:[#allocation9 + $0x120] sm:$0xff]
        %v2278 = vld [vmem:[#allocation9 + $0x128] sm:$0xff]
        %v2279 = vld [vmem:[#allocation9 + $0x130] sm:$0xff]
        %v2280 = vld [vmem:[#allocation9 + $0x138] sm:$0xff]
        %v2281 = vld [vmem:[#allocation9 + $0x140] sm:$0xff]
        %v2282 = vld [vmem:[#allocation9 + $0x148] sm:$0xff]
        %v2283 = vld [vmem:[#allocation9 + $0x150] sm:$0xff]
        %v2284 = vld [vmem:[#allocation9 + $0x158] sm:$0xff]
        %v2285 = vld [vmem:[#allocation9 + $0x160] sm:$0xff]
        %v2286 = vld [vmem:[#allocation9 + $0x168] sm:$0xff]
        %v2287 = vld [vmem:[#allocation9 + $0x170] sm:$0xff]
        %v2288 = vld [vmem:[#allocation9 + $0x178] sm:$0xff]
        %v2289 = vld [vmem:[#allocation9 + $0x180] sm:$0xff]
        %v2290 = vld [vmem:[#allocation9 + $0x188] sm:$0xff]
        %v2291 = vld [vmem:[#allocation9 + $0x190] sm:$0xff]
        %v2292 = vld [vmem:[#allocation9 + $0x198] sm:$0xff]
        %v2293 = vld [vmem:[#allocation9 + $0x1a0] sm:$0xff]
        %v2294 = vld [vmem:[#allocation9 + $0x1a8] sm:$0xff]
        %v2295 = vld [vmem:[#allocation9 + $0x1b0] sm:$0xff]
        %v2296 = vld [vmem:[#allocation9 + $0x1b8] sm:$0xff]
        %v2297 = vld [vmem:[#allocation9 + $0x1c0] sm:$0xff]
        %v2298 = vld [vmem:[#allocation9 + $0x1c8] sm:$0xff]
        %v2299 = vld [vmem:[#allocation9 + $0x1d0] sm:$0xff]
        %v2300 = vld [vmem:[#allocation9 + $0x1d8] sm:$0xff]
        %v2301 = vld [vmem:[#allocation9 + $0x1e0] sm:$0xff]
        %v2302 = vld [vmem:[#allocation9 + $0x1e8] sm:$0xff]
        %v2303 = vld [vmem:[#allocation9 + $0x1f0] sm:$0xff]
        %v2304 = vld [vmem:[#allocation9 + $0x1f8] sm:$0xff]
        %v2369 = vunpack.c.l.b16 %v2241
        %v2370 = vunpack.c.h.b16 %v2241
        %v2371 = vunpack.c.l.b16 %v2242
        %v2372 = vunpack.c.h.b16 %v2242
        %v2373 = vunpack.c.l.b16 %v2243
        %v2374 = vunpack.c.h.b16 %v2243
        %v2375 = vunpack.c.l.b16 %v2244
        %v2376 = vunpack.c.h.b16 %v2244
        %v2377 = vunpack.c.l.b16 %v2245
        %v2378 = vunpack.c.h.b16 %v2245
        %v2379 = vunpack.c.l.b16 %v2246
        %v2380 = vunpack.c.h.b16 %v2246
        %v2381 = vunpack.c.l.b16 %v2247
        %v2382 = vunpack.c.h.b16 %v2247
        %v2383 = vunpack.c.l.b16 %v2248
        %v2384 = vunpack.c.h.b16 %v2248
        %v2385 = vunpack.c.l.b16 %v2249
        %v2386 = vunpack.c.h.b16 %v2249
        %v2387 = vunpack.c.l.b16 %v2250
        %v2388 = vunpack.c.h.b16 %v2250
        %v2389 = vunpack.c.l.b16 %v2251
        %v2390 = vunpack.c.h.b16 %v2251
        %v2391 = vunpack.c.l.b16 %v2252
        %v2392 = vunpack.c.h.b16 %v2252
        %v2393 = vunpack.c.l.b16 %v2253
        %v2394 = vunpack.c.h.b16 %v2253
        %v2395 = vunpack.c.l.b16 %v2254
        %v2396 = vunpack.c.h.b16 %v2254
        %v2397 = vunpack.c.l.b16 %v2255
        %v2398 = vunpack.c.h.b16 %v2255
        %v2399 = vunpack.c.l.b16 %v2256
        %v2400 = vunpack.c.h.b16 %v2256
        %v2401 = vunpack.c.l.b16 %v2257
        %v2402 = vunpack.c.h.b16 %v2257
        %v2403 = vunpack.c.l.b16 %v2258
        %v2404 = vunpack.c.h.b16 %v2258
        %v2405 = vunpack.c.l.b16 %v2259
        %v2406 = vunpack.c.h.b16 %v2259
        %v2407 = vunpack.c.l.b16 %v2260
        %v2408 = vunpack.c.h.b16 %v2260
        %v2409 = vunpack.c.l.b16 %v2261
        %v2410 = vunpack.c.h.b16 %v2261
        %v2411 = vunpack.c.l.b16 %v2262
        %v2412 = vunpack.c.h.b16 %v2262
        %v2413 = vunpack.c.l.b16 %v2263
        %v2414 = vunpack.c.h.b16 %v2263
        %v2415 = vunpack.c.l.b16 %v2264
        %v2416 = vunpack.c.h.b16 %v2264
        %v2417 = vunpack.c.l.b16 %v2265
        %v2418 = vunpack.c.h.b16 %v2265
        %v2419 = vunpack.c.l.b16 %v2266
        %v2420 = vunpack.c.h.b16 %v2266
        %v2421 = vunpack.c.l.b16 %v2267
        %v2422 = vunpack.c.h.b16 %v2267
        %v2423 = vunpack.c.l.b16 %v2268
        %v2424 = vunpack.c.h.b16 %v2268
        %v2425 = vunpack.c.l.b16 %v2269
        %v2426 = vunpack.c.h.b16 %v2269
        %v2427 = vunpack.c.l.b16 %v2270
        %v2428 = vunpack.c.h.b16 %v2270
        %v2429 = vunpack.c.l.b16 %v2271
        %v2430 = vunpack.c.h.b16 %v2271
        %v2431 = vunpack.c.l.b16 %v2272
        %v2432 = vunpack.c.h.b16 %v2272
        %v2433 = vunpack.c.l.b16 %v2273
        %v2434 = vunpack.c.h.b16 %v2273
        %v2435 = vunpack.c.l.b16 %v2274
        %v2436 = vunpack.c.h.b16 %v2274
        %v2437 = vunpack.c.l.b16 %v2275
        %v2438 = vunpack.c.h.b16 %v2275
        %v2439 = vunpack.c.l.b16 %v2276
        %v2440 = vunpack.c.h.b16 %v2276
        %v2441 = vunpack.c.l.b16 %v2277
        %v2442 = vunpack.c.h.b16 %v2277
        %v2443 = vunpack.c.l.b16 %v2278
        %v2444 = vunpack.c.h.b16 %v2278
        %v2445 = vunpack.c.l.b16 %v2279
        %v2446 = vunpack.c.h.b16 %v2279
        %v2447 = vunpack.c.l.b16 %v2280
        %v2448 = vunpack.c.h.b16 %v2280
        %v2449 = vunpack.c.l.b16 %v2281
        %v2450 = vunpack.c.h.b16 %v2281
        %v2451 = vunpack.c.l.b16 %v2282
        %v2452 = vunpack.c.h.b16 %v2282
        %v2453 = vunpack.c.l.b16 %v2283
        %v2454 = vunpack.c.h.b16 %v2283
        %v2455 = vunpack.c.l.b16 %v2284
        %v2456 = vunpack.c.h.b16 %v2284
        %v2457 = vunpack.c.l.b16 %v2285
        %v2458 = vunpack.c.h.b16 %v2285
        %v2459 = vunpack.c.l.b16 %v2286
        %v2460 = vunpack.c.h.b16 %v2286
        %v2461 = vunpack.c.l.b16 %v2287
        %v2462 = vunpack.c.h.b16 %v2287
        %v2463 = vunpack.c.l.b16 %v2288
        %v2464 = vunpack.c.h.b16 %v2288
        %v2465 = vunpack.c.l.b16 %v2289
        %v2466 = vunpack.c.h.b16 %v2289
        %v2467 = vunpack.c.l.b16 %v2290
        %v2468 = vunpack.c.h.b16 %v2290
        %v2469 = vunpack.c.l.b16 %v2291
        %v2470 = vunpack.c.h.b16 %v2291
        %v2471 = vunpack.c.l.b16 %v2292
        %v2472 = vunpack.c.h.b16 %v2292
        %v2473 = vunpack.c.l.b16 %v2293
        %v2474 = vunpack.c.h.b16 %v2293
        %v2475 = vunpack.c.l.b16 %v2294
        %v2476 = vunpack.c.h.b16 %v2294
        %v2477 = vunpack.c.l.b16 %v2295
        %v2478 = vunpack.c.h.b16 %v2295
        %v2479 = vunpack.c.l.b16 %v2296
        %v2480 = vunpack.c.h.b16 %v2296
        %v2481 = vunpack.c.l.b16 %v2297
        %v2482 = vunpack.c.h.b16 %v2297
        %v2483 = vunpack.c.l.b16 %v2298
        %v2484 = vunpack.c.h.b16 %v2298
        %v2485 = vunpack.c.l.b16 %v2299
        %v2486 = vunpack.c.h.b16 %v2299
        %v2487 = vunpack.c.l.b16 %v2300
        %v2488 = vunpack.c.h.b16 %v2300
        %v2489 = vunpack.c.l.b16 %v2301
        %v2490 = vunpack.c.h.b16 %v2301
        %v2491 = vunpack.c.l.b16 %v2302
        %v2492 = vunpack.c.h.b16 %v2302
        %v2493 = vunpack.c.l.b16 %v2303
        %v2494 = vunpack.c.h.b16 %v2303
        %v2495 = vunpack.c.l.b16 %v2304
        %v2496 = vunpack.c.h.b16 %v2304
        %v2497 = vpack.c.b16 %v2371, %v2369
        %v2498 = vpack.c.b16 %v2372, %v2370
        %v2499 = vpack.c.b16 %v2375, %v2373
        %v2500 = vpack.c.b16 %v2376, %v2374
        %v2501 = vpack.c.b16 %v2379, %v2377
        %v2502 = vpack.c.b16 %v2380, %v2378
        %v2503 = vpack.c.b16 %v2383, %v2381
        %v2504 = vpack.c.b16 %v2384, %v2382
        %v2505 = vpack.c.b16 %v2387, %v2385
        %v2506 = vpack.c.b16 %v2388, %v2386
        %v2507 = vpack.c.b16 %v2391, %v2389
        %v2508 = vpack.c.b16 %v2392, %v2390
        %v2509 = vpack.c.b16 %v2395, %v2393
        %v2510 = vpack.c.b16 %v2396, %v2394
        %v2511 = vpack.c.b16 %v2399, %v2397
        %v2512 = vpack.c.b16 %v2400, %v2398
        %v2513 = vpack.c.b16 %v2403, %v2401
        %v2514 = vpack.c.b16 %v2404, %v2402
        %v2515 = vpack.c.b16 %v2407, %v2405
        %v2516 = vpack.c.b16 %v2408, %v2406
        %v2517 = vpack.c.b16 %v2411, %v2409
        %v2518 = vpack.c.b16 %v2412, %v2410
        %v2519 = vpack.c.b16 %v2415, %v2413
        %v2520 = vpack.c.b16 %v2416, %v2414
        %v2521 = vpack.c.b16 %v2419, %v2417
        %v2522 = vpack.c.b16 %v2420, %v2418
        %v2523 = vpack.c.b16 %v2423, %v2421
        %v2524 = vpack.c.b16 %v2424, %v2422
        %v2525 = vpack.c.b16 %v2427, %v2425
        %v2526 = vpack.c.b16 %v2428, %v2426
        %v2527 = vpack.c.b16 %v2431, %v2429
        %v2528 = vpack.c.b16 %v2432, %v2430
        %v2529 = vpack.c.b16 %v2435, %v2433
        %v2530 = vpack.c.b16 %v2436, %v2434
        %v2531 = vpack.c.b16 %v2439, %v2437
        %v2532 = vpack.c.b16 %v2440, %v2438
        %v2533 = vpack.c.b16 %v2443, %v2441
        %v2534 = vpack.c.b16 %v2444, %v2442
        %v2535 = vpack.c.b16 %v2447, %v2445
        %v2536 = vpack.c.b16 %v2448, %v2446
        %v2537 = vpack.c.b16 %v2451, %v2449
        %v2538 = vpack.c.b16 %v2452, %v2450
        %v2539 = vpack.c.b16 %v2455, %v2453
        %v2540 = vpack.c.b16 %v2456, %v2454
        %v2541 = vpack.c.b16 %v2459, %v2457
        %v2542 = vpack.c.b16 %v2460, %v2458
        %v2543 = vpack.c.b16 %v2463, %v2461
        %v2544 = vpack.c.b16 %v2464, %v2462
        %v2545 = vpack.c.b16 %v2467, %v2465
        %v2546 = vpack.c.b16 %v2468, %v2466
        %v2547 = vpack.c.b16 %v2471, %v2469
        %v2548 = vpack.c.b16 %v2472, %v2470
        %v2549 = vpack.c.b16 %v2475, %v2473
        %v2550 = vpack.c.b16 %v2476, %v2474
        %v2551 = vpack.c.b16 %v2479, %v2477
        %v2552 = vpack.c.b16 %v2480, %v2478
        %v2553 = vpack.c.b16 %v2483, %v2481
        %v2554 = vpack.c.b16 %v2484, %v2482
        %v2555 = vpack.c.b16 %v2487, %v2485
        %v2556 = vpack.c.b16 %v2488, %v2486
        %v2557 = vpack.c.b16 %v2491, %v2489
        %v2558 = vpack.c.b16 %v2492, %v2490
        %v2559 = vpack.c.b16 %v2495, %v2493
        %v2560 = vpack.c.b16 %v2496, %v2494
        %2625 = vmatprep.subr.bf16.mxu0 %v2498
        %2626 = vmatpush1.bf16.msra.mxu0 %v2497
        %2627 = vmatprep.subr.bf16.mxu0 %v2500
        %2628 = vmatpush1.bf16.msra.mxu0 %v2499
        %2629 = vmatprep.subr.bf16.mxu0 %v2502
        %2630 = vmatpush1.bf16.msra.mxu0 %v2501
        %2631 = vmatprep.subr.bf16.mxu0 %v2504
        %2632 = vmatpush1.bf16.msra.mxu0 %v2503
        %2633 = vmatprep.subr.bf16.mxu0 %v2506
        %2634 = vmatpush1.bf16.msra.mxu0 %v2505
        %2635 = vmatprep.subr.bf16.mxu0 %v2508
        %2636 = vmatpush1.bf16.msra.mxu0 %v2507
        %2637 = vmatprep.subr.bf16.mxu0 %v2510
        %2638 = vmatpush1.bf16.msra.mxu0 %v2509
        %2639 = vmatprep.subr.bf16.mxu0 %v2512
        %2640 = vmatpush1.bf16.msra.mxu0 %v2511
        %2641 = vmatprep.subr.bf16.mxu0 %v2514
        %2642 = vmatpush1.bf16.msra.mxu0 %v2513
        %2643 = vmatprep.subr.bf16.mxu0 %v2516
        %2644 = vmatpush1.bf16.msra.mxu0 %v2515
        %2645 = vmatprep.subr.bf16.mxu0 %v2518
        %2646 = vmatpush1.bf16.msra.mxu0 %v2517
        %2647 = vmatprep.subr.bf16.mxu0 %v2520
        %2648 = vmatpush1.bf16.msra.mxu0 %v2519
        %2649 = vmatprep.subr.bf16.mxu0 %v2522
        %2650 = vmatpush1.bf16.msra.mxu0 %v2521
        %2651 = vmatprep.subr.bf16.mxu0 %v2524
        %2652 = vmatpush1.bf16.msra.mxu0 %v2523
        %2653 = vmatprep.subr.bf16.mxu0 %v2526
        %2654 = vmatpush1.bf16.msra.mxu0 %v2525
        %2655 = vmatprep.subr.bf16.mxu0 %v2528
        %2656 = vmatpush1.bf16.msra.mxu0 %v2527
        %2657 = vmatprep.mubr.bf16.mxu0 %v2178
        %2658 = vmatmul.mubr.bf16.gmra.mrb[0].mxu0 %v2177
        %v2659 = vpop.f32.mrb[0].mxu0
        %v2660 = vadd.f32 0.0, %v2659
        %v2661 = vpop.f32.mrb[0].mxu0
        %v2662 = vadd.f32 0.0, %v2661
        %v2663 = vpop.f32.mrb[0].mxu0
        %v2664 = vadd.f32 0.0, %v2663
        %v2665 = vpop.f32.mrb[0].mxu0
        %v2666 = vadd.f32 0.0, %v2665
        %2667 = vmatprep.mubr.bf16.mxu0 %v2182
        %2668 = vmatmul.mubr.bf16.gmra.mrb[0].mxu0 %v2181
        %v2669 = vpop.f32.mrb[0].mxu0
        %v2670 = vadd.f32 0.0, %v2669
        %v2671 = vpop.f32.mrb[0].mxu0
        %v2672 = vadd.f32 0.0, %v2671
        %v2673 = vpop.f32.mrb[0].mxu0
        %v2674 = vadd.f32 0.0, %v2673
        %v2675 = vpop.f32.mrb[0].mxu0
        %v2676 = vadd.f32 0.0, %v2675
        %2677 = vmatprep.mubr.bf16.mxu0 %v2186
        %2678 = vmatmul.mubr.bf16.gmra.mrb[0].mxu0 %v2185
        %v2679 = vpop.f32.mrb[0].mxu0
        %v2680 = vadd.f32 0.0, %v2679
        %v2681 = vpop.f32.mrb[0].mxu0
        %v2682 = vadd.f32 0.0, %v2681
        %v2683 = vpop.f32.mrb[0].mxu0
        %v2684 = vadd.f32 0.0, %v2683
        %v2685 = vpop.f32.mrb[0].mxu0
        %v2686 = vadd.f32 0.0, %v2685
        %2687 = vmatprep.mubr.bf16.mxu0 %v2190
        %2688 = vmatmul.mubr.bf16.gmra.mrb[0].mxu0 %v2189
        %v2689 = vpop.f32.mrb[0].mxu0
        %v2690 = vadd.f32 0.0, %v2689
        %v2691 = vpop.f32.mrb[0].mxu0
        %v2692 = vadd.f32 0.0, %v2691
        %v2693 = vpop.f32.mrb[0].mxu0
        %v2694 = vadd.f32 0.0, %v2693
        %v2695 = vpop.f32.mrb[0].mxu0
        %v2696 = vadd.f32 0.0, %v2695
        %2697 = vmatprep.mubr.bf16.mxu0 %v2194
        %2698 = vmatmul.mubr.bf16.gmra.mrb[0].mxu0 %v2193
        %v2699 = vpop.f32.mrb[0].mxu0
        %v2700 = vadd.f32 0.0, %v2699
        %v2701 = vpop.f32.mrb[0].mxu0
        %v2702 = vadd.f32 0.0, %v2701
        %v2703 = vpop.f32.mrb[0].mxu0
        %v2704 = vadd.f32 0.0, %v2703
        %v2705 = vpop.f32.mrb[0].mxu0
        %v2706 = vadd.f32 0.0, %v2705
        %2707 = vmatprep.mubr.bf16.mxu0 %v2198
        %2708 = vmatmul.mubr.bf16.gmra.mrb[0].mxu0 %v2197
        %v2709 = vpop.f32.mrb[0].mxu0
        %v2710 = vadd.f32 0.0, %v2709
        %v2711 = vpop.f32.mrb[0].mxu0
        %v2712 = vadd.f32 0.0, %v2711
        %v2713 = vpop.f32.mrb[0].mxu0
        %v2714 = vadd.f32 0.0, %v2713
        %v2715 = vpop.f32.mrb[0].mxu0
        %v2716 = vadd.f32 0.0, %v2715
        %2717 = vmatprep.mubr.bf16.mxu0 %v2202
        %2718 = vmatmul.mubr.bf16.gmra.mrb[0].mxu0 %v2201
        %v2719 = vpop.f32.mrb[0].mxu0
        %v2720 = vadd.f32 0.0, %v2719
        %v2721 = vpop.f32.mrb[0].mxu0
        %v2722 = vadd.f32 0.0, %v2721
        %v2723 = vpop.f32.mrb[0].mxu0
        %v2724 = vadd.f32 0.0, %v2723
        %v2725 = vpop.f32.mrb[0].mxu0
        %v2726 = vadd.f32 0.0, %v2725
        %2727 = vmatprep.mubr.bf16.mxu0 %v2206
        %2728 = vmatmul.mubr.bf16.gmra.mrb[0].mxu0 %v2205
        %v2729 = vpop.f32.mrb[0].mxu0
        %v2730 = vadd.f32 0.0, %v2729
        %v2731 = vpop.f32.mrb[0].mxu0
        %v2732 = vadd.f32 0.0, %v2731
        %v2733 = vpop.f32.mrb[0].mxu0
        %v2734 = vadd.f32 0.0, %v2733
        %v2735 = vpop.f32.mrb[0].mxu0
        %v2736 = vadd.f32 0.0, %v2735
        %2737 = vmatprep.mubr.bf16.mxu0 %v2210
        %2738 = vmatmul.mubr.bf16.gmra.mrb[0].mxu0 %v2209
        %v2739 = vpop.f32.mrb[0].mxu0
        %v2740 = vadd.f32 0.0, %v2739
        %v2741 = vpop.f32.mrb[0].mxu0
        %v2742 = vadd.f32 0.0, %v2741
        %v2743 = vpop.f32.mrb[0].mxu0
        %v2744 = vadd.f32 0.0, %v2743
        %v2745 = vpop.f32.mrb[0].mxu0
        %v2746 = vadd.f32 0.0, %v2745
        %2747 = vmatprep.mubr.bf16.mxu0 %v2214
        %2748 = vmatmul.mubr.bf16.gmra.mrb[0].mxu0 %v2213
        %v2749 = vpop.f32.mrb[0].mxu0
        %v2750 = vadd.f32 0.0, %v2749
        %v2751 = vpop.f32.mrb[0].mxu0
        %v2752 = vadd.f32 0.0, %v2751
        %v2753 = vpop.f32.mrb[0].mxu0
        %v2754 = vadd.f32 0.0, %v2753
        %v2755 = vpop.f32.mrb[0].mxu0
        %v2756 = vadd.f32 0.0, %v2755
        %2757 = vmatprep.mubr.bf16.mxu0 %v2218
        %2758 = vmatmul.mubr.bf16.gmra.mrb[0].mxu0 %v2217
        %v2759 = vpop.f32.mrb[0].mxu0
        %v2760 = vadd.f32 0.0, %v2759
        %v2761 = vpop.f32.mrb[0].mxu0
        %v2762 = vadd.f32 0.0, %v2761
        %v2763 = vpop.f32.mrb[0].mxu0
        %v2764 = vadd.f32 0.0, %v2763
        %v2765 = vpop.f32.mrb[0].mxu0
        %v2766 = vadd.f32 0.0, %v2765
        %2767 = vmatprep.mubr.bf16.mxu0 %v2222
        %2768 = vmatmul.mubr.bf16.gmra.mrb[0].mxu0 %v2221
        %v2769 = vpop.f32.mrb[0].mxu0
        %v2770 = vadd.f32 0.0, %v2769
        %v2771 = vpop.f32.mrb[0].mxu0
        %v2772 = vadd.f32 0.0, %v2771
        %v2773 = vpop.f32.mrb[0].mxu0
        %v2774 = vadd.f32 0.0, %v2773
        %v2775 = vpop.f32.mrb[0].mxu0
        %v2776 = vadd.f32 0.0, %v2775
        %2777 = vmatprep.mubr.bf16.mxu0 %v2226
        %2778 = vmatmul.mubr.bf16.gmra.mrb[0].mxu0 %v2225
        %v2779 = vpop.f32.mrb[0].mxu0
        %v2780 = vadd.f32 0.0, %v2779
        %v2781 = vpop.f32.mrb[0].mxu0
        %v2782 = vadd.f32 0.0, %v2781
        %v2783 = vpop.f32.mrb[0].mxu0
        %v2784 = vadd.f32 0.0, %v2783
        %v2785 = vpop.f32.mrb[0].mxu0
        %v2786 = vadd.f32 0.0, %v2785
        %2787 = vmatprep.mubr.bf16.mxu0 %v2230
        %2788 = vmatmul.mubr.bf16.gmra.mrb[0].mxu0 %v2229
        %v2789 = vpop.f32.mrb[0].mxu0
        %v2790 = vadd.f32 0.0, %v2789
        %v2791 = vpop.f32.mrb[0].mxu0
        %v2792 = vadd.f32 0.0, %v2791
        %v2793 = vpop.f32.mrb[0].mxu0
        %v2794 = vadd.f32 0.0, %v2793
        %v2795 = vpop.f32.mrb[0].mxu0
        %v2796 = vadd.f32 0.0, %v2795
        %2797 = vmatprep.mubr.bf16.mxu0 %v2234
        %2798 = vmatmul.mubr.bf16.gmra.mrb[0].mxu0 %v2233
        %v2799 = vpop.f32.mrb[0].mxu0
        %v2800 = vadd.f32 0.0, %v2799
        %v2801 = vpop.f32.mrb[0].mxu0
        %v2802 = vadd.f32 0.0, %v2801
        %v2803 = vpop.f32.mrb[0].mxu0
        %v2804 = vadd.f32 0.0, %v2803
        %v2805 = vpop.f32.mrb[0].mxu0
        %v2806 = vadd.f32 0.0, %v2805
        %2807 = vmatprep.mubr.bf16.mxu0 %v2238
        %2808 = vmatmul.mubr.bf16.gmra.mrb[0].mxu0 %v2237
        %v2809 = vpop.f32.mrb[0].mxu0
        %v2810 = vadd.f32 0.0, %v2809
        %v2811 = vpop.f32.mrb[0].mxu0
        %v2812 = vadd.f32 0.0, %v2811
        %v2813 = vpop.f32.mrb[0].mxu0
        %v2814 = vadd.f32 0.0, %v2813
        %v2815 = vpop.f32.mrb[0].mxu0
        %v2816 = vadd.f32 0.0, %v2815
        %2817 = vdwg.mxu0
        %2818 = vmatprep.subr.bf16.mxu0 %v2530
        %2819 = vmatpush1.bf16.msra.mxu0 %v2529
        %2820 = vmatprep.subr.bf16.mxu0 %v2532
        %2821 = vmatpush1.bf16.msra.mxu0 %v2531
        %2822 = vmatprep.subr.bf16.mxu0 %v2534
        %2823 = vmatpush1.bf16.msra.mxu0 %v2533
        %2824 = vmatprep.subr.bf16.mxu0 %v2536
        %2825 = vmatpush1.bf16.msra.mxu0 %v2535
        %2826 = vmatprep.subr.bf16.mxu0 %v2538
        %2827 = vmatpush1.bf16.msra.mxu0 %v2537
        %2828 = vmatprep.subr.bf16.mxu0 %v2540
        %2829 = vmatpush1.bf16.msra.mxu0 %v2539
        %2830 = vmatprep.subr.bf16.mxu0 %v2542
        %2831 = vmatpush1.bf16.msra.mxu0 %v2541
        %2832 = vmatprep.subr.bf16.mxu0 %v2544
        %2833 = vmatpush1.bf16.msra.mxu0 %v2543
        %2834 = vmatprep.subr.bf16.mxu0 %v2546
        %2835 = vmatpush1.bf16.msra.mxu0 %v2545
        %2836 = vmatprep.subr.bf16.mxu0 %v2548
        %2837 = vmatpush1.bf16.msra.mxu0 %v2547
        %2838 = vmatprep.subr.bf16.mxu0 %v2550
        %2839 = vmatpush1.bf16.msra.mxu0 %v2549
        %2840 = vmatprep.subr.bf16.mxu0 %v2552
        %2841 = vmatpush1.bf16.msra.mxu0 %v2551
        %2842 = vmatprep.subr.bf16.mxu0 %v2554
        %2843 = vmatpush1.bf16.msra.mxu0 %v2553
        %2844 = vmatprep.subr.bf16.mxu0 %v2556
        %2845 = vmatpush1.bf16.msra.mxu0 %v2555
        %2846 = vmatprep.subr.bf16.mxu0 %v2558
        %2847 = vmatpush1.bf16.msra.mxu0 %v2557
        %2848 = vmatprep.subr.bf16.mxu0 %v2560
        %2849 = vmatpush1.bf16.msra.mxu0 %v2559
        %2850 = vmatprep.mubr.bf16.mxu0 %v2180
        %2851 = vmatmul.mubr.bf16.gmra.mrb[0].mxu0 %v2179
        %v2852 = vpop.f32.mrb[0].mxu0
        %v2853 = vadd.f32 %v2660, %v2852
        %v2854 = vpop.f32.mrb[0].mxu0
        %v2855 = vadd.f32 %v2662, %v2854
        %v2856 = vpop.f32.mrb[0].mxu0
        %v2857 = vadd.f32 %v2664, %v2856
        %v2858 = vpop.f32.mrb[0].mxu0
        %v2859 = vadd.f32 %v2666, %v2858
        %2860 = vmatprep.mubr.bf16.mxu0 %v2184
        %2861 = vmatmul.mubr.bf16.gmra.mrb[0].mxu0 %v2183
        %v2862 = vpop.f32.mrb[0].mxu0
        %v2863 = vadd.f32 %v2670, %v2862
        %v2864 = vpop.f32.mrb[0].mxu0
        %v2865 = vadd.f32 %v2672, %v2864
        %v2866 = vpop.f32.mrb[0].mxu0
        %v2867 = vadd.f32 %v2674, %v2866
        %v2868 = vpop.f32.mrb[0].mxu0
        %v2869 = vadd.f32 %v2676, %v2868
        %2870 = vmatprep.mubr.bf16.mxu0 %v2188
        %2871 = vmatmul.mubr.bf16.gmra.mrb[0].mxu0 %v2187
        %v2872 = vpop.f32.mrb[0].mxu0
        %v2873 = vadd.f32 %v2680, %v2872
        %v2874 = vpop.f32.mrb[0].mxu0
        %v2875 = vadd.f32 %v2682, %v2874
        %v2876 = vpop.f32.mrb[0].mxu0
        %v2877 = vadd.f32 %v2684, %v2876
        %v2878 = vpop.f32.mrb[0].mxu0
        %v2879 = vadd.f32 %v2686, %v2878
        %2880 = vmatprep.mubr.bf16.mxu0 %v2192
        %2881 = vmatmul.mubr.bf16.gmra.mrb[0].mxu0 %v2191
        %v2882 = vpop.f32.mrb[0].mxu0
        %v2883 = vadd.f32 %v2690, %v2882
        %v2884 = vpop.f32.mrb[0].mxu0
        %v2885 = vadd.f32 %v2692, %v2884
        %v2886 = vpop.f32.mrb[0].mxu0
        %v2887 = vadd.f32 %v2694, %v2886
        %v2888 = vpop.f32.mrb[0].mxu0
        %v2889 = vadd.f32 %v2696, %v2888
        %2890 = vmatprep.mubr.bf16.mxu0 %v2196
        %2891 = vmatmul.mubr.bf16.gmra.mrb[0].mxu0 %v2195
        %v2892 = vpop.f32.mrb[0].mxu0
        %v2893 = vadd.f32 %v2700, %v2892
        %v2894 = vpop.f32.mrb[0].mxu0
        %v2895 = vadd.f32 %v2702, %v2894
        %v2896 = vpop.f32.mrb[0].mxu0
        %v2897 = vadd.f32 %v2704, %v2896
        %v2898 = vpop.f32.mrb[0].mxu0
        %v2899 = vadd.f32 %v2706, %v2898
        %2900 = vmatprep.mubr.bf16.mxu0 %v2200
        %2901 = vmatmul.mubr.bf16.gmra.mrb[0].mxu0 %v2199
        %v2902 = vpop.f32.mrb[0].mxu0
        %v2903 = vadd.f32 %v2710, %v2902
        %v2904 = vpop.f32.mrb[0].mxu0
        %v2905 = vadd.f32 %v2712, %v2904
        %v2906 = vpop.f32.mrb[0].mxu0
        %v2907 = vadd.f32 %v2714, %v2906
        %v2908 = vpop.f32.mrb[0].mxu0
        %v2909 = vadd.f32 %v2716, %v2908
        %2910 = vmatprep.mubr.bf16.mxu0 %v2204
        %2911 = vmatmul.mubr.bf16.gmra.mrb[0].mxu0 %v2203
        %v2912 = vpop.f32.mrb[0].mxu0
        %v2913 = vadd.f32 %v2720, %v2912
        %v2914 = vpop.f32.mrb[0].mxu0
        %v2915 = vadd.f32 %v2722, %v2914
        %v2916 = vpop.f32.mrb[0].mxu0
        %v2917 = vadd.f32 %v2724, %v2916
        %v2918 = vpop.f32.mrb[0].mxu0
        %v2919 = vadd.f32 %v2726, %v2918
        %2920 = vmatprep.mubr.bf16.mxu0 %v2208
        %2921 = vmatmul.mubr.bf16.gmra.mrb[0].mxu0 %v2207
        %v2922 = vpop.f32.mrb[0].mxu0
        %v2923 = vadd.f32 %v2730, %v2922
        %v2924 = vpop.f32.mrb[0].mxu0
        %v2925 = vadd.f32 %v2732, %v2924
        %v2926 = vpop.f32.mrb[0].mxu0
        %v2927 = vadd.f32 %v2734, %v2926
        %v2928 = vpop.f32.mrb[0].mxu0
        %v2929 = vadd.f32 %v2736, %v2928
        %2930 = vmatprep.mubr.bf16.mxu0 %v2212
        %2931 = vmatmul.mubr.bf16.gmra.mrb[0].mxu0 %v2211
        %v2932 = vpop.f32.mrb[0].mxu0
        %v2933 = vadd.f32 %v2740, %v2932
        %v2934 = vpop.f32.mrb[0].mxu0
        %v2935 = vadd.f32 %v2742, %v2934
        %v2936 = vpop.f32.mrb[0].mxu0
        %v2937 = vadd.f32 %v2744, %v2936
        %v2938 = vpop.f32.mrb[0].mxu0
        %v2939 = vadd.f32 %v2746, %v2938
        %2940 = vmatprep.mubr.bf16.mxu0 %v2216
        %2941 = vmatmul.mubr.bf16.gmra.mrb[0].mxu0 %v2215
        %v2942 = vpop.f32.mrb[0].mxu0
        %v2943 = vadd.f32 %v2750, %v2942
        %v2944 = vpop.f32.mrb[0].mxu0
        %v2945 = vadd.f32 %v2752, %v2944
        %v2946 = vpop.f32.mrb[0].mxu0
        %v2947 = vadd.f32 %v2754, %v2946
        %v2948 = vpop.f32.mrb[0].mxu0
        %v2949 = vadd.f32 %v2756, %v2948
        %2950 = vmatprep.mubr.bf16.mxu0 %v2220
        %2951 = vmatmul.mubr.bf16.gmra.mrb[0].mxu0 %v2219
        %v2952 = vpop.f32.mrb[0].mxu0
        %v2953 = vadd.f32 %v2760, %v2952
        %v2954 = vpop.f32.mrb[0].mxu0
        %v2955 = vadd.f32 %v2762, %v2954
        %v2956 = vpop.f32.mrb[0].mxu0
        %v2957 = vadd.f32 %v2764, %v2956
        %v2958 = vpop.f32.mrb[0].mxu0
        %v2959 = vadd.f32 %v2766, %v2958
        %2960 = vmatprep.mubr.bf16.mxu0 %v2224
        %2961 = vmatmul.mubr.bf16.gmra.mrb[0].mxu0 %v2223
        %v2962 = vpop.f32.mrb[0].mxu0
        %v2963 = vadd.f32 %v2770, %v2962
        %v2964 = vpop.f32.mrb[0].mxu0
        %v2965 = vadd.f32 %v2772, %v2964
        %v2966 = vpop.f32.mrb[0].mxu0
        %v2967 = vadd.f32 %v2774, %v2966
        %v2968 = vpop.f32.mrb[0].mxu0
        %v2969 = vadd.f32 %v2776, %v2968
        %2970 = vmatprep.mubr.bf16.mxu0 %v2228
        %2971 = vmatmul.mubr.bf16.gmra.mrb[0].mxu0 %v2227
        %v2972 = vpop.f32.mrb[0].mxu0
        %v2973 = vadd.f32 %v2780, %v2972
        %v2974 = vpop.f32.mrb[0].mxu0
        %v2975 = vadd.f32 %v2782, %v2974
        %v2976 = vpop.f32.mrb[0].mxu0
        %v2977 = vadd.f32 %v2784, %v2976
        %v2978 = vpop.f32.mrb[0].mxu0
        %v2979 = vadd.f32 %v2786, %v2978
        %2980 = vmatprep.mubr.bf16.mxu0 %v2232
        %2981 = vmatmul.mubr.bf16.gmra.mrb[0].mxu0 %v2231
        %v2982 = vpop.f32.mrb[0].mxu0
        %v2983 = vadd.f32 %v2790, %v2982
        %v2984 = vpop.f32.mrb[0].mxu0
        %v2985 = vadd.f32 %v2792, %v2984
        %v2986 = vpop.f32.mrb[0].mxu0
        %v2987 = vadd.f32 %v2794, %v2986
        %v2988 = vpop.f32.mrb[0].mxu0
        %v2989 = vadd.f32 %v2796, %v2988
        %2990 = vmatprep.mubr.bf16.mxu0 %v2236
        %2991 = vmatmul.mubr.bf16.gmra.mrb[0].mxu0 %v2235
        %v2992 = vpop.f32.mrb[0].mxu0
        %v2993 = vadd.f32 %v2800, %v2992
        %v2994 = vpop.f32.mrb[0].mxu0
        %v2995 = vadd.f32 %v2802, %v2994
        %v2996 = vpop.f32.mrb[0].mxu0
        %v2997 = vadd.f32 %v2804, %v2996
        %v2998 = vpop.f32.mrb[0].mxu0
        %v2999 = vadd.f32 %v2806, %v2998
        %3000 = vmatprep.mubr.bf16.mxu0 %v2240
        %3001 = vmatmul.mubr.bf16.gmra.mrb[0].mxu0 %v2239
        %v3002 = vpop.f32.mrb[0].mxu0
        %v3003 = vadd.f32 %v2810, %v3002
        %v3004 = vpop.f32.mrb[0].mxu0
        %v3005 = vadd.f32 %v2812, %v3004
        %v3006 = vpop.f32.mrb[0].mxu0
        %v3007 = vadd.f32 %v2814, %v3006
        %v3008 = vpop.f32.mrb[0].mxu0
        %v3009 = vadd.f32 %v2816, %v3008
        %3010 = vdwg.mxu0
        %v3011 = vadd.f32 %v2113, %v2853
        %v3012 = vadd.f32 %v2114, %v2855
        %v3013 = vadd.f32 %v2115, %v2857
        %v3014 = vadd.f32 %v2116, %v2859
        %v3015 = vadd.f32 %v2117, %v2863
        %v3016 = vadd.f32 %v2118, %v2865
        %v3017 = vadd.f32 %v2119, %v2867
        %v3018 = vadd.f32 %v2120, %v2869
        %v3019 = vadd.f32 %v2121, %v2873
        %v3020 = vadd.f32 %v2122, %v2875
        %v3021 = vadd.f32 %v2123, %v2877
        %v3022 = vadd.f32 %v2124, %v2879
        %v3023 = vadd.f32 %v2125, %v2883
        %v3024 = vadd.f32 %v2126, %v2885
        %v3025 = vadd.f32 %v2127, %v2887
        %v3026 = vadd.f32 %v2128, %v2889
        %v3027 = vadd.f32 %v2129, %v2893
        %v3028 = vadd.f32 %v2130, %v2895
        %v3029 = vadd.f32 %v2131, %v2897
        %v3030 = vadd.f32 %v2132, %v2899
        %v3031 = vadd.f32 %v2133, %v2903
        %v3032 = vadd.f32 %v2134, %v2905
        %v3033 = vadd.f32 %v2135, %v2907
        %v3034 = vadd.f32 %v2136, %v2909
        %v3035 = vadd.f32 %v2137, %v2913
        %v3036 = vadd.f32 %v2138, %v2915
        %v3037 = vadd.f32 %v2139, %v2917
        %v3038 = vadd.f32 %v2140, %v2919
        %v3039 = vadd.f32 %v2141, %v2923
        %v3040 = vadd.f32 %v2142, %v2925
        %v3041 = vadd.f32 %v2143, %v2927
        %v3042 = vadd.f32 %v2144, %v2929
        %v3043 = vadd.f32 %v2145, %v2933
        %v3044 = vadd.f32 %v2146, %v2935
        %v3045 = vadd.f32 %v2147, %v2937
        %v3046 = vadd.f32 %v2148, %v2939
        %v3047 = vadd.f32 %v2149, %v2943
        %v3048 = vadd.f32 %v2150, %v2945
        %v3049 = vadd.f32 %v2151, %v2947
        %v3050 = vadd.f32 %v2152, %v2949
        %v3051 = vadd.f32 %v2153, %v2953
        %v3052 = vadd.f32 %v2154, %v2955
        %v3053 = vadd.f32 %v2155, %v2957
        %v3054 = vadd.f32 %v2156, %v2959
        %v3055 = vadd.f32 %v2157, %v2963
        %v3056 = vadd.f32 %v2158, %v2965
        %v3057 = vadd.f32 %v2159, %v2967
        %v3058 = vadd.f32 %v2160, %v2969
        %v3059 = vadd.f32 %v2161, %v2973
        %v3060 = vadd.f32 %v2162, %v2975
        %v3061 = vadd.f32 %v2163, %v2977
        %v3062 = vadd.f32 %v2164, %v2979
        %v3063 = vadd.f32 %v2165, %v2983
        %v3064 = vadd.f32 %v2166, %v2985
        %v3065 = vadd.f32 %v2167, %v2987
        %v3066 = vadd.f32 %v2168, %v2989
        %v3067 = vadd.f32 %v2169, %v2993
        %v3068 = vadd.f32 %v2170, %v2995
        %v3069 = vadd.f32 %v2171, %v2997
        %v3070 = vadd.f32 %v2172, %v2999
        %v3071 = vadd.f32 %v2173, %v3003
        %v3072 = vadd.f32 %v2174, %v3005
        %v3073 = vadd.f32 %v2175, %v3007
        %v3074 = vadd.f32 %v2176, %v3009
        %3075 = vst [vmem:[#allocation2] sm:$0xff] %v3011
        %3076 = vst [vmem:[#allocation2 + $0x8] sm:$0xff] %v3012
        %3077 = vst [vmem:[#allocation2 + $0x10] sm:$0xff] %v3013
        %3078 = vst [vmem:[#allocation2 + $0x18] sm:$0xff] %v3014
        %3079 = vst [vmem:[#allocation2 + $0x20] sm:$0xff] %v3015
        %3080 = vst [vmem:[#allocation2 + $0x28] sm:$0xff] %v3016
        %3081 = vst [vmem:[#allocation2 + $0x30] sm:$0xff] %v3017
        %3082 = vst [vmem:[#allocation2 + $0x38] sm:$0xff] %v3018
        %3083 = vst [vmem:[#allocation2 + $0x40] sm:$0xff] %v3019
        %3084 = vst [vmem:[#allocation2 + $0x48] sm:$0xff] %v3020
        %3085 = vst [vmem:[#allocation2 + $0x50] sm:$0xff] %v3021
        %3086 = vst [vmem:[#allocation2 + $0x58] sm:$0xff] %v3022
        %3087 = vst [vmem:[#allocation2 + $0x60] sm:$0xff] %v3023
        %3088 = vst [vmem:[#allocation2 + $0x68] sm:$0xff] %v3024
        %3089 = vst [vmem:[#allocation2 + $0x70] sm:$0xff] %v3025
        %3090 = vst [vmem:[#allocation2 + $0x78] sm:$0xff] %v3026
        %3091 = vst [vmem:[#allocation2 + $0x80] sm:$0xff] %v3027
        %3092 = vst [vmem:[#allocation2 + $0x88] sm:$0xff] %v3028
        %3093 = vst [vmem:[#allocation2 + $0x90] sm:$0xff] %v3029
        %3094 = vst [vmem:[#allocation2 + $0x98] sm:$0xff] %v3030
        %3095 = vst [vmem:[#allocation2 + $0xa0] sm:$0xff] %v3031
        %3096 = vst [vmem:[#allocation2 + $0xa8] sm:$0xff] %v3032
        %3097 = vst [vmem:[#allocation2 + $0xb0] sm:$0xff] %v3033
        %3098 = vst [vmem:[#allocation2 + $0xb8] sm:$0xff] %v3034
        %3099 = vst [vmem:[#allocation2 + $0xc0] sm:$0xff] %v3035
        %3100 = vst [vmem:[#allocation2 + $0xc8] sm:$0xff] %v3036
        %3101 = vst [vmem:[#allocation2 + $0xd0] sm:$0xff] %v3037
        %3102 = vst [vmem:[#allocation2 + $0xd8] sm:$0xff] %v3038
        %3103 = vst [vmem:[#allocation2 + $0xe0] sm:$0xff] %v3039
        %3104 = vst [vmem:[#allocation2 + $0xe8] sm:$0xff] %v3040
        %3105 = vst [vmem:[#allocation2 + $0xf0] sm:$0xff] %v3041
        %3106 = vst [vmem:[#allocation2 + $0xf8] sm:$0xff] %v3042
        %3107 = vst [vmem:[#allocation2 + $0x100] sm:$0xff] %v3043
        %3108 = vst [vmem:[#allocation2 + $0x108] sm:$0xff] %v3044
        %3109 = vst [vmem:[#allocation2 + $0x110] sm:$0xff] %v3045
        %3110 = vst [vmem:[#allocation2 + $0x118] sm:$0xff] %v3046
        %3111 = vst [vmem:[#allocation2 + $0x120] sm:$0xff] %v3047
        %3112 = vst [vmem:[#allocation2 + $0x128] sm:$0xff] %v3048
        %3113 = vst [vmem:[#allocation2 + $0x130] sm:$0xff] %v3049
        %3114 = vst [vmem:[#allocation2 + $0x138] sm:$0xff] %v3050
        %3115 = vst [vmem:[#allocation2 + $0x140] sm:$0xff] %v3051
        %3116 = vst [vmem:[#allocation2 + $0x148] sm:$0xff] %v3052
        %3117 = vst [vmem:[#allocation2 + $0x150] sm:$0xff] %v3053
        %3118 = vst [vmem:[#allocation2 + $0x158] sm:$0xff] %v3054
        %3119 = vst [vmem:[#allocation2 + $0x160] sm:$0xff] %v3055
        %3120 = vst [vmem:[#allocation2 + $0x168] sm:$0xff] %v3056
        %3121 = vst [vmem:[#allocation2 + $0x170] sm:$0xff] %v3057
        %3122 = vst [vmem:[#allocation2 + $0x178] sm:$0xff] %v3058
        %3123 = vst [vmem:[#allocation2 + $0x180] sm:$0xff] %v3059
        %3124 = vst [vmem:[#allocation2 + $0x188] sm:$0xff] %v3060
        %3125 = vst [vmem:[#allocation2 + $0x190] sm:$0xff] %v3061
        %3126 = vst [vmem:[#allocation2 + $0x198] sm:$0xff] %v3062
        %3127 = vst [vmem:[#allocation2 + $0x1a0] sm:$0xff] %v3063
        %3128 = vst [vmem:[#allocation2 + $0x1a8] sm:$0xff] %v3064
        %3129 = vst [vmem:[#allocation2 + $0x1b0] sm:$0xff] %v3065
        %3130 = vst [vmem:[#allocation2 + $0x1b8] sm:$0xff] %v3066
        %3131 = vst [vmem:[#allocation2 + $0x1c0] sm:$0xff] %v3067
        %3132 = vst [vmem:[#allocation2 + $0x1c8] sm:$0xff] %v3068
        %3133 = vst [vmem:[#allocation2 + $0x1d0] sm:$0xff] %v3069
        %3134 = vst [vmem:[#allocation2 + $0x1d8] sm:$0xff] %v3070
        %3135 = vst [vmem:[#allocation2 + $0x1e0] sm:$0xff] %v3071
        %3136 = vst [vmem:[#allocation2 + $0x1e8] sm:$0xff] %v3072
        %3137 = vst [vmem:[#allocation2 + $0x1f0] sm:$0xff] %v3073
        %3138 = vst [vmem:[#allocation2 + $0x1f8] sm:$0xff] %v3074
        // Predicated region
        $region69: #{tpu_custom_call.1} parent=47 // pred_check
          %p3139 = pneg %p421
        $region70: #{tpu_custom_call.1} parent=47 // pred_check_branch
          %3141 = sbr.rel (%p3139) target = $region72
        $region71: #{tpu_custom_call.1} parent=47 // pred_region
          %v3142 = vld [vmem:[#allocation2] sm:$0xff]
          %v3143 = vld [vmem:[#allocation2 + $0x8] sm:$0xff]
          %v3144 = vld [vmem:[#allocation2 + $0x10] sm:$0xff]
          %v3145 = vld [vmem:[#allocation2 + $0x18] sm:$0xff]
          %v3146 = vld [vmem:[#allocation2 + $0x20] sm:$0xff]
          %v3147 = vld [vmem:[#allocation2 + $0x28] sm:$0xff]
          %v3148 = vld [vmem:[#allocation2 + $0x30] sm:$0xff]
          %v3149 = vld [vmem:[#allocation2 + $0x38] sm:$0xff]
          %v3150 = vld [vmem:[#allocation2 + $0x40] sm:$0xff]
          %v3151 = vld [vmem:[#allocation2 + $0x48] sm:$0xff]
          %v3152 = vld [vmem:[#allocation2 + $0x50] sm:$0xff]
          %v3153 = vld [vmem:[#allocation2 + $0x58] sm:$0xff]
          %v3154 = vld [vmem:[#allocation2 + $0x60] sm:$0xff]
          %v3155 = vld [vmem:[#allocation2 + $0x68] sm:$0xff]
          %v3156 = vld [vmem:[#allocation2 + $0x70] sm:$0xff]
          %v3157 = vld [vmem:[#allocation2 + $0x78] sm:$0xff]
          %v3158 = vld [vmem:[#allocation2 + $0x80] sm:$0xff]
          %v3159 = vld [vmem:[#allocation2 + $0x88] sm:$0xff]
          %v3160 = vld [vmem:[#allocation2 + $0x90] sm:$0xff]
          %v3161 = vld [vmem:[#allocation2 + $0x98] sm:$0xff]
          %v3162 = vld [vmem:[#allocation2 + $0xa0] sm:$0xff]
          %v3163 = vld [vmem:[#allocation2 + $0xa8] sm:$0xff]
          %v3164 = vld [vmem:[#allocation2 + $0xb0] sm:$0xff]
          %v3165 = vld [vmem:[#allocation2 + $0xb8] sm:$0xff]
          %v3166 = vld [vmem:[#allocation2 + $0xc0] sm:$0xff]
          %v3167 = vld [vmem:[#allocation2 + $0xc8] sm:$0xff]
          %v3168 = vld [vmem:[#allocation2 + $0xd0] sm:$0xff]
          %v3169 = vld [vmem:[#allocation2 + $0xd8] sm:$0xff]
          %v3170 = vld [vmem:[#allocation2 + $0xe0] sm:$0xff]
          %v3171 = vld [vmem:[#allocation2 + $0xe8] sm:$0xff]
          %v3172 = vld [vmem:[#allocation2 + $0xf0] sm:$0xff]
          %v3173 = vld [vmem:[#allocation2 + $0xf8] sm:$0xff]
          %v3174 = vld [vmem:[#allocation2 + $0x100] sm:$0xff]
          %v3175 = vld [vmem:[#allocation2 + $0x108] sm:$0xff]
          %v3176 = vld [vmem:[#allocation2 + $0x110] sm:$0xff]
          %v3177 = vld [vmem:[#allocation2 + $0x118] sm:$0xff]
          %v3178 = vld [vmem:[#allocation2 + $0x120] sm:$0xff]
          %v3179 = vld [vmem:[#allocation2 + $0x128] sm:$0xff]
          %v3180 = vld [vmem:[#allocation2 + $0x130] sm:$0xff]
          %v3181 = vld [vmem:[#allocation2 + $0x138] sm:$0xff]
          %v3182 = vld [vmem:[#allocation2 + $0x140] sm:$0xff]
          %v3183 = vld [vmem:[#allocation2 + $0x148] sm:$0xff]
          %v3184 = vld [vmem:[#allocation2 + $0x150] sm:$0xff]
          %v3185 = vld [vmem:[#allocation2 + $0x158] sm:$0xff]
          %v3186 = vld [vmem:[#allocation2 + $0x160] sm:$0xff]
          %v3187 = vld [vmem:[#allocation2 + $0x168] sm:$0xff]
          %v3188 = vld [vmem:[#allocation2 + $0x170] sm:$0xff]
          %v3189 = vld [vmem:[#allocation2 + $0x178] sm:$0xff]
          %v3190 = vld [vmem:[#allocation2 + $0x180] sm:$0xff]
          %v3191 = vld [vmem:[#allocation2 + $0x188] sm:$0xff]
          %v3192 = vld [vmem:[#allocation2 + $0x190] sm:$0xff]
          %v3193 = vld [vmem:[#allocation2 + $0x198] sm:$0xff]
          %v3194 = vld [vmem:[#allocation2 + $0x1a0] sm:$0xff]
          %v3195 = vld [vmem:[#allocation2 + $0x1a8] sm:$0xff]
          %v3196 = vld [vmem:[#allocation2 + $0x1b0] sm:$0xff]
          %v3197 = vld [vmem:[#allocation2 + $0x1b8] sm:$0xff]
          %v3198 = vld [vmem:[#allocation2 + $0x1c0] sm:$0xff]
          %v3199 = vld [vmem:[#allocation2 + $0x1c8] sm:$0xff]
          %v3200 = vld [vmem:[#allocation2 + $0x1d0] sm:$0xff]
          %v3201 = vld [vmem:[#allocation2 + $0x1d8] sm:$0xff]
          %v3202 = vld [vmem:[#allocation2 + $0x1e0] sm:$0xff]
          %v3203 = vld [vmem:[#allocation2 + $0x1e8] sm:$0xff]
          %v3204 = vld [vmem:[#allocation2 + $0x1f0] sm:$0xff]
          %v3205 = vld [vmem:[#allocation2 + $0x1f8] sm:$0xff]
          %v3206 = vld [vmem:[%s5] sm:$0x3]
          %v3208 = vlaneseq
          %v3209 = vshrl.u32 %v3208, 7
          %v3210 = vsub.s32 0, %v3209
          %v3211 = vrot.slane %v3206, %v3210
          %v3212 = vlaneseq
          %v3213 = vshrl.u32 %v3212, 7
          %v3214 = vsub.s32 1, %v3213
          %v3215 = vrot.slane %v3206, %v3214
          %v3218 = vadd.f32 %v3142, %v3211
          %v3219 = vadd.f32 %v3143, %v3215
          %v3220 = vadd.f32 %v3144, %v3211
          %v3221 = vadd.f32 %v3145, %v3215
          %v3222 = vadd.f32 %v3146, %v3211
          %v3223 = vadd.f32 %v3147, %v3215
          %v3224 = vadd.f32 %v3148, %v3211
          %v3225 = vadd.f32 %v3149, %v3215
          %v3226 = vadd.f32 %v3150, %v3211
          %v3227 = vadd.f32 %v3151, %v3215
          %v3228 = vadd.f32 %v3152, %v3211
          %v3229 = vadd.f32 %v3153, %v3215
          %v3230 = vadd.f32 %v3154, %v3211
          %v3231 = vadd.f32 %v3155, %v3215
          %v3232 = vadd.f32 %v3156, %v3211
          %v3233 = vadd.f32 %v3157, %v3215
          %v3234 = vadd.f32 %v3158, %v3211
          %v3235 = vadd.f32 %v3159, %v3215
          %v3236 = vadd.f32 %v3160, %v3211
          %v3237 = vadd.f32 %v3161, %v3215
          %v3238 = vadd.f32 %v3162, %v3211
          %v3239 = vadd.f32 %v3163, %v3215
          %v3240 = vadd.f32 %v3164, %v3211
          %v3241 = vadd.f32 %v3165, %v3215
          %v3242 = vadd.f32 %v3166, %v3211
          %v3243 = vadd.f32 %v3167, %v3215
          %v3244 = vadd.f32 %v3168, %v3211
          %v3245 = vadd.f32 %v3169, %v3215
          %v3246 = vadd.f32 %v3170, %v3211
          %v3247 = vadd.f32 %v3171, %v3215
          %v3248 = vadd.f32 %v3172, %v3211
          %v3249 = vadd.f32 %v3173, %v3215
          %v3250 = vadd.f32 %v3174, %v3211
          %v3251 = vadd.f32 %v3175, %v3215
          %v3252 = vadd.f32 %v3176, %v3211
          %v3253 = vadd.f32 %v3177, %v3215
          %v3254 = vadd.f32 %v3178, %v3211
          %v3255 = vadd.f32 %v3179, %v3215
          %v3256 = vadd.f32 %v3180, %v3211
          %v3257 = vadd.f32 %v3181, %v3215
          %v3258 = vadd.f32 %v3182, %v3211
          %v3259 = vadd.f32 %v3183, %v3215
          %v3260 = vadd.f32 %v3184, %v3211
          %v3261 = vadd.f32 %v3185, %v3215
          %v3262 = vadd.f32 %v3186, %v3211
          %v3263 = vadd.f32 %v3187, %v3215
          %v3264 = vadd.f32 %v3188, %v3211
          %v3265 = vadd.f32 %v3189, %v3215
          %v3266 = vadd.f32 %v3190, %v3211
          %v3267 = vadd.f32 %v3191, %v3215
          %v3268 = vadd.f32 %v3192, %v3211
          %v3269 = vadd.f32 %v3193, %v3215
          %v3270 = vadd.f32 %v3194, %v3211
          %v3271 = vadd.f32 %v3195, %v3215
          %v3272 = vadd.f32 %v3196, %v3211
          %v3273 = vadd.f32 %v3197, %v3215
          %v3274 = vadd.f32 %v3198, %v3211
          %v3275 = vadd.f32 %v3199, %v3215
          %v3276 = vadd.f32 %v3200, %v3211
          %v3277 = vadd.f32 %v3201, %v3215
          %v3278 = vadd.f32 %v3202, %v3211
          %v3279 = vadd.f32 %v3203, %v3215
          %v3280 = vadd.f32 %v3204, %v3211
          %v3281 = vadd.f32 %v3205, %v3215
          %v3282 = vld [vmem:[%s363] sm:$0xff]
          %v3283 = vld [vmem:[%s363 + $0x8] sm:$0xff]
          %v3284 = vld [vmem:[%s363 + $0x10] sm:$0xff]
          %v3285 = vld [vmem:[%s363 + $0x18] sm:$0xff]
          %v3286 = vld [vmem:[%s363 + $0x20] sm:$0xff]
          %v3287 = vld [vmem:[%s363 + $0x28] sm:$0xff]
          %v3288 = vld [vmem:[%s363 + $0x30] sm:$0xff]
          %v3289 = vld [vmem:[%s363 + $0x38] sm:$0xff]
          %v3290 = vld [vmem:[%s363 + $0x40] sm:$0xff]
          %v3291 = vld [vmem:[%s363 + $0x48] sm:$0xff]
          %v3292 = vld [vmem:[%s363 + $0x50] sm:$0xff]
          %v3293 = vld [vmem:[%s363 + $0x58] sm:$0xff]
          %v3294 = vld [vmem:[%s363 + $0x60] sm:$0xff]
          %v3295 = vld [vmem:[%s363 + $0x68] sm:$0xff]
          %v3296 = vld [vmem:[%s363 + $0x70] sm:$0xff]
          %v3297 = vld [vmem:[%s363 + $0x78] sm:$0xff]
          %v3298 = vld [vmem:[%s363 + $0x80] sm:$0xff]
          %v3299 = vld [vmem:[%s363 + $0x88] sm:$0xff]
          %v3300 = vld [vmem:[%s363 + $0x90] sm:$0xff]
          %v3301 = vld [vmem:[%s363 + $0x98] sm:$0xff]
          %v3302 = vld [vmem:[%s363 + $0xa0] sm:$0xff]
          %v3303 = vld [vmem:[%s363 + $0xa8] sm:$0xff]
          %v3304 = vld [vmem:[%s363 + $0xb0] sm:$0xff]
          %v3305 = vld [vmem:[%s363 + $0xb8] sm:$0xff]
          %v3306 = vld [vmem:[%s363 + $0xc0] sm:$0xff]
          %v3307 = vld [vmem:[%s363 + $0xc8] sm:$0xff]
          %v3308 = vld [vmem:[%s363 + $0xd0] sm:$0xff]
          %v3309 = vld [vmem:[%s363 + $0xd8] sm:$0xff]
          %v3310 = vld [vmem:[%s363 + $0xe0] sm:$0xff]
          %v3311 = vld [vmem:[%s363 + $0xe8] sm:$0xff]
          %v3312 = vld [vmem:[%s363 + $0xf0] sm:$0xff]
          %v3313 = vld [vmem:[%s363 + $0xf8] sm:$0xff]
          %v3314 = vld [vmem:[%s363 + $0x100] sm:$0xff]
          %v3315 = vld [vmem:[%s363 + $0x108] sm:$0xff]
          %v3316 = vld [vmem:[%s363 + $0x110] sm:$0xff]
          %v3317 = vld [vmem:[%s363 + $0x118] sm:$0xff]
          %v3318 = vld [vmem:[%s363 + $0x120] sm:$0xff]
          %v3319 = vld [vmem:[%s363 + $0x128] sm:$0xff]
          %v3320 = vld [vmem:[%s363 + $0x130] sm:$0xff]
          %v3321 = vld [vmem:[%s363 + $0x138] sm:$0xff]
          %v3322 = vld [vmem:[%s363 + $0x140] sm:$0xff]
          %v3323 = vld [vmem:[%s363 + $0x148] sm:$0xff]
          %v3324 = vld [vmem:[%s363 + $0x150] sm:$0xff]
          %v3325 = vld [vmem:[%s363 + $0x158] sm:$0xff]
          %v3326 = vld [vmem:[%s363 + $0x160] sm:$0xff]
          %v3327 = vld [vmem:[%s363 + $0x168] sm:$0xff]
          %v3328 = vld [vmem:[%s363 + $0x170] sm:$0xff]
          %v3329 = vld [vmem:[%s363 + $0x178] sm:$0xff]
          %v3330 = vld [vmem:[%s363 + $0x180] sm:$0xff]
          %v3331 = vld [vmem:[%s363 + $0x188] sm:$0xff]
          %v3332 = vld [vmem:[%s363 + $0x190] sm:$0xff]
          %v3333 = vld [vmem:[%s363 + $0x198] sm:$0xff]
          %v3334 = vld [vmem:[%s363 + $0x1a0] sm:$0xff]
          %v3335 = vld [vmem:[%s363 + $0x1a8] sm:$0xff]
          %v3336 = vld [vmem:[%s363 + $0x1b0] sm:$0xff]
          %v3337 = vld [vmem:[%s363 + $0x1b8] sm:$0xff]
          %v3338 = vld [vmem:[%s363 + $0x1c0] sm:$0xff]
          %v3339 = vld [vmem:[%s363 + $0x1c8] sm:$0xff]
          %v3340 = vld [vmem:[%s363 + $0x1d0] sm:$0xff]
          %v3341 = vld [vmem:[%s363 + $0x1d8] sm:$0xff]
          %v3342 = vld [vmem:[%s363 + $0x1e0] sm:$0xff]
          %v3343 = vld [vmem:[%s363 + $0x1e8] sm:$0xff]
          %v3344 = vld [vmem:[%s363 + $0x1f0] sm:$0xff]
          %v3345 = vld [vmem:[%s363 + $0x1f8] sm:$0xff]
          %v3346 = vadd.f32 %v3218, %v3282
          %v3347 = vadd.f32 %v3219, %v3283
          %v3348 = vadd.f32 %v3220, %v3284
          %v3349 = vadd.f32 %v3221, %v3285
          %v3350 = vadd.f32 %v3222, %v3286
          %v3351 = vadd.f32 %v3223, %v3287
          %v3352 = vadd.f32 %v3224, %v3288
          %v3353 = vadd.f32 %v3225, %v3289
          %v3354 = vadd.f32 %v3226, %v3290
          %v3355 = vadd.f32 %v3227, %v3291
          %v3356 = vadd.f32 %v3228, %v3292
          %v3357 = vadd.f32 %v3229, %v3293
          %v3358 = vadd.f32 %v3230, %v3294
          %v3359 = vadd.f32 %v3231, %v3295
          %v3360 = vadd.f32 %v3232, %v3296
          %v3361 = vadd.f32 %v3233, %v3297
          %v3362 = vadd.f32 %v3234, %v3298
          %v3363 = vadd.f32 %v3235, %v3299
          %v3364 = vadd.f32 %v3236, %v3300
          %v3365 = vadd.f32 %v3237, %v3301
          %v3366 = vadd.f32 %v3238, %v3302
          %v3367 = vadd.f32 %v3239, %v3303
          %v3368 = vadd.f32 %v3240, %v3304
          %v3369 = vadd.f32 %v3241, %v3305
          %v3370 = vadd.f32 %v3242, %v3306
          %v3371 = vadd.f32 %v3243, %v3307
          %v3372 = vadd.f32 %v3244, %v3308
          %v3373 = vadd.f32 %v3245, %v3309
          %v3374 = vadd.f32 %v3246, %v3310
          %v3375 = vadd.f32 %v3247, %v3311
          %v3376 = vadd.f32 %v3248, %v3312
          %v3377 = vadd.f32 %v3249, %v3313
          %v3378 = vadd.f32 %v3250, %v3314
          %v3379 = vadd.f32 %v3251, %v3315
          %v3380 = vadd.f32 %v3252, %v3316
          %v3381 = vadd.f32 %v3253, %v3317
          %v3382 = vadd.f32 %v3254, %v3318
          %v3383 = vadd.f32 %v3255, %v3319
          %v3384 = vadd.f32 %v3256, %v3320
          %v3385 = vadd.f32 %v3257, %v3321
          %v3386 = vadd.f32 %v3258, %v3322
          %v3387 = vadd.f32 %v3259, %v3323
          %v3388 = vadd.f32 %v3260, %v3324
          %v3389 = vadd.f32 %v3261, %v3325
          %v3390 = vadd.f32 %v3262, %v3326
          %v3391 = vadd.f32 %v3263, %v3327
          %v3392 = vadd.f32 %v3264, %v3328
          %v3393 = vadd.f32 %v3265, %v3329
          %v3394 = vadd.f32 %v3266, %v3330
          %v3395 = vadd.f32 %v3267, %v3331
          %v3396 = vadd.f32 %v3268, %v3332
          %v3397 = vadd.f32 %v3269, %v3333
          %v3398 = vadd.f32 %v3270, %v3334
          %v3399 = vadd.f32 %v3271, %v3335
          %v3400 = vadd.f32 %v3272, %v3336
          %v3401 = vadd.f32 %v3273, %v3337
          %v3402 = vadd.f32 %v3274, %v3338
          %v3403 = vadd.f32 %v3275, %v3339
          %v3404 = vadd.f32 %v3276, %v3340
          %v3405 = vadd.f32 %v3277, %v3341
          %v3406 = vadd.f32 %v3278, %v3342
          %v3407 = vadd.f32 %v3279, %v3343
          %v3408 = vadd.f32 %v3280, %v3344
          %v3409 = vadd.f32 %v3281, %v3345
          %v3410 = vmul.f32 %v3346, %v3346
          %v3411 = vmul.f32 %v3347, %v3347
          %v3412 = vmul.f32 %v3348, %v3348
          %v3413 = vmul.f32 %v3349, %v3349
          %v3414 = vmul.f32 %v3350, %v3350
          %v3415 = vmul.f32 %v3351, %v3351
          %v3416 = vmul.f32 %v3352, %v3352
          %v3417 = vmul.f32 %v3353, %v3353
          %v3418 = vmul.f32 %v3354, %v3354
          %v3419 = vmul.f32 %v3355, %v3355
          %v3420 = vmul.f32 %v3356, %v3356
          %v3421 = vmul.f32 %v3357, %v3357
          %v3422 = vmul.f32 %v3358, %v3358
          %v3423 = vmul.f32 %v3359, %v3359
          %v3424 = vmul.f32 %v3360, %v3360
          %v3425 = vmul.f32 %v3361, %v3361
          %v3426 = vmul.f32 %v3362, %v3362
          %v3427 = vmul.f32 %v3363, %v3363
          %v3428 = vmul.f32 %v3364, %v3364
          %v3429 = vmul.f32 %v3365, %v3365
          %v3430 = vmul.f32 %v3366, %v3366
          %v3431 = vmul.f32 %v3367, %v3367
          %v3432 = vmul.f32 %v3368, %v3368
          %v3433 = vmul.f32 %v3369, %v3369
          %v3434 = vmul.f32 %v3370, %v3370
          %v3435 = vmul.f32 %v3371, %v3371
          %v3436 = vmul.f32 %v3372, %v3372
          %v3437 = vmul.f32 %v3373, %v3373
          %v3438 = vmul.f32 %v3374, %v3374
          %v3439 = vmul.f32 %v3375, %v3375
          %v3440 = vmul.f32 %v3376, %v3376
          %v3441 = vmul.f32 %v3377, %v3377
          %v3442 = vmul.f32 %v3378, %v3378
          %v3443 = vmul.f32 %v3379, %v3379
          %v3444 = vmul.f32 %v3380, %v3380
          %v3445 = vmul.f32 %v3381, %v3381
          %v3446 = vmul.f32 %v3382, %v3382
          %v3447 = vmul.f32 %v3383, %v3383
          %v3448 = vmul.f32 %v3384, %v3384
          %v3449 = vmul.f32 %v3385, %v3385
          %v3450 = vmul.f32 %v3386, %v3386
          %v3451 = vmul.f32 %v3387, %v3387
          %v3452 = vmul.f32 %v3388, %v3388
          %v3453 = vmul.f32 %v3389, %v3389
          %v3454 = vmul.f32 %v3390, %v3390
          %v3455 = vmul.f32 %v3391, %v3391
          %v3456 = vmul.f32 %v3392, %v3392
          %v3457 = vmul.f32 %v3393, %v3393
          %v3458 = vmul.f32 %v3394, %v3394
          %v3459 = vmul.f32 %v3395, %v3395
          %v3460 = vmul.f32 %v3396, %v3396
          %v3461 = vmul.f32 %v3397, %v3397
          %v3462 = vmul.f32 %v3398, %v3398
          %v3463 = vmul.f32 %v3399, %v3399
          %v3464 = vmul.f32 %v3400, %v3400
          %v3465 = vmul.f32 %v3401, %v3401
          %v3466 = vmul.f32 %v3402, %v3402
          %v3467 = vmul.f32 %v3403, %v3403
          %v3468 = vmul.f32 %v3404, %v3404
          %v3469 = vmul.f32 %v3405, %v3405
          %v3470 = vmul.f32 %v3406, %v3406
          %v3471 = vmul.f32 %v3407, %v3407
          %v3472 = vmul.f32 %v3408, %v3408
          %v3473 = vmul.f32 %v3409, %v3409
          %v3474 = vadd.f32 %v3410, %v3411
          %3475 = vadd.xlane.f32.xlu0 %v3474
          %v3476 = vpop.xlane.xlu0 %3475
          %v3477 = vadd.f32 %v3412, %v3413
          %3478 = vadd.xlane.f32.xlu0 %v3477
          %v3479 = vpop.xlane.xlu0 %3478
          %v3480 = vadd.f32 %v3414, %v3415
          %3481 = vadd.xlane.f32.xlu0 %v3480
          %v3482 = vpop.xlane.xlu0 %3481
          %v3483 = vadd.f32 %v3416, %v3417
          %3484 = vadd.xlane.f32.xlu0 %v3483
          %v3485 = vpop.xlane.xlu0 %3484
          %v3486 = vadd.f32 %v3418, %v3419
          %3487 = vadd.xlane.f32.xlu0 %v3486
          %v3488 = vpop.xlane.xlu0 %3487
          %v3489 = vadd.f32 %v3420, %v3421
          %3490 = vadd.xlane.f32.xlu0 %v3489
          %v3491 = vpop.xlane.xlu0 %3490
          %v3492 = vadd.f32 %v3422, %v3423
          %3493 = vadd.xlane.f32.xlu0 %v3492
          %v3494 = vpop.xlane.xlu0 %3493
          %v3495 = vadd.f32 %v3424, %v3425
          %3496 = vadd.xlane.f32.xlu0 %v3495
          %v3497 = vpop.xlane.xlu0 %3496
          %v3498 = vadd.f32 %v3426, %v3427
          %3499 = vadd.xlane.f32.xlu0 %v3498
          %v3500 = vpop.xlane.xlu0 %3499
          %v3501 = vadd.f32 %v3428, %v3429
          %3502 = vadd.xlane.f32.xlu0 %v3501
          %v3503 = vpop.xlane.xlu0 %3502
          %v3504 = vadd.f32 %v3430, %v3431
          %3505 = vadd.xlane.f32.xlu0 %v3504
          %v3506 = vpop.xlane.xlu0 %3505
          %v3507 = vadd.f32 %v3432, %v3433
          %3508 = vadd.xlane.f32.xlu0 %v3507
          %v3509 = vpop.xlane.xlu0 %3508
          %v3510 = vadd.f32 %v3434, %v3435
          %3511 = vadd.xlane.f32.xlu0 %v3510
          %v3512 = vpop.xlane.xlu0 %3511
          %v3513 = vadd.f32 %v3436, %v3437
          %3514 = vadd.xlane.f32.xlu0 %v3513
          %v3515 = vpop.xlane.xlu0 %3514
          %v3516 = vadd.f32 %v3438, %v3439
          %3517 = vadd.xlane.f32.xlu0 %v3516
          %v3518 = vpop.xlane.xlu0 %3517
          %v3519 = vadd.f32 %v3440, %v3441
          %3520 = vadd.xlane.f32.xlu0 %v3519
          %v3521 = vpop.xlane.xlu0 %3520
          %v3522 = vadd.f32 %v3442, %v3443
          %3523 = vadd.xlane.f32.xlu0 %v3522
          %v3524 = vpop.xlane.xlu0 %3523
          %v3525 = vadd.f32 %v3444, %v3445
          %3526 = vadd.xlane.f32.xlu0 %v3525
          %v3527 = vpop.xlane.xlu0 %3526
          %v3528 = vadd.f32 %v3446, %v3447
          %3529 = vadd.xlane.f32.xlu0 %v3528
          %v3530 = vpop.xlane.xlu0 %3529
          %v3531 = vadd.f32 %v3448, %v3449
          %3532 = vadd.xlane.f32.xlu0 %v3531
          %v3533 = vpop.xlane.xlu0 %3532
          %v3534 = vadd.f32 %v3450, %v3451
          %3535 = vadd.xlane.f32.xlu0 %v3534
          %v3536 = vpop.xlane.xlu0 %3535
          %v3537 = vadd.f32 %v3452, %v3453
          %3538 = vadd.xlane.f32.xlu0 %v3537
          %v3539 = vpop.xlane.xlu0 %3538
          %v3540 = vadd.f32 %v3454, %v3455
          %3541 = vadd.xlane.f32.xlu0 %v3540
          %v3542 = vpop.xlane.xlu0 %3541
          %v3543 = vadd.f32 %v3456, %v3457
          %3544 = vadd.xlane.f32.xlu0 %v3543
          %v3545 = vpop.xlane.xlu0 %3544
          %v3546 = vadd.f32 %v3458, %v3459
          %3547 = vadd.xlane.f32.xlu0 %v3546
          %v3548 = vpop.xlane.xlu0 %3547
          %v3549 = vadd.f32 %v3460, %v3461
          %3550 = vadd.xlane.f32.xlu0 %v3549
          %v3551 = vpop.xlane.xlu0 %3550
          %v3552 = vadd.f32 %v3462, %v3463
          %3553 = vadd.xlane.f32.xlu0 %v3552
          %v3554 = vpop.xlane.xlu0 %3553
          %v3555 = vadd.f32 %v3464, %v3465
          %3556 = vadd.xlane.f32.xlu0 %v3555
          %v3557 = vpop.xlane.xlu0 %3556
          %v3558 = vadd.f32 %v3466, %v3467
          %3559 = vadd.xlane.f32.xlu0 %v3558
          %v3560 = vpop.xlane.xlu0 %3559
          %v3561 = vadd.f32 %v3468, %v3469
          %3562 = vadd.xlane.f32.xlu0 %v3561
          %v3563 = vpop.xlane.xlu0 %3562
          %v3564 = vadd.f32 %v3470, %v3471
          %3565 = vadd.xlane.f32.xlu0 %v3564
          %v3566 = vpop.xlane.xlu0 %3565
          %v3567 = vadd.f32 %v3472, %v3473
          %3568 = vadd.xlane.f32.xlu0 %v3567
          %v3569 = vpop.xlane.xlu0 %3568
          %v3570 = vrcp.pop 256.0
          %v3571 = vmul.f32 %v3476, %v3570
          %v3572 = vmul.f32 %v3479, %v3570
          %v3573 = vmul.f32 %v3482, %v3570
          %v3574 = vmul.f32 %v3485, %v3570
          %v3575 = vmul.f32 %v3488, %v3570
          %v3576 = vmul.f32 %v3491, %v3570
          %v3577 = vmul.f32 %v3494, %v3570
          %v3578 = vmul.f32 %v3497, %v3570
          %v3579 = vmul.f32 %v3500, %v3570
          %v3580 = vmul.f32 %v3503, %v3570
          %v3581 = vmul.f32 %v3506, %v3570
          %v3582 = vmul.f32 %v3509, %v3570
          %v3583 = vmul.f32 %v3512, %v3570
          %v3584 = vmul.f32 %v3515, %v3570
          %v3585 = vmul.f32 %v3518, %v3570
          %v3586 = vmul.f32 %v3521, %v3570
          %v3587 = vmul.f32 %v3524, %v3570
          %v3588 = vmul.f32 %v3527, %v3570
          %v3589 = vmul.f32 %v3530, %v3570
          %v3590 = vmul.f32 %v3533, %v3570
          %v3591 = vmul.f32 %v3536, %v3570
          %v3592 = vmul.f32 %v3539, %v3570
          %v3593 = vmul.f32 %v3542, %v3570
          %v3594 = vmul.f32 %v3545, %v3570
          %v3595 = vmul.f32 %v3548, %v3570
          %v3596 = vmul.f32 %v3551, %v3570
          %v3597 = vmul.f32 %v3554, %v3570
          %v3598 = vmul.f32 %v3557, %v3570
          %v3599 = vmul.f32 %v3560, %v3570
          %v3600 = vmul.f32 %v3563, %v3570
          %v3601 = vmul.f32 %v3566, %v3570
          %v3602 = vmul.f32 %v3569, %v3570
          %v3603 = vadd.f32 %v3571, 1e-05
          %v3604 = vadd.f32 %v3572, 1e-05
          %v3605 = vadd.f32 %v3573, 1e-05
          %v3606 = vadd.f32 %v3574, 1e-05
          %v3607 = vadd.f32 %v3575, 1e-05
          %v3608 = vadd.f32 %v3576, 1e-05
          %v3609 = vadd.f32 %v3577, 1e-05
          %v3610 = vadd.f32 %v3578, 1e-05
          %v3611 = vadd.f32 %v3579, 1e-05
          %v3612 = vadd.f32 %v3580, 1e-05
          %v3613 = vadd.f32 %v3581, 1e-05
          %v3614 = vadd.f32 %v3582, 1e-05
          %v3615 = vadd.f32 %v3583, 1e-05
          %v3616 = vadd.f32 %v3584, 1e-05
          %v3617 = vadd.f32 %v3585, 1e-05
          %v3618 = vadd.f32 %v3586, 1e-05
          %v3619 = vadd.f32 %v3587, 1e-05
          %v3620 = vadd.f32 %v3588, 1e-05
          %v3621 = vadd.f32 %v3589, 1e-05
          %v3622 = vadd.f32 %v3590, 1e-05
          %v3623 = vadd.f32 %v3591, 1e-05
          %v3624 = vadd.f32 %v3592, 1e-05
          %v3625 = vadd.f32 %v3593, 1e-05
          %v3626 = vadd.f32 %v3594, 1e-05
          %v3627 = vadd.f32 %v3595, 1e-05
          %v3628 = vadd.f32 %v3596, 1e-05
          %v3629 = vadd.f32 %v3597, 1e-05
          %v3630 = vadd.f32 %v3598, 1e-05
          %v3631 = vadd.f32 %v3599, 1e-05
          %v3632 = vadd.f32 %v3600, 1e-05
          %v3633 = vadd.f32 %v3601, 1e-05
          %v3634 = vadd.f32 %v3602, 1e-05
          %v3635 = vrsqrt.pop %v3603
          %v3636 = vrsqrt.pop %v3604
          %v3637 = vrsqrt.pop %v3605
          %v3638 = vrsqrt.pop %v3606
          %v3639 = vrsqrt.pop %v3607
          %v3640 = vrsqrt.pop %v3608
          %v3641 = vrsqrt.pop %v3609
          %v3642 = vrsqrt.pop %v3610
          %v3643 = vrsqrt.pop %v3611
          %v3644 = vrsqrt.pop %v3612
          %v3645 = vrsqrt.pop %v3613
          %v3646 = vrsqrt.pop %v3614
          %v3647 = vrsqrt.pop %v3615
          %v3648 = vrsqrt.pop %v3616
          %v3649 = vrsqrt.pop %v3617
          %v3650 = vrsqrt.pop %v3618
          %v3651 = vrsqrt.pop %v3619
          %v3652 = vrsqrt.pop %v3620
          %v3653 = vrsqrt.pop %v3621
          %v3654 = vrsqrt.pop %v3622
          %v3655 = vrsqrt.pop %v3623
          %v3656 = vrsqrt.pop %v3624
          %v3657 = vrsqrt.pop %v3625
          %v3658 = vrsqrt.pop %v3626
          %v3659 = vrsqrt.pop %v3627
          %v3660 = vrsqrt.pop %v3628
          %v3661 = vrsqrt.pop %v3629
          %v3662 = vrsqrt.pop %v3630
          %v3663 = vrsqrt.pop %v3631
          %v3664 = vrsqrt.pop %v3632
          %v3665 = vrsqrt.pop %v3633
          %v3666 = vrsqrt.pop %v3634
          %v3667 = vmul.f32 %v3346, %v3635
          %v3668 = vmul.f32 %v3347, %v3635
          %v3669 = vmul.f32 %v3348, %v3636
          %v3670 = vmul.f32 %v3349, %v3636
          %v3671 = vmul.f32 %v3350, %v3637
          %v3672 = vmul.f32 %v3351, %v3637
          %v3673 = vmul.f32 %v3352, %v3638
          %v3674 = vmul.f32 %v3353, %v3638
          %v3675 = vmul.f32 %v3354, %v3639
          %v3676 = vmul.f32 %v3355, %v3639
          %v3677 = vmul.f32 %v3356, %v3640
          %v3678 = vmul.f32 %v3357, %v3640
          %v3679 = vmul.f32 %v3358, %v3641
          %v3680 = vmul.f32 %v3359, %v3641
          %v3681 = vmul.f32 %v3360, %v3642
          %v3682 = vmul.f32 %v3361, %v3642
          %v3683 = vmul.f32 %v3362, %v3643
          %v3684 = vmul.f32 %v3363, %v3643
          %v3685 = vmul.f32 %v3364, %v3644
          %v3686 = vmul.f32 %v3365, %v3644
          %v3687 = vmul.f32 %v3366, %v3645
          %v3688 = vmul.f32 %v3367, %v3645
          %v3689 = vmul.f32 %v3368, %v3646
          %v3690 = vmul.f32 %v3369, %v3646
          %v3691 = vmul.f32 %v3370, %v3647
          %v3692 = vmul.f32 %v3371, %v3647
          %v3693 = vmul.f32 %v3372, %v3648
          %v3694 = vmul.f32 %v3373, %v3648
          %v3695 = vmul.f32 %v3374, %v3649
          %v3696 = vmul.f32 %v3375, %v3649
          %v3697 = vmul.f32 %v3376, %v3650
          %v3698 = vmul.f32 %v3377, %v3650
          %v3699 = vmul.f32 %v3378, %v3651
          %v3700 = vmul.f32 %v3379, %v3651
          %v3701 = vmul.f32 %v3380, %v3652
          %v3702 = vmul.f32 %v3381, %v3652
          %v3703 = vmul.f32 %v3382, %v3653
          %v3704 = vmul.f32 %v3383, %v3653
          %v3705 = vmul.f32 %v3384, %v3654
          %v3706 = vmul.f32 %v3385, %v3654
          %v3707 = vmul.f32 %v3386, %v3655
          %v3708 = vmul.f32 %v3387, %v3655
          %v3709 = vmul.f32 %v3388, %v3656
          %v3710 = vmul.f32 %v3389, %v3656
          %v3711 = vmul.f32 %v3390, %v3657
          %v3712 = vmul.f32 %v3391, %v3657
          %v3713 = vmul.f32 %v3392, %v3658
          %v3714 = vmul.f32 %v3393, %v3658
          %v3715 = vmul.f32 %v3394, %v3659
          %v3716 = vmul.f32 %v3395, %v3659
          %v3717 = vmul.f32 %v3396, %v3660
          %v3718 = vmul.f32 %v3397, %v3660
          %v3719 = vmul.f32 %v3398, %v3661
          %v3720 = vmul.f32 %v3399, %v3661
          %v3721 = vmul.f32 %v3400, %v3662
          %v3722 = vmul.f32 %v3401, %v3662
          %v3723 = vmul.f32 %v3402, %v3663
          %v3724 = vmul.f32 %v3403, %v3663
          %v3725 = vmul.f32 %v3404, %v3664
          %v3726 = vmul.f32 %v3405, %v3664
          %v3727 = vmul.f32 %v3406, %v3665
          %v3728 = vmul.f32 %v3407, %v3665
          %v3729 = vmul.f32 %v3408, %v3666
          %v3730 = vmul.f32 %v3409, %v3666
          %v3731 = vld [vmem:[%s6] sm:$0x3]
          %v3733 = vlaneseq
          %v3734 = vshrl.u32 %v3733, 7
          %v3735 = vsub.s32 0, %v3734
          %v3736 = vrot.slane %v3731, %v3735
          %v3737 = vlaneseq
          %v3738 = vshrl.u32 %v3737, 7
          %v3739 = vsub.s32 1, %v3738
          %v3740 = vrot.slane %v3731, %v3739
          %v3743 = vmul.f32 %v3736, %v3667
          %v3744 = vmul.f32 %v3740, %v3668
          %v3745 = vmul.f32 %v3736, %v3669
          %v3746 = vmul.f32 %v3740, %v3670
          %v3747 = vmul.f32 %v3736, %v3671
          %v3748 = vmul.f32 %v3740, %v3672
          %v3749 = vmul.f32 %v3736, %v3673
          %v3750 = vmul.f32 %v3740, %v3674
          %v3751 = vmul.f32 %v3736, %v3675
          %v3752 = vmul.f32 %v3740, %v3676
          %v3753 = vmul.f32 %v3736, %v3677
          %v3754 = vmul.f32 %v3740, %v3678
          %v3755 = vmul.f32 %v3736, %v3679
          %v3756 = vmul.f32 %v3740, %v3680
          %v3757 = vmul.f32 %v3736, %v3681
          %v3758 = vmul.f32 %v3740, %v3682
          %v3759 = vmul.f32 %v3736, %v3683
          %v3760 = vmul.f32 %v3740, %v3684
          %v3761 = vmul.f32 %v3736, %v3685
          %v3762 = vmul.f32 %v3740, %v3686
          %v3763 = vmul.f32 %v3736, %v3687
          %v3764 = vmul.f32 %v3740, %v3688
          %v3765 = vmul.f32 %v3736, %v3689
          %v3766 = vmul.f32 %v3740, %v3690
          %v3767 = vmul.f32 %v3736, %v3691
          %v3768 = vmul.f32 %v3740, %v3692
          %v3769 = vmul.f32 %v3736, %v3693
          %v3770 = vmul.f32 %v3740, %v3694
          %v3771 = vmul.f32 %v3736, %v3695
          %v3772 = vmul.f32 %v3740, %v3696
          %v3773 = vmul.f32 %v3736, %v3697
          %v3774 = vmul.f32 %v3740, %v3698
          %v3775 = vmul.f32 %v3736, %v3699
          %v3776 = vmul.f32 %v3740, %v3700
          %v3777 = vmul.f32 %v3736, %v3701
          %v3778 = vmul.f32 %v3740, %v3702
          %v3779 = vmul.f32 %v3736, %v3703
          %v3780 = vmul.f32 %v3740, %v3704
          %v3781 = vmul.f32 %v3736, %v3705
          %v3782 = vmul.f32 %v3740, %v3706
          %v3783 = vmul.f32 %v3736, %v3707
          %v3784 = vmul.f32 %v3740, %v3708
          %v3785 = vmul.f32 %v3736, %v3709
          %v3786 = vmul.f32 %v3740, %v3710
          %v3787 = vmul.f32 %v3736, %v3711
          %v3788 = vmul.f32 %v3740, %v3712
          %v3789 = vmul.f32 %v3736, %v3713
          %v3790 = vmul.f32 %v3740, %v3714
          %v3791 = vmul.f32 %v3736, %v3715
          %v3792 = vmul.f32 %v3740, %v3716
          %v3793 = vmul.f32 %v3736, %v3717
          %v3794 = vmul.f32 %v3740, %v3718
          %v3795 = vmul.f32 %v3736, %v3719
          %v3796 = vmul.f32 %v3740, %v3720
          %v3797 = vmul.f32 %v3736, %v3721
          %v3798 = vmul.f32 %v3740, %v3722
          %v3799 = vmul.f32 %v3736, %v3723
          %v3800 = vmul.f32 %v3740, %v3724
          %v3801 = vmul.f32 %v3736, %v3725
          %v3802 = vmul.f32 %v3740, %v3726
          %v3803 = vmul.f32 %v3736, %v3727
          %v3804 = vmul.f32 %v3740, %v3728
          %v3805 = vmul.f32 %v3736, %v3729
          %v3806 = vmul.f32 %v3740, %v3730
          %3807 = vst [vmem:[%s410] sm:$0xff] %v3743
          %3808 = vst [vmem:[%s410 + $0x8] sm:$0xff] %v3744
          %3809 = vst [vmem:[%s410 + $0x10] sm:$0xff] %v3745
          %3810 = vst [vmem:[%s410 + $0x18] sm:$0xff] %v3746
          %3811 = vst [vmem:[%s410 + $0x20] sm:$0xff] %v3747
          %3812 = vst [vmem:[%s410 + $0x28] sm:$0xff] %v3748
          %3813 = vst [vmem:[%s410 + $0x30] sm:$0xff] %v3749
          %3814 = vst [vmem:[%s410 + $0x38] sm:$0xff] %v3750
          %3815 = vst [vmem:[%s410 + $0x40] sm:$0xff] %v3751
          %3816 = vst [vmem:[%s410 + $0x48] sm:$0xff] %v3752
          %3817 = vst [vmem:[%s410 + $0x50] sm:$0xff] %v3753
          %3818 = vst [vmem:[%s410 + $0x58] sm:$0xff] %v3754
          %3819 = vst [vmem:[%s410 + $0x60] sm:$0xff] %v3755
          %3820 = vst [vmem:[%s410 + $0x68] sm:$0xff] %v3756
          %3821 = vst [vmem:[%s410 + $0x70] sm:$0xff] %v3757
          %3822 = vst [vmem:[%s410 + $0x78] sm:$0xff] %v3758
          %3823 = vst [vmem:[%s410 + $0x80] sm:$0xff] %v3759
          %3824 = vst [vmem:[%s410 + $0x88] sm:$0xff] %v3760
          %3825 = vst [vmem:[%s410 + $0x90] sm:$0xff] %v3761
          %3826 = vst [vmem:[%s410 + $0x98] sm:$0xff] %v3762
          %3827 = vst [vmem:[%s410 + $0xa0] sm:$0xff] %v3763
          %3828 = vst [vmem:[%s410 + $0xa8] sm:$0xff] %v3764
          %3829 = vst [vmem:[%s410 + $0xb0] sm:$0xff] %v3765
          %3830 = vst [vmem:[%s410 + $0xb8] sm:$0xff] %v3766
          %3831 = vst [vmem:[%s410 + $0xc0] sm:$0xff] %v3767
          %3832 = vst [vmem:[%s410 + $0xc8] sm:$0xff] %v3768
          %3833 = vst [vmem:[%s410 + $0xd0] sm:$0xff] %v3769
          %3834 = vst [vmem:[%s410 + $0xd8] sm:$0xff] %v3770
          %3835 = vst [vmem:[%s410 + $0xe0] sm:$0xff] %v3771
          %3836 = vst [vmem:[%s410 + $0xe8] sm:$0xff] %v3772
          %3837 = vst [vmem:[%s410 + $0xf0] sm:$0xff] %v3773
          %3838 = vst [vmem:[%s410 + $0xf8] sm:$0xff] %v3774
          %3839 = vst [vmem:[%s410 + $0x100] sm:$0xff] %v3775
          %3840 = vst [vmem:[%s410 + $0x108] sm:$0xff] %v3776
          %3841 = vst [vmem:[%s410 + $0x110] sm:$0xff] %v3777
          %3842 = vst [vmem:[%s410 + $0x118] sm:$0xff] %v3778
          %3843 = vst [vmem:[%s410 + $0x120] sm:$0xff] %v3779
          %3844 = vst [vmem:[%s410 + $0x128] sm:$0xff] %v3780
          %3845 = vst [vmem:[%s410 + $0x130] sm:$0xff] %v3781
          %3846 = vst [vmem:[%s410 + $0x138] sm:$0xff] %v3782
          %3847 = vst [vmem:[%s410 + $0x140] sm:$0xff] %v3783
          %3848 = vst [vmem:[%s410 + $0x148] sm:$0xff] %v3784
          %3849 = vst [vmem:[%s410 + $0x150] sm:$0xff] %v3785
          %3850 = vst [vmem:[%s410 + $0x158] sm:$0xff] %v3786
          %3851 = vst [vmem:[%s410 + $0x160] sm:$0xff] %v3787
          %3852 = vst [vmem:[%s410 + $0x168] sm:$0xff] %v3788
          %3853 = vst [vmem:[%s410 + $0x170] sm:$0xff] %v3789
          %3854 = vst [vmem:[%s410 + $0x178] sm:$0xff] %v3790
          %3855 = vst [vmem:[%s410 + $0x180] sm:$0xff] %v3791
          %3856 = vst [vmem:[%s410 + $0x188] sm:$0xff] %v3792
          %3857 = vst [vmem:[%s410 + $0x190] sm:$0xff] %v3793
          %3858 = vst [vmem:[%s410 + $0x198] sm:$0xff] %v3794
          %3859 = vst [vmem:[%s410 + $0x1a0] sm:$0xff] %v3795
          %3860 = vst [vmem:[%s410 + $0x1a8] sm:$0xff] %v3796
          %3861 = vst [vmem:[%s410 + $0x1b0] sm:$0xff] %v3797
          %3862 = vst [vmem:[%s410 + $0x1b8] sm:$0xff] %v3798
          %3863 = vst [vmem:[%s410 + $0x1c0] sm:$0xff] %v3799
          %3864 = vst [vmem:[%s410 + $0x1c8] sm:$0xff] %v3800
          %3865 = vst [vmem:[%s410 + $0x1d0] sm:$0xff] %v3801
          %3866 = vst [vmem:[%s410 + $0x1d8] sm:$0xff] %v3802
          %3867 = vst [vmem:[%s410 + $0x1e0] sm:$0xff] %v3803
          %3868 = vst [vmem:[%s410 + $0x1e8] sm:$0xff] %v3804
          %3869 = vst [vmem:[%s410 + $0x1f0] sm:$0xff] %v3805
          %3870 = vst [vmem:[%s410 + $0x1f8] sm:$0xff] %v3806
        $region72: #{tpu_custom_call.1} parent=47 // pred_fallthru
          _
        %s3871 = sand.u32 %s220, 1
        %s3872 = scalar_lea.sflag [#allocation5], %s3871
        %s3873 = sand.u32 %s220, 1
        %s3874 = smul.addr %s3873, 512
        %s3875 = scalar_lea.vmem [#allocation11], %s3874
        // Predicated region
        $region73: #{tpu_custom_call.1} parent=47 // pred_check
          %p3876 = pneg %p230
        $region74: #{tpu_custom_call.1} parent=47 // pred_check_branch
          %3878 = sbr.rel (%p3876) target = $region76
        $region75: #{tpu_custom_call.1} parent=47 // pred_region
          %s3879 = smul.u32 32, %s32
          %s3881 = ssub.s32 8192, 8192
          %3882 = vsyncadd %s3872, %s3881
          %s3883 = smul.addr %s3879, 2
          %s3884 = smul.addr %s3883, 128
          %s3885 = scalar_lea.hbm %s7, %s3884
          %s3886 = sshll.u32 %s3875, 4
          %s3887 = int_to_ptr.vmem [resolvable:$true] %s3886
          %3892 = dma.vmem_to_hbm [thread:$0]  %s3887, 8192, %s3885, %s3872, 256, 256, 16
        $region76: #{tpu_custom_call.1} parent=47 // pred_fallthru
          _
      $region48: #{tpu_custom_call.1} parent=5 // pred_fallthru
        _
      %p3893 = scmp.le.s32.totalorder 2, %s23
      // Predicated region
      $region77: #{tpu_custom_call.1} parent=5 // pred_check
        %p3894 = pneg %p3893
      $region78: #{tpu_custom_call.1} parent=5 // pred_check_branch
        %3896 = sbr.rel (%p3894) target = $region80
      $region79: #{tpu_custom_call.1} parent=5 // pred_region
        %s3897 = ssub.s32 %s23, 2
        // Predicated region
        $region81: #{tpu_custom_call.1} parent=79 // pred_check
          %p3898 = pneg %p236
        $region82: #{tpu_custom_call.1} parent=79 // pred_check_branch
          %3900 = sbr.rel (%p3898) target = $region84
        $region83: #{tpu_custom_call.1} parent=79 // pred_region
          %s3901 = sand.u32 %s221, 1
          %s3902 = scalar_lea.sflag [#allocation5], %s3901
          %s3903 = sand.u32 %s221, 1
          %s3904 = smul.addr %s3903, 512
          %s3905 = scalar_lea.vmem [#allocation11], %s3904
          %3906 = dma.done %s3902, 8192
        $region84: #{tpu_custom_call.1} parent=79 // pred_fallthru
          _
      $region80: #{tpu_custom_call.1} parent=5 // pred_fallthru
        _
    $region6: #{tpu_custom_call.1} parent=1 // loop_footer
      %s27 = sadd.s32 1, %s23
    $region7: #{tpu_custom_call.1} parent=1 // loop_footer_branch
      %22 = sbr.rel target = $region3
    $region8: #{tpu_custom_call.1} parent=1 // loop_exit
      _
    %3907 = vsyncpa [#allocation4], 1
    %s3908 = scalar_lea.sflag [#allocation4], 1
    %3909 = vsyncpa %s3908, 1
    %3910 = vsyncpa [#allocation7], 1
    %s3911 = scalar_lea.sflag [#allocation7], 1
    %3912 = vsyncpa %s3911, 1
    %3913 = vsyncpa [#allocation10], 1
    %3914 = vsyncpa [#allocation5], 1
    %s3915 = scalar_lea.sflag [#allocation5], 1
    %3916 = vsyncpa %s3915, 1

</llo_original>
